<compile_context>
chip_gen: v6e
topology: v6e:2x2x1
jax: 0.10.0
libtpu: 0.0.40
codegen_flags: <defaults>
</compile_context>

<pallas_src>
import functools

import jax
import jax.numpy as jnp
from jax.experimental import pallas as pl
from jax.experimental.pallas import tpu as pltpu


def _conv_kernel(x_ref, w_ref, b_ref, o_ref, *, KH, KW, SH, SW, Hout, Wout):
    # x_ref: [1, SH*SW, Hh, Wh, Cin]  (stride-phase split, zero-padded, NHWC)
    # w_ref: [KH*KW, Cin, Cout]
    # b_ref: [1, Cout]
    # o_ref: [1, Hout, Wout, Cout]
    xall = x_ref[...]                     # tiny per-step block, load once
    Cin = xall.shape[-1]
    Cout = o_ref.shape[-1]

    acc = jnp.zeros((Hout * Wout, Cout), jnp.float32)
    for kh in range(KH):
        ph, oh0 = kh % SH, kh // SH
        for kw in range(KW):
            pw, ow0 = kw % SW, kw // SW
            # Contiguous (un-strided) window of this tap's stride phase.
            win = xall[0, ph * SW + pw,
                       oh0:oh0 + Hout, ow0:ow0 + Wout, :]   # [Hout, Wout, Cin]
            acc = acc + jnp.dot(
                win.reshape(Hout * Wout, Cin),
                w_ref[kh * KW + kw, :, :],
                preferred_element_type=jnp.float32)

    acc = acc + b_ref[...].astype(jnp.float32)               # [1, Cout] bcast
    o_ref[0, :, :, :] = acc.reshape(Hout, Wout, Cout).astype(o_ref.dtype)


@functools.partial(jax.jit, static_argnames=("stride",))
def conv2d_same(x, w, b, *, stride=(2, 2)):
    """x: [B, Cin, H, W] (NCHW); w: [Cout, Cin, KH, KW] (OIHW); b: [Cout]."""
    B, Cin, H, W = x.shape
    Cout, _, KH, KW = w.shape
    SH, SW = stride
    PH = (KH - SH + 1) // 2
    PW = (KW - SW + 1) // 2
    Hout = (H + 2 * PH - KH) // SH + 1
    Wout = (W + 2 * PW - KW) // SW + 1

    # Each stride-phase sub-image must cover the largest tap offset.
    Hh = Hout + (KH - 1) // SH
    Wh = Wout + (KW - 1) // SW
    pad_h_hi = Hh * SH - H - PH
    pad_w_hi = Wh * SW - W - PW
    assert pad_h_hi >= 0 and pad_w_hi >= 0, (pad_h_hi, pad_w_hi)

    # NCHW -> NHWC, zero-pad, split into SH*SW stride phases (pure XLA glue;
    # this replaces any strided/gather addressing inside the kernel).
    x_nhwc = jnp.transpose(x, (0, 2, 3, 1))
    x_pad = jnp.pad(x_nhwc, ((0, 0), (PH, pad_h_hi), (PW, pad_w_hi), (0, 0)))
    x_ph = jnp.transpose(
        x_pad.reshape(B, Hh, SH, Wh, SW, Cin),
        (0, 2, 4, 1, 3, 5)).reshape(B, SH * SW, Hh, Wh, Cin)

    # OIHW -> [KH*KW, Cin, Cout]; bias -> [1, Cout]
    w_k = jnp.transpose(w, (2, 3, 1, 0)).reshape(KH * KW, Cin, Cout)
    b2 = b.reshape(1, Cout)

    kernel = functools.partial(
        _conv_kernel, KH=KH, KW=KW, SH=SH, SW=SW, Hout=Hout, Wout=Wout)

    out_nhwc = pl.pallas_call(
        kernel,
        out_shape=jax.ShapeDtypeStruct((B, Hout, Wout, Cout), x.dtype),
        grid=(B,),
        in_specs=[
            pl.BlockSpec((1, SH * SW, Hh, Wh, Cin),
                         lambda bi: (bi, 0, 0, 0, 0)),
            # Weights / bias: same block every step -> stay resident in VMEM.
            pl.BlockSpec((KH * KW, Cin, Cout), lambda bi: (0, 0, 0)),
            pl.BlockSpec((1, Cout), lambda bi: (0, 0)),
        ],
        out_specs=pl.BlockSpec((1, Hout, Wout, Cout),
                               lambda bi: (bi, 0, 0, 0)),
        compiler_params=pltpu.CompilerParams(
            dimension_semantics=("parallel",)),
    )(x_ph, w_k, b2)

    # NHWC -> NCHW (matches the PyTorch module's output layout)
    return jnp.transpose(out_nhwc, (0, 3, 1, 2))


def _reference(x, w, b, *, stride):
    """Pure-JAX reference of the PyTorch Conv2d_same forward."""
    KH, KW = w.shape[2], w.shape[3]
    SH, SW = stride
    PH = (KH - SH + 1) // 2
    PW = (KW - SW + 1) // 2
    y = jax.lax.conv_general_dilated(
        x, w, window_strides=(SH, SW),
        padding=((PH, PH), (PW, PW)),
        dimension_numbers=("NCHW", "OIHW", "NCHW"),
        precision=jax.lax.Precision.HIGHEST)
    return y + b[None, :, None, None]


if __name__ == "__main__":
    # Small shapes: B=2, Cin=4, Cout=8, H=W=16, kernel (5,5), stride (2,2)
    B, Cin, Cout, H, W = 2, 4, 8, 16, 16
    KH = KW = 5
    stride = (2, 2)

    key = jax.random.PRNGKey(0)
    kx, kw_, kb = jax.random.split(key, 3)
    x = jax.random.normal(kx, (B, Cin, H, W), jnp.float32)
    fan_in = Cin * KH * KW
    w = (jax.random.uniform(kw_, (Cout, Cin, KH, KW), jnp.float32, -1.0, 1.0)
         / jnp.sqrt(fan_in))
    b = (jax.random.uniform(kb, (Cout,), jnp.float32, -1.0, 1.0)
         / jnp.sqrt(fan_in))

    out = conv2d_same(x, w, b, stride=stride)
    out = jax.block_until_ready(out)

    ref = _reference(x, w, b, stride=stride)
    assert out.shape == ref.shape == (B, Cout, 8, 8), (out.shape, ref.shape)
    max_err = float(jnp.max(jnp.abs(out - ref)))
    assert jnp.allclose(out, ref, atol=1e-2, rtol=1e-2), max_err
    print("KERNEL_OK")
</pallas_src>

<mosaic_0001>
module attributes {stable_mosaic.version = 11 : i64} {
  func.func @_conv_kernel(%arg0: i32, %arg1: memref<1x4x10x10x4xf32, #tpu.memory_space<vmem>>, %arg2: memref<25x4x8xf32, #tpu.memory_space<vmem>>, %arg3: memref<1x8xf32, #tpu.memory_space<vmem>>, %arg4: memref<1x8x8x8xf32, #tpu.memory_space<vmem>>) attributes {dimension_semantics = [#tpu.dimension_semantics<parallel>], iteration_bounds = array<i64: 2>, scalar_prefetch = 0 : i64, scratch_operands = 0 : i64, tpu.core_type = #tpu.core_type<tc>, window_params = [{transform_indices = @transform_0, window_bounds = array<i64: 1, 4, 10, 10, 4>}, {pipeline_mode = #tpu.pipeline_mode<synchronous>, transform_indices = @transform_1, window_bounds = array<i64: 25, 4, 8>}, {pipeline_mode = #tpu.pipeline_mode<synchronous>, transform_indices = @transform_2, window_bounds = array<i64: 1, 8>}, {transform_indices = @transform_3, window_bounds = array<i64: 1, 8, 8, 8>}]} {
    %c0 = arith.constant 0 : index
    %c0_0 = arith.constant 0 : index
    %c0_1 = arith.constant 0 : index
    %c0_2 = arith.constant 0 : index
    %c0_3 = arith.constant 0 : index
    %0 = vector.load %arg1[%c0, %c0_0, %c0_1, %c0_2, %c0_3] : memref<1x4x10x10x4xf32, #tpu.memory_space<vmem>>, vector<1x4x10x10x4xf32>
    %cst = arith.constant 0.000000e+00 : f32
    %1 = vector.broadcast %cst : f32 to vector<64x8xf32>
    %2 = vector.extract_strided_slice %0 {offsets = [0, 0, 0, 0, 0], sizes = [1, 1, 8, 8, 4], strides = [1, 1, 1, 1, 1]} : vector<1x4x10x10x4xf32> to vector<1x1x8x8x4xf32>
    %3 = vector.shape_cast %2 : vector<1x1x8x8x4xf32> to vector<8x8x4xf32>
    %4 = vector.shape_cast %3 : vector<8x8x4xf32> to vector<64x4xf32>
    %c0_4 = arith.constant 0 : index
    %c0_5 = arith.constant 0 : index
    %c0_6 = arith.constant 0 : index
    %5 = vector.load %arg2[%c0_4, %c0_5, %c0_6] : memref<25x4x8xf32, #tpu.memory_space<vmem>>, vector<1x4x8xf32>
    %6 = vector.shape_cast %5 : vector<1x4x8xf32> to vector<4x8xf32>
    %cst_7 = arith.constant dense<0.000000e+00> : vector<64x8xf32>
    %7 = tpu.matmul %4, %6, %cst_7 {dimension_numbers = #tpu.dot_dimension_numbers<[1], [0], [0], [1], [0, 0, 1, 1], [], []>} : vector<64x4xf32>, vector<4x8xf32>, vector<64x8xf32> -> vector<64x8xf32>
    %8 = arith.addf %1, %7 : vector<64x8xf32>
    %9 = vector.extract_strided_slice %0 {offsets = [0, 1, 0, 0, 0], sizes = [1, 1, 8, 8, 4], strides = [1, 1, 1, 1, 1]} : vector<1x4x10x10x4xf32> to vector<1x1x8x8x4xf32>
    %10 = vector.shape_cast %9 : vector<1x1x8x8x4xf32> to vector<8x8x4xf32>
    %11 = vector.shape_cast %10 : vector<8x8x4xf32> to vector<64x4xf32>
    %c1 = arith.constant 1 : index
    %c0_8 = arith.constant 0 : index
    %c0_9 = arith.constant 0 : index
    %12 = vector.load %arg2[%c1, %c0_8, %c0_9] : memref<25x4x8xf32, #tpu.memory_space<vmem>>, vector<1x4x8xf32>
    %13 = vector.shape_cast %12 : vector<1x4x8xf32> to vector<4x8xf32>
    %cst_10 = arith.constant dense<0.000000e+00> : vector<64x8xf32>
    %14 = tpu.matmul %11, %13, %cst_10 {dimension_numbers = #tpu.dot_dimension_numbers<[1], [0], [0], [1], [0, 0, 1, 1], [], []>} : vector<64x4xf32>, vector<4x8xf32>, vector<64x8xf32> -> vector<64x8xf32>
    %15 = arith.addf %8, %14 : vector<64x8xf32>
    %16 = vector.extract_strided_slice %0 {offsets = [0, 0, 0, 1, 0], sizes = [1, 1, 8, 8, 4], strides = [1, 1, 1, 1, 1]} : vector<1x4x10x10x4xf32> to vector<1x1x8x8x4xf32>
    %17 = vector.shape_cast %16 : vector<1x1x8x8x4xf32> to vector<8x8x4xf32>
    %18 = vector.shape_cast %17 : vector<8x8x4xf32> to vector<64x4xf32>
    %c2 = arith.constant 2 : index
    %c0_11 = arith.constant 0 : index
    %c0_12 = arith.constant 0 : index
    %19 = vector.load %arg2[%c2, %c0_11, %c0_12] : memref<25x4x8xf32, #tpu.memory_space<vmem>>, vector<1x4x8xf32>
    %20 = vector.shape_cast %19 : vector<1x4x8xf32> to vector<4x8xf32>
    %cst_13 = arith.constant dense<0.000000e+00> : vector<64x8xf32>
    %21 = tpu.matmul %18, %20, %cst_13 {dimension_numbers = #tpu.dot_dimension_numbers<[1], [0], [0], [1], [0, 0, 1, 1], [], []>} : vector<64x4xf32>, vector<4x8xf32>, vector<64x8xf32> -> vector<64x8xf32>
    %22 = arith.addf %15, %21 : vector<64x8xf32>
    %23 = vector.extract_strided_slice %0 {offsets = [0, 1, 0, 1, 0], sizes = [1, 1, 8, 8, 4], strides = [1, 1, 1, 1, 1]} : vector<1x4x10x10x4xf32> to vector<1x1x8x8x4xf32>
    %24 = vector.shape_cast %23 : vector<1x1x8x8x4xf32> to vector<8x8x4xf32>
    %25 = vector.shape_cast %24 : vector<8x8x4xf32> to vector<64x4xf32>
    %c3 = arith.constant 3 : index
    %c0_14 = arith.constant 0 : index
    %c0_15 = arith.constant 0 : index
    %26 = vector.load %arg2[%c3, %c0_14, %c0_15] : memref<25x4x8xf32, #tpu.memory_space<vmem>>, vector<1x4x8xf32>
    %27 = vector.shape_cast %26 : vector<1x4x8xf32> to vector<4x8xf32>
    %cst_16 = arith.constant dense<0.000000e+00> : vector<64x8xf32>
    %28 = tpu.matmul %25, %27, %cst_16 {dimension_numbers = #tpu.dot_dimension_numbers<[1], [0], [0], [1], [0, 0, 1, 1], [], []>} : vector<64x4xf32>, vector<4x8xf32>, vector<64x8xf32> -> vector<64x8xf32>
    %29 = arith.addf %22, %28 : vector<64x8xf32>
    %30 = vector.extract_strided_slice %0 {offsets = [0, 0, 0, 2, 0], sizes = [1, 1, 8, 8, 4], strides = [1, 1, 1, 1, 1]} : vector<1x4x10x10x4xf32> to vector<1x1x8x8x4xf32>
    %31 = vector.shape_cast %30 : vector<1x1x8x8x4xf32> to vector<8x8x4xf32>
    %32 = vector.shape_cast %31 : vector<8x8x4xf32> to vector<64x4xf32>
    %c4 = arith.constant 4 : index
    %c0_17 = arith.constant 0 : index
    %c0_18 = arith.constant 0 : index
    %33 = vector.load %arg2[%c4, %c0_17, %c0_18] : memref<25x4x8xf32, #tpu.memory_space<vmem>>, vector<1x4x8xf32>
    %34 = vector.shape_cast %33 : vector<1x4x8xf32> to vector<4x8xf32>
    %cst_19 = arith.constant dense<0.000000e+00> : vector<64x8xf32>
    %35 = tpu.matmul %32, %34, %cst_19 {dimension_numbers = #tpu.dot_dimension_numbers<[1], [0], [0], [1], [0, 0, 1, 1], [], []>} : vector<64x4xf32>, vector<4x8xf32>, vector<64x8xf32> -> vector<64x8xf32>
    %36 = arith.addf %29, %35 : vector<64x8xf32>
    %37 = vector.extract_strided_slice %0 {offsets = [0, 2, 0, 0, 0], sizes = [1, 1, 8, 8, 4], strides = [1, 1, 1, 1, 1]} : vector<1x4x10x10x4xf32> to vector<1x1x8x8x4xf32>
    %38 = vector.shape_cast %37 : vector<1x1x8x8x4xf32> to vector<8x8x4xf32>
    %39 = vector.shape_cast %38 : vector<8x8x4xf32> to vector<64x4xf32>
    %c5 = arith.constant 5 : index
    %c0_20 = arith.constant 0 : index
    %c0_21 = arith.constant 0 : index
    %40 = vector.load %arg2[%c5, %c0_20, %c0_21] : memref<25x4x8xf32, #tpu.memory_space<vmem>>, vector<1x4x8xf32>
    %41 = vector.shape_cast %40 : vector<1x4x8xf32> to vector<4x8xf32>
    %cst_22 = arith.constant dense<0.000000e+00> : vector<64x8xf32>
    %42 = tpu.matmul %39, %41, %cst_22 {dimension_numbers = #tpu.dot_dimension_numbers<[1], [0], [0], [1], [0, 0, 1, 1], [], []>} : vector<64x4xf32>, vector<4x8xf32>, vector<64x8xf32> -> vector<64x8xf32>
    %43 = arith.addf %36, %42 : vector<64x8xf32>
    %44 = vector.extract_strided_slice %0 {offsets = [0, 3, 0, 0, 0], sizes = [1, 1, 8, 8, 4], strides = [1, 1, 1, 1, 1]} : vector<1x4x10x10x4xf32> to vector<1x1x8x8x4xf32>
    %45 = vector.shape_cast %44 : vector<1x1x8x8x4xf32> to vector<8x8x4xf32>
    %46 = vector.shape_cast %45 : vector<8x8x4xf32> to vector<64x4xf32>
    %c6 = arith.constant 6 : index
    %c0_23 = arith.constant 0 : index
    %c0_24 = arith.constant 0 : index
    %47 = vector.load %arg2[%c6, %c0_23, %c0_24] : memref<25x4x8xf32, #tpu.memory_space<vmem>>, vector<1x4x8xf32>
    %48 = vector.shape_cast %47 : vector<1x4x8xf32> to vector<4x8xf32>
    %cst_25 = arith.constant dense<0.000000e+00> : vector<64x8xf32>
    %49 = tpu.matmul %46, %48, %cst_25 {dimension_numbers = #tpu.dot_dimension_numbers<[1], [0], [0], [1], [0, 0, 1, 1], [], []>} : vector<64x4xf32>, vector<4x8xf32>, vector<64x8xf32> -> vector<64x8xf32>
    %50 = arith.addf %43, %49 : vector<64x8xf32>
    %51 = vector.extract_strided_slice %0 {offsets = [0, 2, 0, 1, 0], sizes = [1, 1, 8, 8, 4], strides = [1, 1, 1, 1, 1]} : vector<1x4x10x10x4xf32> to vector<1x1x8x8x4xf32>
    %52 = vector.shape_cast %51 : vector<1x1x8x8x4xf32> to vector<8x8x4xf32>
    %53 = vector.shape_cast %52 : vector<8x8x4xf32> to vector<64x4xf32>
    %c7 = arith.constant 7 : index
    %c0_26 = arith.constant 0 : index
    %c0_27 = arith.constant 0 : index
    %54 = vector.load %arg2[%c7, %c0_26, %c0_27] : memref<25x4x8xf32, #tpu.memory_space<vmem>>, vector<1x4x8xf32>
    %55 = vector.shape_cast %54 : vector<1x4x8xf32> to vector<4x8xf32>
    %cst_28 = arith.constant dense<0.000000e+00> : vector<64x8xf32>
    %56 = tpu.matmul %53, %55, %cst_28 {dimension_numbers = #tpu.dot_dimension_numbers<[1], [0], [0], [1], [0, 0, 1, 1], [], []>} : vector<64x4xf32>, vector<4x8xf32>, vector<64x8xf32> -> vector<64x8xf32>
    %57 = arith.addf %50, %56 : vector<64x8xf32>
    %58 = vector.extract_strided_slice %0 {offsets = [0, 3, 0, 1, 0], sizes = [1, 1, 8, 8, 4], strides = [1, 1, 1, 1, 1]} : vector<1x4x10x10x4xf32> to vector<1x1x8x8x4xf32>
    %59 = vector.shape_cast %58 : vector<1x1x8x8x4xf32> to vector<8x8x4xf32>
    %60 = vector.shape_cast %59 : vector<8x8x4xf32> to vector<64x4xf32>
    %c8 = arith.constant 8 : index
    %c0_29 = arith.constant 0 : index
    %c0_30 = arith.constant 0 : index
    %61 = vector.load %arg2[%c8, %c0_29, %c0_30] : memref<25x4x8xf32, #tpu.memory_space<vmem>>, vector<1x4x8xf32>
    %62 = vector.shape_cast %61 : vector<1x4x8xf32> to vector<4x8xf32>
    %cst_31 = arith.constant dense<0.000000e+00> : vector<64x8xf32>
    %63 = tpu.matmul %60, %62, %cst_31 {dimension_numbers = #tpu.dot_dimension_numbers<[1], [0], [0], [1], [0, 0, 1, 1], [], []>} : vector<64x4xf32>, vector<4x8xf32>, vector<64x8xf32> -> vector<64x8xf32>
    %64 = arith.addf %57, %63 : vector<64x8xf32>
    %65 = vector.extract_strided_slice %0 {offsets = [0, 2, 0, 2, 0], sizes = [1, 1, 8, 8, 4], strides = [1, 1, 1, 1, 1]} : vector<1x4x10x10x4xf32> to vector<1x1x8x8x4xf32>
    %66 = vector.shape_cast %65 : vector<1x1x8x8x4xf32> to vector<8x8x4xf32>
    %67 = vector.shape_cast %66 : vector<8x8x4xf32> to vector<64x4xf32>
    %c9 = arith.constant 9 : index
    %c0_32 = arith.constant 0 : index
    %c0_33 = arith.constant 0 : index
    %68 = vector.load %arg2[%c9, %c0_32, %c0_33] : memref<25x4x8xf32, #tpu.memory_space<vmem>>, vector<1x4x8xf32>
    %69 = vector.shape_cast %68 : vector<1x4x8xf32> to vector<4x8xf32>
    %cst_34 = arith.constant dense<0.000000e+00> : vector<64x8xf32>
    %70 = tpu.matmul %67, %69, %cst_34 {dimension_numbers = #tpu.dot_dimension_numbers<[1], [0], [0], [1], [0, 0, 1, 1], [], []>} : vector<64x4xf32>, vector<4x8xf32>, vector<64x8xf32> -> vector<64x8xf32>
    %71 = arith.addf %64, %70 : vector<64x8xf32>
    %72 = vector.extract_strided_slice %0 {offsets = [0, 0, 1, 0, 0], sizes = [1, 1, 8, 8, 4], strides = [1, 1, 1, 1, 1]} : vector<1x4x10x10x4xf32> to vector<1x1x8x8x4xf32>
    %73 = vector.shape_cast %72 : vector<1x1x8x8x4xf32> to vector<8x8x4xf32>
    %74 = vector.shape_cast %73 : vector<8x8x4xf32> to vector<64x4xf32>
    %c10 = arith.constant 10 : index
    %c0_35 = arith.constant 0 : index
    %c0_36 = arith.constant 0 : index
    %75 = vector.load %arg2[%c10, %c0_35, %c0_36] : memref<25x4x8xf32, #tpu.memory_space<vmem>>, vector<1x4x8xf32>
    %76 = vector.shape_cast %75 : vector<1x4x8xf32> to vector<4x8xf32>
    %cst_37 = arith.constant dense<0.000000e+00> : vector<64x8xf32>
    %77 = tpu.matmul %74, %76, %cst_37 {dimension_numbers = #tpu.dot_dimension_numbers<[1], [0], [0], [1], [0, 0, 1, 1], [], []>} : vector<64x4xf32>, vector<4x8xf32>, vector<64x8xf32> -> vector<64x8xf32>
    %78 = arith.addf %71, %77 : vector<64x8xf32>
    %79 = vector.extract_strided_slice %0 {offsets = [0, 1, 1, 0, 0], sizes = [1, 1, 8, 8, 4], strides = [1, 1, 1, 1, 1]} : vector<1x4x10x10x4xf32> to vector<1x1x8x8x4xf32>
    %80 = vector.shape_cast %79 : vector<1x1x8x8x4xf32> to vector<8x8x4xf32>
    %81 = vector.shape_cast %80 : vector<8x8x4xf32> to vector<64x4xf32>
    %c11 = arith.constant 11 : index
    %c0_38 = arith.constant 0 : index
    %c0_39 = arith.constant 0 : index
    %82 = vector.load %arg2[%c11, %c0_38, %c0_39] : memref<25x4x8xf32, #tpu.memory_space<vmem>>, vector<1x4x8xf32>
    %83 = vector.shape_cast %82 : vector<1x4x8xf32> to vector<4x8xf32>
    %cst_40 = arith.constant dense<0.000000e+00> : vector<64x8xf32>
    %84 = tpu.matmul %81, %83, %cst_40 {dimension_numbers = #tpu.dot_dimension_numbers<[1], [0], [0], [1], [0, 0, 1, 1], [], []>} : vector<64x4xf32>, vector<4x8xf32>, vector<64x8xf32> -> vector<64x8xf32>
    %85 = arith.addf %78, %84 : vector<64x8xf32>
    %86 = vector.extract_strided_slice %0 {offsets = [0, 0, 1, 1, 0], sizes = [1, 1, 8, 8, 4], strides = [1, 1, 1, 1, 1]} : vector<1x4x10x10x4xf32> to vector<1x1x8x8x4xf32>
    %87 = vector.shape_cast %86 : vector<1x1x8x8x4xf32> to vector<8x8x4xf32>
    %88 = vector.shape_cast %87 : vector<8x8x4xf32> to vector<64x4xf32>
    %c12 = arith.constant 12 : index
    %c0_41 = arith.constant 0 : index
    %c0_42 = arith.constant 0 : index
    %89 = vector.load %arg2[%c12, %c0_41, %c0_42] : memref<25x4x8xf32, #tpu.memory_space<vmem>>, vector<1x4x8xf32>
    %90 = vector.shape_cast %89 : vector<1x4x8xf32> to vector<4x8xf32>
    %cst_43 = arith.constant dense<0.000000e+00> : vector<64x8xf32>
    %91 = tpu.matmul %88, %90, %cst_43 {dimension_numbers = #tpu.dot_dimension_numbers<[1], [0], [0], [1], [0, 0, 1, 1], [], []>} : vector<64x4xf32>, vector<4x8xf32>, vector<64x8xf32> -> vector<64x8xf32>
    %92 = arith.addf %85, %91 : vector<64x8xf32>
    %93 = vector.extract_strided_slice %0 {offsets = [0, 1, 1, 1, 0], sizes = [1, 1, 8, 8, 4], strides = [1, 1, 1, 1, 1]} : vector<1x4x10x10x4xf32> to vector<1x1x8x8x4xf32>
    %94 = vector.shape_cast %93 : vector<1x1x8x8x4xf32> to vector<8x8x4xf32>
    %95 = vector.shape_cast %94 : vector<8x8x4xf32> to vector<64x4xf32>
    %c13 = arith.constant 13 : index
    %c0_44 = arith.constant 0 : index
    %c0_45 = arith.constant 0 : index
    %96 = vector.load %arg2[%c13, %c0_44, %c0_45] : memref<25x4x8xf32, #tpu.memory_space<vmem>>, vector<1x4x8xf32>
    %97 = vector.shape_cast %96 : vector<1x4x8xf32> to vector<4x8xf32>
    %cst_46 = arith.constant dense<0.000000e+00> : vector<64x8xf32>
    %98 = tpu.matmul %95, %97, %cst_46 {dimension_numbers = #tpu.dot_dimension_numbers<[1], [0], [0], [1], [0, 0, 1, 1], [], []>} : vector<64x4xf32>, vector<4x8xf32>, vector<64x8xf32> -> vector<64x8xf32>
    %99 = arith.addf %92, %98 : vector<64x8xf32>
    %100 = vector.extract_strided_slice %0 {offsets = [0, 0, 1, 2, 0], sizes = [1, 1, 8, 8, 4], strides = [1, 1, 1, 1, 1]} : vector<1x4x10x10x4xf32> to vector<1x1x8x8x4xf32>
    %101 = vector.shape_cast %100 : vector<1x1x8x8x4xf32> to vector<8x8x4xf32>
    %102 = vector.shape_cast %101 : vector<8x8x4xf32> to vector<64x4xf32>
    %c14 = arith.constant 14 : index
    %c0_47 = arith.constant 0 : index
    %c0_48 = arith.constant 0 : index
    %103 = vector.load %arg2[%c14, %c0_47, %c0_48] : memref<25x4x8xf32, #tpu.memory_space<vmem>>, vector<1x4x8xf32>
    %104 = vector.shape_cast %103 : vector<1x4x8xf32> to vector<4x8xf32>
    %cst_49 = arith.constant dense<0.000000e+00> : vector<64x8xf32>
    %105 = tpu.matmul %102, %104, %cst_49 {dimension_numbers = #tpu.dot_dimension_numbers<[1], [0], [0], [1], [0, 0, 1, 1], [], []>} : vector<64x4xf32>, vector<4x8xf32>, vector<64x8xf32> -> vector<64x8xf32>
    %106 = arith.addf %99, %105 : vector<64x8xf32>
    %107 = vector.extract_strided_slice %0 {offsets = [0, 2, 1, 0, 0], sizes = [1, 1, 8, 8, 4], strides = [1, 1, 1, 1, 1]} : vector<1x4x10x10x4xf32> to vector<1x1x8x8x4xf32>
    %108 = vector.shape_cast %107 : vector<1x1x8x8x4xf32> to vector<8x8x4xf32>
    %109 = vector.shape_cast %108 : vector<8x8x4xf32> to vector<64x4xf32>
    %c15 = arith.constant 15 : index
    %c0_50 = arith.constant 0 : index
    %c0_51 = arith.constant 0 : index
    %110 = vector.load %arg2[%c15, %c0_50, %c0_51] : memref<25x4x8xf32, #tpu.memory_space<vmem>>, vector<1x4x8xf32>
    %111 = vector.shape_cast %110 : vector<1x4x8xf32> to vector<4x8xf32>
    %cst_52 = arith.constant dense<0.000000e+00> : vector<64x8xf32>
    %112 = tpu.matmul %109, %111, %cst_52 {dimension_numbers = #tpu.dot_dimension_numbers<[1], [0], [0], [1], [0, 0, 1, 1], [], []>} : vector<64x4xf32>, vector<4x8xf32>, vector<64x8xf32> -> vector<64x8xf32>
    %113 = arith.addf %106, %112 : vector<64x8xf32>
    %114 = vector.extract_strided_slice %0 {offsets = [0, 3, 1, 0, 0], sizes = [1, 1, 8, 8, 4], strides = [1, 1, 1, 1, 1]} : vector<1x4x10x10x4xf32> to vector<1x1x8x8x4xf32>
    %115 = vector.shape_cast %114 : vector<1x1x8x8x4xf32> to vector<8x8x4xf32>
    %116 = vector.shape_cast %115 : vector<8x8x4xf32> to vector<64x4xf32>
    %c16 = arith.constant 16 : index
    %c0_53 = arith.constant 0 : index
    %c0_54 = arith.constant 0 : index
    %117 = vector.load %arg2[%c16, %c0_53, %c0_54] : memref<25x4x8xf32, #tpu.memory_space<vmem>>, vector<1x4x8xf32>
    %118 = vector.shape_cast %117 : vector<1x4x8xf32> to vector<4x8xf32>
    %cst_55 = arith.constant dense<0.000000e+00> : vector<64x8xf32>
    %119 = tpu.matmul %116, %118, %cst_55 {dimension_numbers = #tpu.dot_dimension_numbers<[1], [0], [0], [1], [0, 0, 1, 1], [], []>} : vector<64x4xf32>, vector<4x8xf32>, vector<64x8xf32> -> vector<64x8xf32>
    %120 = arith.addf %113, %119 : vector<64x8xf32>
    %121 = vector.extract_strided_slice %0 {offsets = [0, 2, 1, 1, 0], sizes = [1, 1, 8, 8, 4], strides = [1, 1, 1, 1, 1]} : vector<1x4x10x10x4xf32> to vector<1x1x8x8x4xf32>
    %122 = vector.shape_cast %121 : vector<1x1x8x8x4xf32> to vector<8x8x4xf32>
    %123 = vector.shape_cast %122 : vector<8x8x4xf32> to vector<64x4xf32>
    %c17 = arith.constant 17 : index
    %c0_56 = arith.constant 0 : index
    %c0_57 = arith.constant 0 : index
    %124 = vector.load %arg2[%c17, %c0_56, %c0_57] : memref<25x4x8xf32, #tpu.memory_space<vmem>>, vector<1x4x8xf32>
    %125 = vector.shape_cast %124 : vector<1x4x8xf32> to vector<4x8xf32>
    %cst_58 = arith.constant dense<0.000000e+00> : vector<64x8xf32>
    %126 = tpu.matmul %123, %125, %cst_58 {dimension_numbers = #tpu.dot_dimension_numbers<[1], [0], [0], [1], [0, 0, 1, 1], [], []>} : vector<64x4xf32>, vector<4x8xf32>, vector<64x8xf32> -> vector<64x8xf32>
    %127 = arith.addf %120, %126 : vector<64x8xf32>
    %128 = vector.extract_strided_slice %0 {offsets = [0, 3, 1, 1, 0], sizes = [1, 1, 8, 8, 4], strides = [1, 1, 1, 1, 1]} : vector<1x4x10x10x4xf32> to vector<1x1x8x8x4xf32>
    %129 = vector.shape_cast %128 : vector<1x1x8x8x4xf32> to vector<8x8x4xf32>
    %130 = vector.shape_cast %129 : vector<8x8x4xf32> to vector<64x4xf32>
    %c18 = arith.constant 18 : index
    %c0_59 = arith.constant 0 : index
    %c0_60 = arith.constant 0 : index
    %131 = vector.load %arg2[%c18, %c0_59, %c0_60] : memref<25x4x8xf32, #tpu.memory_space<vmem>>, vector<1x4x8xf32>
    %132 = vector.shape_cast %131 : vector<1x4x8xf32> to vector<4x8xf32>
    %cst_61 = arith.constant dense<0.000000e+00> : vector<64x8xf32>
    %133 = tpu.matmul %130, %132, %cst_61 {dimension_numbers = #tpu.dot_dimension_numbers<[1], [0], [0], [1], [0, 0, 1, 1], [], []>} : vector<64x4xf32>, vector<4x8xf32>, vector<64x8xf32> -> vector<64x8xf32>
    %134 = arith.addf %127, %133 : vector<64x8xf32>
    %135 = vector.extract_strided_slice %0 {offsets = [0, 2, 1, 2, 0], sizes = [1, 1, 8, 8, 4], strides = [1, 1, 1, 1, 1]} : vector<1x4x10x10x4xf32> to vector<1x1x8x8x4xf32>
    %136 = vector.shape_cast %135 : vector<1x1x8x8x4xf32> to vector<8x8x4xf32>
    %137 = vector.shape_cast %136 : vector<8x8x4xf32> to vector<64x4xf32>
    %c19 = arith.constant 19 : index
    %c0_62 = arith.constant 0 : index
    %c0_63 = arith.constant 0 : index
    %138 = vector.load %arg2[%c19, %c0_62, %c0_63] : memref<25x4x8xf32, #tpu.memory_space<vmem>>, vector<1x4x8xf32>
    %139 = vector.shape_cast %138 : vector<1x4x8xf32> to vector<4x8xf32>
    %cst_64 = arith.constant dense<0.000000e+00> : vector<64x8xf32>
    %140 = tpu.matmul %137, %139, %cst_64 {dimension_numbers = #tpu.dot_dimension_numbers<[1], [0], [0], [1], [0, 0, 1, 1], [], []>} : vector<64x4xf32>, vector<4x8xf32>, vector<64x8xf32> -> vector<64x8xf32>
    %141 = arith.addf %134, %140 : vector<64x8xf32>
    %142 = vector.extract_strided_slice %0 {offsets = [0, 0, 2, 0, 0], sizes = [1, 1, 8, 8, 4], strides = [1, 1, 1, 1, 1]} : vector<1x4x10x10x4xf32> to vector<1x1x8x8x4xf32>
    %143 = vector.shape_cast %142 : vector<1x1x8x8x4xf32> to vector<8x8x4xf32>
    %144 = vector.shape_cast %143 : vector<8x8x4xf32> to vector<64x4xf32>
    %c20 = arith.constant 20 : index
    %c0_65 = arith.constant 0 : index
    %c0_66 = arith.constant 0 : index
    %145 = vector.load %arg2[%c20, %c0_65, %c0_66] : memref<25x4x8xf32, #tpu.memory_space<vmem>>, vector<1x4x8xf32>
    %146 = vector.shape_cast %145 : vector<1x4x8xf32> to vector<4x8xf32>
    %cst_67 = arith.constant dense<0.000000e+00> : vector<64x8xf32>
    %147 = tpu.matmul %144, %146, %cst_67 {dimension_numbers = #tpu.dot_dimension_numbers<[1], [0], [0], [1], [0, 0, 1, 1], [], []>} : vector<64x4xf32>, vector<4x8xf32>, vector<64x8xf32> -> vector<64x8xf32>
    %148 = arith.addf %141, %147 : vector<64x8xf32>
    %149 = vector.extract_strided_slice %0 {offsets = [0, 1, 2, 0, 0], sizes = [1, 1, 8, 8, 4], strides = [1, 1, 1, 1, 1]} : vector<1x4x10x10x4xf32> to vector<1x1x8x8x4xf32>
    %150 = vector.shape_cast %149 : vector<1x1x8x8x4xf32> to vector<8x8x4xf32>
    %151 = vector.shape_cast %150 : vector<8x8x4xf32> to vector<64x4xf32>
    %c21 = arith.constant 21 : index
    %c0_68 = arith.constant 0 : index
    %c0_69 = arith.constant 0 : index
    %152 = vector.load %arg2[%c21, %c0_68, %c0_69] : memref<25x4x8xf32, #tpu.memory_space<vmem>>, vector<1x4x8xf32>
    %153 = vector.shape_cast %152 : vector<1x4x8xf32> to vector<4x8xf32>
    %cst_70 = arith.constant dense<0.000000e+00> : vector<64x8xf32>
    %154 = tpu.matmul %151, %153, %cst_70 {dimension_numbers = #tpu.dot_dimension_numbers<[1], [0], [0], [1], [0, 0, 1, 1], [], []>} : vector<64x4xf32>, vector<4x8xf32>, vector<64x8xf32> -> vector<64x8xf32>
    %155 = arith.addf %148, %154 : vector<64x8xf32>
    %156 = vector.extract_strided_slice %0 {offsets = [0, 0, 2, 1, 0], sizes = [1, 1, 8, 8, 4], strides = [1, 1, 1, 1, 1]} : vector<1x4x10x10x4xf32> to vector<1x1x8x8x4xf32>
    %157 = vector.shape_cast %156 : vector<1x1x8x8x4xf32> to vector<8x8x4xf32>
    %158 = vector.shape_cast %157 : vector<8x8x4xf32> to vector<64x4xf32>
    %c22 = arith.constant 22 : index
    %c0_71 = arith.constant 0 : index
    %c0_72 = arith.constant 0 : index
    %159 = vector.load %arg2[%c22, %c0_71, %c0_72] : memref<25x4x8xf32, #tpu.memory_space<vmem>>, vector<1x4x8xf32>
    %160 = vector.shape_cast %159 : vector<1x4x8xf32> to vector<4x8xf32>
    %cst_73 = arith.constant dense<0.000000e+00> : vector<64x8xf32>
    %161 = tpu.matmul %158, %160, %cst_73 {dimension_numbers = #tpu.dot_dimension_numbers<[1], [0], [0], [1], [0, 0, 1, 1], [], []>} : vector<64x4xf32>, vector<4x8xf32>, vector<64x8xf32> -> vector<64x8xf32>
    %162 = arith.addf %155, %161 : vector<64x8xf32>
    %163 = vector.extract_strided_slice %0 {offsets = [0, 1, 2, 1, 0], sizes = [1, 1, 8, 8, 4], strides = [1, 1, 1, 1, 1]} : vector<1x4x10x10x4xf32> to vector<1x1x8x8x4xf32>
    %164 = vector.shape_cast %163 : vector<1x1x8x8x4xf32> to vector<8x8x4xf32>
    %165 = vector.shape_cast %164 : vector<8x8x4xf32> to vector<64x4xf32>
    %c23 = arith.constant 23 : index
    %c0_74 = arith.constant 0 : index
    %c0_75 = arith.constant 0 : index
    %166 = vector.load %arg2[%c23, %c0_74, %c0_75] : memref<25x4x8xf32, #tpu.memory_space<vmem>>, vector<1x4x8xf32>
    %167 = vector.shape_cast %166 : vector<1x4x8xf32> to vector<4x8xf32>
    %cst_76 = arith.constant dense<0.000000e+00> : vector<64x8xf32>
    %168 = tpu.matmul %165, %167, %cst_76 {dimension_numbers = #tpu.dot_dimension_numbers<[1], [0], [0], [1], [0, 0, 1, 1], [], []>} : vector<64x4xf32>, vector<4x8xf32>, vector<64x8xf32> -> vector<64x8xf32>
    %169 = arith.addf %162, %168 : vector<64x8xf32>
    %170 = vector.extract_strided_slice %0 {offsets = [0, 0, 2, 2, 0], sizes = [1, 1, 8, 8, 4], strides = [1, 1, 1, 1, 1]} : vector<1x4x10x10x4xf32> to vector<1x1x8x8x4xf32>
    %171 = vector.shape_cast %170 : vector<1x1x8x8x4xf32> to vector<8x8x4xf32>
    %172 = vector.shape_cast %171 : vector<8x8x4xf32> to vector<64x4xf32>
    %c24 = arith.constant 24 : index
    %c0_77 = arith.constant 0 : index
    %c0_78 = arith.constant 0 : index
    %173 = vector.load %arg2[%c24, %c0_77, %c0_78] : memref<25x4x8xf32, #tpu.memory_space<vmem>>, vector<1x4x8xf32>
    %174 = vector.shape_cast %173 : vector<1x4x8xf32> to vector<4x8xf32>
    %cst_79 = arith.constant dense<0.000000e+00> : vector<64x8xf32>
    %175 = tpu.matmul %172, %174, %cst_79 {dimension_numbers = #tpu.dot_dimension_numbers<[1], [0], [0], [1], [0, 0, 1, 1], [], []>} : vector<64x4xf32>, vector<4x8xf32>, vector<64x8xf32> -> vector<64x8xf32>
    %176 = arith.addf %169, %175 : vector<64x8xf32>
    %c0_80 = arith.constant 0 : index
    %c0_81 = arith.constant 0 : index
    %177 = vector.load %arg3[%c0_80, %c0_81] : memref<1x8xf32, #tpu.memory_space<vmem>>, vector<1x8xf32>
    %178 = vector.broadcast %177 : vector<1x8xf32> to vector<64x8xf32>
    %179 = arith.addf %176, %178 : vector<64x8xf32>
    %180 = vector.shape_cast %179 : vector<64x8xf32> to vector<8x8x8xf32>
    %c0_82 = arith.constant 0 : index
    %c0_83 = arith.constant 0 : index
    %c0_84 = arith.constant 0 : index
    %c0_85 = arith.constant 0 : index
    %181 = vector.load %arg4[%c0_82, %c0_83, %c0_84, %c0_85] : memref<1x8x8x8xf32, #tpu.memory_space<vmem>>, vector<1x8x8x8xf32>
    %182 = vector.shape_cast %181 : vector<1x8x8x8xf32> to vector<8x8x8xf32>
    %183 = vector.shape_cast %180 : vector<8x8x8xf32> to vector<1x8x8x8xf32>
    tpu.vector_store %arg4[%c0_82, %c0_83, %c0_84, %c0_85], %183 {strides = array<i32>} : memref<1x8x8x8xf32, #tpu.memory_space<vmem>>, vector<1x8x8x8xf32>,
    return
  }
  func.func @transform_0(%arg0: i32) -> (i32, i32, i32, i32, i32) {
    %c0_i32 = arith.constant 0 : i32
    %c0_i32_0 = arith.constant 0 : i32
    %c0_i32_1 = arith.constant 0 : i32
    %c0_i32_2 = arith.constant 0 : i32
    %c0_i32_3 = arith.constant 0 : i32
    return %arg0, %c0_i32, %c0_i32_0, %c0_i32_1, %c0_i32_2 : i32, i32, i32, i32, i32
  }
  func.func @transform_1(%arg0: i32) -> (i32, i32, i32) {
    %c0_i32 = arith.constant 0 : i32
    %c0_i32_0 = arith.constant 0 : i32
    %c0_i32_1 = arith.constant 0 : i32
    %c0_i32_2 = arith.constant 0 : i32
    return %c0_i32, %c0_i32_0, %c0_i32_1 : i32, i32, i32
  }
  func.func @transform_2(%arg0: i32) -> (i32, i32) {
    %c0_i32 = arith.constant 0 : i32
    %c0_i32_0 = arith.constant 0 : i32
    %c0_i32_1 = arith.constant 0 : i32
    return %c0_i32, %c0_i32_0 : i32, i32
  }
  func.func @transform_3(%arg0: i32) -> (i32, i32, i32, i32) {
    %c0_i32 = arith.constant 0 : i32
    %c0_i32_0 = arith.constant 0 : i32
    %c0_i32_1 = arith.constant 0 : i32
    %c0_i32_2 = arith.constant 0 : i32
    return %arg0, %c0_i32, %c0_i32_0, %c0_i32_1 : i32, i32, i32, i32
  }
}

</mosaic_0001>

<llo_original>
// kernel: conv2d_same.1
$region0: #{conv2d_same.1}
  #allocation0 [shape = 'u32[]', space=smem, size = 0x4, offset = 0x4, fixed_abs, tag = 'smem constant byte address 0x4 - core index']
  #allocation1 [shape = 'u32[144,128]{1,0:T(1,128)}', space=vmem, size = 0x12000, scoped, tag = 'internal scratch']
  %s0 = inlined_call_operand.vmem [shape: f32[2,4,10,10,4], index: 0, kind: input, shape index: {}]
  %s1 = inlined_call_operand.vmem [shape: f32[25,4,8], index: 1, kind: input, shape index: {}]
  %s2 = inlined_call_operand.vmem [shape: f32[1,8], index: 2, kind: input, shape index: {}]
  %s3 = inlined_call_operand.vmem [shape: f32[2,8,8,8], index: 3, kind: output, shape index: {}]
  %s4 = sld [smem:[#allocation0]]
  $region45: #{conv2d_same.1} parent=0
    _
  %s6 = ssub.s32 1, %s4
  %s7 = scalar_select 0, %s6, %s4
  loop: start=0, step=1, limit=4
  $region2: #{conv2d_same.1} parent=0 // loop_pre_header
    _
  $region3: #{conv2d_same.1} parent=0 // loop_header
    %s9 = sphi 0, %s13
    %p10 = scmp.ge.s32.totalorder %s9, 4
    %s19 = sphi 0, %s21
    %s22 = sphi 0, %s19
    %s23 = sphi 0, %s22
    %s39 = sphi 0, %s23
    %s43 = sphi 0, %s43
    %s45 = sphi 0, %s43
    %s46 = sphi 0, %s45
    %s60 = sphi 0, %s46
    %s64 = sphi 0, %s64
    %s66 = sphi 0, %s64
    %s67 = sphi 0, %s66
    %s81 = sphi 0, %s67
    %s87 = sphi 0, %s89
    %s90 = sphi 0, %s87
    %s91 = sphi 0, %s90
    %s107 = sphi 0, %s91
  $region4: #{conv2d_same.1} parent=0 // loop_header_branch
    %12 = sbr.rel (%p10) target = $region8
  $region5: #{conv2d_same.1} parent=0 // loop_body
    %s14 = ssub.s32 %s9, 1
    %s15 = ssub.s32 %s9, 2
    %s16 = sadd.s32 %s9, 1
    %s17 = ssub.s32 %s9, %s16
    %p18 = scmp.eq.s32.totalorder %s17, 0
    %s20 = sadd.s32 %s19, 1
    %s21 = scalar_select %p18, %s19, %s20
    %p24 = pneg %p18
    %p25 = scmp.eq.s32.totalorder %s9, 1
    %p26 = por %p24, %p25
    %p27 = scmp.ne.s32.totalorder %s19, %s22
    %p28 = scmp.eq.s32.totalorder %s9, 0
    %p29 = por %p27, %p28
    %p30 = scmp.ne.s32.totalorder %s19, %s22
    %p31 = scmp.eq.s32.totalorder %s14, 1
    %p32 = por %p30, %p31
    %p33 = scmp.ne.s32.totalorder %s22, %s23
    %p34 = scmp.eq.s32.totalorder %s14, 0
    %p35 = por %p33, %p34
    %p36 = scmp.ne.s32.totalorder %s22, %s23
    %p37 = scmp.eq.s32.totalorder %s15, 1
    %p38 = por %p36, %p37
    %p40 = scmp.ne.s32.totalorder %s23, %s39
    %p41 = scmp.eq.s32.totalorder %s15, 0
    %p42 = por %p40, %p41
    %s44 = sadd.s32 %s43, 1
    %p47 = scmp.eq.s32.totalorder %s9, 1
    %p48 = scmp.ne.s32.totalorder %s43, %s45
    %p49 = scmp.eq.s32.totalorder %s9, 0
    %p50 = por %p48, %p49
    %p51 = scmp.ne.s32.totalorder %s43, %s45
    %p52 = scmp.eq.s32.totalorder %s14, 1
    %p53 = por %p51, %p52
    %p54 = scmp.ne.s32.totalorder %s45, %s46
    %p55 = scmp.eq.s32.totalorder %s14, 0
    %p56 = por %p54, %p55
    %p57 = scmp.ne.s32.totalorder %s45, %s46
    %p58 = scmp.eq.s32.totalorder %s15, 1
    %p59 = por %p57, %p58
    %p61 = scmp.ne.s32.totalorder %s46, %s60
    %p62 = scmp.eq.s32.totalorder %s15, 0
    %p63 = por %p61, %p62
    %s65 = sadd.s32 %s64, 1
    %p68 = scmp.eq.s32.totalorder %s9, 1
    %p69 = scmp.ne.s32.totalorder %s64, %s66
    %p70 = scmp.eq.s32.totalorder %s9, 0
    %p71 = por %p69, %p70
    %p72 = scmp.ne.s32.totalorder %s64, %s66
    %p73 = scmp.eq.s32.totalorder %s14, 1
    %p74 = por %p72, %p73
    %p75 = scmp.ne.s32.totalorder %s66, %s67
    %p76 = scmp.eq.s32.totalorder %s14, 0
    %p77 = por %p75, %p76
    %p78 = scmp.ne.s32.totalorder %s66, %s67
    %p79 = scmp.eq.s32.totalorder %s15, 1
    %p80 = por %p78, %p79
    %p82 = scmp.ne.s32.totalorder %s67, %s81
    %p83 = scmp.eq.s32.totalorder %s15, 0
    %p84 = por %p82, %p83
    %s85 = ssub.s32 %s9, %s16
    %p86 = scmp.eq.s32.totalorder %s85, 0
    %s88 = sadd.s32 %s87, 1
    %s89 = scalar_select %p86, %s87, %s88
    %p92 = pneg %p86
    %p93 = scmp.eq.s32.totalorder %s9, 1
    %p94 = por %p92, %p93
    %p95 = scmp.ne.s32.totalorder %s87, %s90
    %p96 = scmp.eq.s32.totalorder %s9, 0
    %p97 = por %p95, %p96
    %p98 = scmp.ne.s32.totalorder %s87, %s90
    %p99 = scmp.eq.s32.totalorder %s14, 1
    %p100 = por %p98, %p99
    %p101 = scmp.ne.s32.totalorder %s90, %s91
    %p102 = scmp.eq.s32.totalorder %s14, 0
    %p103 = por %p101, %p102
    %p104 = scmp.ne.s32.totalorder %s90, %s91
    %p105 = scmp.eq.s32.totalorder %s15, 1
    %p106 = por %p104, %p105
    %p108 = scmp.ne.s32.totalorder %s91, %s107
    %p109 = scmp.eq.s32.totalorder %s15, 0
    %p110 = por %p108, %p109
    %p111 = scmp.le.s32.totalorder 1, %s9
    %p112 = scmp.lt.s32.totalorder %s9, 3
    %p113 = pnand %p111, %p112
    %p114 = pneg %p113
    // Predicated region
    $region9: #{conv2d_same.1} parent=5 // pred_check
      _
    $region10: #{conv2d_same.1} parent=5 // pred_check_branch
      %116 = sbr.rel (%p113) target = $region12
    $region11: #{conv2d_same.1} parent=5 // pred_region
      %s117 = ssub.s32 %s9, 1
      // Predicated region
      $region13: #{conv2d_same.1} parent=11 // pred_check
        %p118 = pneg %p56
      $region14: #{conv2d_same.1} parent=11 // pred_check_branch
        %120 = sbr.rel (%p118) target = $region16
      $region15: #{conv2d_same.1} parent=11 // pred_region
        _
      $region16: #{conv2d_same.1} parent=11 // pred_fallthru
        _
      // Predicated region
      $region17: #{conv2d_same.1} parent=11 // pred_check
        %p121 = pneg %p77
      $region18: #{conv2d_same.1} parent=11 // pred_check_branch
        %123 = sbr.rel (%p121) target = $region20
      $region19: #{conv2d_same.1} parent=11 // pred_region
        _
      $region20: #{conv2d_same.1} parent=11 // pred_fallthru
        _
    $region12: #{conv2d_same.1} parent=5 // pred_fallthru
      _
    %p124 = scmp.lt.s32.totalorder %s9, 2
    // Predicated region
    $region21: #{conv2d_same.1} parent=5 // pred_check
      %p125 = pneg %p124
    $region22: #{conv2d_same.1} parent=5 // pred_check_branch
      %127 = sbr.rel (%p125) target = $region24
    $region23: #{conv2d_same.1} parent=5 // pred_region
      // Predicated region
      $region25: #{conv2d_same.1} parent=23 // pred_check
        %p128 = pneg %p29
      $region26: #{conv2d_same.1} parent=23 // pred_check_branch
        %130 = sbr.rel (%p128) target = $region28
      $region27: #{conv2d_same.1} parent=23 // pred_region
        %p131 = scmp.lt.s32.totalorder %s9, 1
        %s132 = scalar_select %p131, %s9, 1
        %s133 = smul.addr %s132, 80
        %s134 = smul.addr %s133, 8
        %s135 = scalar_lea.vmem %s0, %s134
      $region28: #{conv2d_same.1} parent=23 // pred_fallthru
        _
    $region24: #{conv2d_same.1} parent=5 // pred_fallthru
      _
    %p136 = scmp.le.s32.totalorder 1, %s9
    %p137 = scmp.lt.s32.totalorder %s9, 3
    %p138 = pnand %p136, %p137
    %p139 = pneg %p138
    // Predicated region
    $region29: #{conv2d_same.1} parent=5 // pred_check
      _
    $region30: #{conv2d_same.1} parent=5 // pred_check_branch
      %141 = sbr.rel (%p138) target = $region32
    $region31: #{conv2d_same.1} parent=5 // pred_region
      %s142 = ssub.s32 %s9, 1
      %p143 = scmp.lt.s32.totalorder %s14, 1
      %s144 = scalar_select %p143, %s14, 1
      %s145 = smul.addr %s144, 80
      %s146 = smul.addr %s145, 8
      %s147 = scalar_lea.vmem %s0, %s146
      %p148 = pneg %p35
      %p149 = pneg %p32
      %p150 = pneg %p56
      %p151 = pneg %p53
      %p152 = pneg %p77
      %p153 = pneg %p74
      %p154 = pneg %p103
      %p155 = pneg %p100
      %p156 = scmp.lt.s32.totalorder %s14, 1
      %s157 = scalar_select %p156, %s14, 1
      %s158 = smul.addr %s157, 8
      %s159 = smul.addr %s158, 8
      %s160 = scalar_lea.vmem %s3, %s159
      %p161 = scmp.lt.s32.totalorder %s14, 1
      %s162 = scalar_select %p161, %s14, 1
      %s163 = smul.addr %s162, 80
      %s164 = smul.addr %s163, 8
      %s165 = scalar_lea.vmem %s0, %s164
      %p166 = scmp.lt.s32.totalorder %s14, 1
      %s167 = scalar_select %p166, %s14, 1
      %s168 = smul.addr %s167, 8
      %s169 = smul.addr %s168, 8
      %s170 = scalar_lea.vmem %s3, %s169
      %v171 = vld [vmem:[%s165] sm:$0xff]
      %v172 = vld [vmem:[%s165 + $0x8] sm:$0x3]
      %v173 = vld [vmem:[%s165 + $0x10] sm:$0xff]
      %v174 = vld [vmem:[%s165 + $0x18] sm:$0x3]
      %v175 = vld [vmem:[%s165 + $0x20] sm:$0xff]
      %v176 = vld [vmem:[%s165 + $0x28] sm:$0x3]
      %v177 = vld [vmem:[%s165 + $0x30] sm:$0xff]
      %v178 = vld [vmem:[%s165 + $0x38] sm:$0x3]
      %v179 = vld [vmem:[%s165 + $0x40] sm:$0xff]
      %v180 = vld [vmem:[%s165 + $0x48] sm:$0x3]
      %v181 = vld [vmem:[%s165 + $0x50] sm:$0xff]
      %v182 = vld [vmem:[%s165 + $0x58] sm:$0x3]
      %v183 = vld [vmem:[%s165 + $0x60] sm:$0xff]
      %v184 = vld [vmem:[%s165 + $0x68] sm:$0x3]
      %v185 = vld [vmem:[%s165 + $0x70] sm:$0xff]
      %v186 = vld [vmem:[%s165 + $0x78] sm:$0x3]
      %v187 = vld [vmem:[%s165 + $0x80] sm:$0xff]
      %v188 = vld [vmem:[%s165 + $0x88] sm:$0x3]
      %v189 = vld [vmem:[%s165 + $0x90] sm:$0xff]
      %v190 = vld [vmem:[%s165 + $0x98] sm:$0x3]
      %v191 = vld [vmem:[%s165 + $0xa0] sm:$0xff]
      %v192 = vld [vmem:[%s165 + $0xa8] sm:$0x3]
      %v193 = vld [vmem:[%s165 + $0xb0] sm:$0xff]
      %v194 = vld [vmem:[%s165 + $0xb8] sm:$0x3]
      %v195 = vld [vmem:[%s165 + $0xc0] sm:$0xff]
      %v196 = vld [vmem:[%s165 + $0xc8] sm:$0x3]
      %v197 = vld [vmem:[%s165 + $0xd0] sm:$0xff]
      %v198 = vld [vmem:[%s165 + $0xd8] sm:$0x3]
      %v199 = vld [vmem:[%s165 + $0xe0] sm:$0xff]
      %v200 = vld [vmem:[%s165 + $0xe8] sm:$0x3]
      %v201 = vld [vmem:[%s165 + $0xf0] sm:$0xff]
      %v202 = vld [vmem:[%s165 + $0xf8] sm:$0x3]
      %v203 = vld [vmem:[%s165 + $0x100] sm:$0xff]
      %v204 = vld [vmem:[%s165 + $0x108] sm:$0x3]
      %v205 = vld [vmem:[%s165 + $0x110] sm:$0xff]
      %v206 = vld [vmem:[%s165 + $0x118] sm:$0x3]
      %v207 = vld [vmem:[%s165 + $0x120] sm:$0xff]
      %v208 = vld [vmem:[%s165 + $0x128] sm:$0x3]
      %v209 = vld [vmem:[%s165 + $0x130] sm:$0xff]
      %v210 = vld [vmem:[%s165 + $0x138] sm:$0x3]
      %v211 = vld [vmem:[%s165 + $0x140] sm:$0xff]
      %v212 = vld [vmem:[%s165 + $0x148] sm:$0x3]
      %v213 = vld [vmem:[%s165 + $0x150] sm:$0xff]
      %v214 = vld [vmem:[%s165 + $0x158] sm:$0x3]
      %v215 = vld [vmem:[%s165 + $0x160] sm:$0xff]
      %v216 = vld [vmem:[%s165 + $0x168] sm:$0x3]
      %v217 = vld [vmem:[%s165 + $0x170] sm:$0xff]
      %v218 = vld [vmem:[%s165 + $0x178] sm:$0x3]
      %v219 = vld [vmem:[%s165 + $0x180] sm:$0xff]
      %v220 = vld [vmem:[%s165 + $0x188] sm:$0x3]
      %v221 = vld [vmem:[%s165 + $0x190] sm:$0xff]
      %v222 = vld [vmem:[%s165 + $0x198] sm:$0x3]
      %v223 = vld [vmem:[%s165 + $0x1a0] sm:$0xff]
      %v224 = vld [vmem:[%s165 + $0x1a8] sm:$0x3]
      %v225 = vld [vmem:[%s165 + $0x1b0] sm:$0xff]
      %v226 = vld [vmem:[%s165 + $0x1b8] sm:$0x3]
      %v227 = vld [vmem:[%s165 + $0x1c0] sm:$0xff]
      %v228 = vld [vmem:[%s165 + $0x1c8] sm:$0x3]
      %v229 = vld [vmem:[%s165 + $0x1e0] sm:$0xff]
      %v230 = vld [vmem:[%s165 + $0x1e8] sm:$0x3]
      %v231 = vld [vmem:[%s165 + $0x1f0] sm:$0xff]
      %v232 = vld [vmem:[%s165 + $0x1f8] sm:$0x3]
      %v233 = vld [vmem:[%s165 + $0x200] sm:$0xff]
      %v234 = vld [vmem:[%s165 + $0x208] sm:$0x3]
      %v235 = vld [vmem:[%s165 + $0x210] sm:$0xff]
      %v236 = vld [vmem:[%s165 + $0x218] sm:$0x3]
      %v237 = vld [vmem:[%s165 + $0x220] sm:$0xff]
      %v238 = vld [vmem:[%s165 + $0x228] sm:$0x3]
      %v239 = vld [vmem:[%s165 + $0x230] sm:$0xff]
      %v240 = vld [vmem:[%s165 + $0x238] sm:$0x3]
      %v241 = vld [vmem:[%s165 + $0x240] sm:$0xff]
      %v242 = vld [vmem:[%s165 + $0x248] sm:$0x3]
      %v243 = vld [vmem:[%s165 + $0x250] sm:$0xff]
      %v244 = vld [vmem:[%s165 + $0x258] sm:$0x3]
      %v245 = vld [vmem:[%s165 + $0x260] sm:$0xff]
      %v246 = vld [vmem:[%s165 + $0x268] sm:$0x3]
      %v247 = vld [vmem:[%s1] sm:$0xf]
      %s248 = scalar_lea.vmem %s1, 4
      %v249 = vld [vmem:[%s248] sm:$0xf]
      %vm250 = vcmask 31744
      %v252 = vsel %vm250, %v191, 0
      %v255 = vsel %vm250, %v193, 0
      %v258 = vsel %vm250, %v195, 0
      %v261 = vsel %vm250, %v197, 0
      %v264 = vsel %vm250, %v199, 0
      %v267 = vsel %vm250, %v201, 0
      %v270 = vsel %vm250, %v203, 0
      %v273 = vsel %vm250, %v205, 0
      %vm275 = vcmask 1043456
      %v277 = vsel %vm275, %v249, 0
      %279 = vmatprep.subr.mxu0 0.0
      %280 = vmatpush1.msra.mxu0 0.0
      %281 = vmatprep.subr.mxu0 0.0
      %282 = vmatpush1.msra.mxu0 0.0
      %283 = vmatprep.subr.mxu0 0.0
      %284 = vmatpush1.msra.mxu0 0.0
      %285 = vmatprep.subr.mxu0 0.0
      %286 = vmatpush1.msra.mxu0 0.0
      %287 = vmatprep.subr.mxu0 0.0
      %288 = vmatpush1.msra.mxu0 0.0
      %289 = vmatprep.subr.mxu0 0.0
      %290 = vmatpush1.msra.mxu0 0.0
      %291 = vmatprep.subr.mxu0 0.0
      %292 = vmatpush1.msra.mxu0 0.0
      %293 = vmatprep.subr.mxu0 0.0
      %294 = vmatpush1.msra.mxu0 0.0
      %295 = vmatprep.subr.mxu0 0.0
      %296 = vmatpush1.msra.mxu0 0.0
      %297 = vmatprep.subr.mxu0 0.0
      %298 = vmatpush1.msra.mxu0 0.0
      %299 = vmatprep.subr.mxu0 0.0
      %300 = vmatpush1.msra.mxu0 0.0
      %301 = vmatprep.subr.mxu0 0.0
      %302 = vmatpush1.msra.mxu0 0.0
      %303 = vmatprep.subr.mxu0 0.0
      %304 = vmatpush1.msra.mxu0 0.0
      %305 = vmatprep.subr.mxu0 0.0
      %306 = vmatpush1.msra.mxu0 0.0
      %307 = vmatprep.subr.mxu0 0.0
      %308 = vmatpush1.msra.mxu0 0.0
      %309 = vmatprep.subr.mxu0 0.0
      %310 = vmatpush1.msra.mxu0 %v277
      %311 = vmatprep.subr.mxu0 0.0
      %312 = vmatpush2.msra.mxu0 0.0
      %313 = vmatprep.subr.mxu0 0.0
      %314 = vmatpush2.msra.mxu0 0.0
      %315 = vmatprep.subr.mxu0 0.0
      %316 = vmatpush2.msra.mxu0 0.0
      %317 = vmatprep.subr.mxu0 0.0
      %318 = vmatpush2.msra.mxu0 0.0
      %319 = vmatprep.subr.mxu0 0.0
      %320 = vmatpush2.msra.mxu0 0.0
      %321 = vmatprep.subr.mxu0 0.0
      %322 = vmatpush2.msra.mxu0 0.0
      %323 = vmatprep.subr.mxu0 0.0
      %324 = vmatpush2.msra.mxu0 0.0
      %325 = vmatprep.subr.mxu0 0.0
      %326 = vmatpush2.msra.mxu0 0.0
      %327 = vmatprep.subr.mxu0 0.0
      %328 = vmatpush2.msra.mxu0 0.0
      %329 = vmatprep.subr.mxu0 0.0
      %330 = vmatpush2.msra.mxu0 0.0
      %331 = vmatprep.subr.mxu0 0.0
      %332 = vmatpush2.msra.mxu0 0.0
      %333 = vmatprep.subr.mxu0 0.0
      %334 = vmatpush2.msra.mxu0 0.0
      %335 = vmatprep.subr.mxu0 0.0
      %336 = vmatpush2.msra.mxu0 0.0
      %337 = vmatprep.subr.mxu0 0.0
      %338 = vmatpush2.msra.mxu0 0.0
      %339 = vmatprep.subr.mxu0 0.0
      %340 = vmatpush2.msra.mxu0 0.0
      %341 = vmatprep.subr.mxu0 0.0
      %342 = vmatpush2.msra.mxu0 0.0
      %343 = vmatprep.mubr.f32.mxu0 0.0
      %344 = vmatmul.mubr.f32.gmra.mxu0 %v252
      %v345 = vpop.f32.mrf.mxu0
      %v346 = vadd.f32 0.0, %v345
      %v347 = vpop.f32.mrf.mxu0
      %348 = vmatprep.mubr.f32.mxu0 0.0
      %349 = vmatmul.mubr.f32.gmra.mxu0 %v255
      %v350 = vpop.f32.mrf.mxu0
      %v351 = vadd.f32 0.0, %v350
      %v352 = vpop.f32.mrf.mxu0
      %353 = vmatprep.mubr.f32.mxu0 0.0
      %354 = vmatmul.mubr.f32.gmra.mxu0 %v258
      %v355 = vpop.f32.mrf.mxu0
      %v356 = vadd.f32 0.0, %v355
      %v357 = vpop.f32.mrf.mxu0
      %358 = vmatprep.mubr.f32.mxu0 0.0
      %359 = vmatmul.mubr.f32.gmra.mxu0 %v261
      %v360 = vpop.f32.mrf.mxu0
      %v361 = vadd.f32 0.0, %v360
      %v362 = vpop.f32.mrf.mxu0
      %363 = vmatprep.mubr.f32.mxu0 0.0
      %364 = vmatmul.mubr.f32.gmra.mxu0 %v264
      %v365 = vpop.f32.mrf.mxu0
      %v366 = vadd.f32 0.0, %v365
      %v367 = vpop.f32.mrf.mxu0
      %368 = vmatprep.mubr.f32.mxu0 0.0
      %369 = vmatmul.mubr.f32.gmra.mxu0 %v267
      %v370 = vpop.f32.mrf.mxu0
      %v371 = vadd.f32 0.0, %v370
      %v372 = vpop.f32.mrf.mxu0
      %373 = vmatprep.mubr.f32.mxu0 0.0
      %374 = vmatmul.mubr.f32.gmra.mxu0 %v270
      %v375 = vpop.f32.mrf.mxu0
      %v376 = vadd.f32 0.0, %v375
      %v377 = vpop.f32.mrf.mxu0
      %378 = vmatprep.mubr.f32.mxu0 0.0
      %379 = vmatmul.mubr.f32.gmra.mxu0 %v273
      %v380 = vpop.f32.mrf.mxu0
      %v381 = vadd.f32 0.0, %v380
      %v382 = vpop.f32.mrf.mxu0
      %383 = vdwg.mxu0
      %v385 = vsel %vm250, %v171, 0
      %v388 = vsel %vm250, %v173, 0
      %v391 = vsel %vm250, %v175, 0
      %v394 = vsel %vm250, %v177, 0
      %v397 = vsel %vm250, %v179, 0
      %v400 = vsel %vm250, %v181, 0
      %v403 = vsel %vm250, %v183, 0
      %v406 = vsel %vm250, %v185, 0
      %v409 = vsel %vm275, %v247, 0
      %411 = vmatprep.subr.mxu0 0.0
      %412 = vmatpush1.msra.mxu0 0.0
      %413 = vmatprep.subr.mxu0 0.0
      %414 = vmatpush1.msra.mxu0 0.0
      %415 = vmatprep.subr.mxu0 0.0
      %416 = vmatpush1.msra.mxu0 0.0
      %417 = vmatprep.subr.mxu0 0.0
      %418 = vmatpush1.msra.mxu0 0.0
      %419 = vmatprep.subr.mxu0 0.0
      %420 = vmatpush1.msra.mxu0 0.0
      %421 = vmatprep.subr.mxu0 0.0
      %422 = vmatpush1.msra.mxu0 0.0
      %423 = vmatprep.subr.mxu0 0.0
      %424 = vmatpush1.msra.mxu0 0.0
      %425 = vmatprep.subr.mxu0 0.0
      %426 = vmatpush1.msra.mxu0 0.0
      %427 = vmatprep.subr.mxu0 0.0
      %428 = vmatpush1.msra.mxu0 0.0
      %429 = vmatprep.subr.mxu0 0.0
      %430 = vmatpush1.msra.mxu0 0.0
      %431 = vmatprep.subr.mxu0 0.0
      %432 = vmatpush1.msra.mxu0 0.0
      %433 = vmatprep.subr.mxu0 0.0
      %434 = vmatpush1.msra.mxu0 0.0
      %435 = vmatprep.subr.mxu0 0.0
      %436 = vmatpush1.msra.mxu0 0.0
      %437 = vmatprep.subr.mxu0 0.0
      %438 = vmatpush1.msra.mxu0 0.0
      %439 = vmatprep.subr.mxu0 0.0
      %440 = vmatpush1.msra.mxu0 0.0
      %441 = vmatprep.subr.mxu0 0.0
      %442 = vmatpush1.msra.mxu0 %v409
      %443 = vmatprep.subr.mxu0 0.0
      %444 = vmatpush2.msra.mxu0 0.0
      %445 = vmatprep.subr.mxu0 0.0
      %446 = vmatpush2.msra.mxu0 0.0
      %447 = vmatprep.subr.mxu0 0.0
      %448 = vmatpush2.msra.mxu0 0.0
      %449 = vmatprep.subr.mxu0 0.0
      %450 = vmatpush2.msra.mxu0 0.0
      %451 = vmatprep.subr.mxu0 0.0
      %452 = vmatpush2.msra.mxu0 0.0
      %453 = vmatprep.subr.mxu0 0.0
      %454 = vmatpush2.msra.mxu0 0.0
      %455 = vmatprep.subr.mxu0 0.0
      %456 = vmatpush2.msra.mxu0 0.0
      %457 = vmatprep.subr.mxu0 0.0
      %458 = vmatpush2.msra.mxu0 0.0
      %459 = vmatprep.subr.mxu0 0.0
      %460 = vmatpush2.msra.mxu0 0.0
      %461 = vmatprep.subr.mxu0 0.0
      %462 = vmatpush2.msra.mxu0 0.0
      %463 = vmatprep.subr.mxu0 0.0
      %464 = vmatpush2.msra.mxu0 0.0
      %465 = vmatprep.subr.mxu0 0.0
      %466 = vmatpush2.msra.mxu0 0.0
      %467 = vmatprep.subr.mxu0 0.0
      %468 = vmatpush2.msra.mxu0 0.0
      %469 = vmatprep.subr.mxu0 0.0
      %470 = vmatpush2.msra.mxu0 0.0
      %471 = vmatprep.subr.mxu0 0.0
      %472 = vmatpush2.msra.mxu0 0.0
      %473 = vmatprep.subr.mxu0 0.0
      %474 = vmatpush2.msra.mxu0 0.0
      %475 = vmatprep.mubr.f32.mxu0 0.0
      %476 = vmatmul.mubr.f32.gmra.mxu0 %v385
      %v477 = vpop.f32.mrf.mxu0
      %v478 = vadd.f32 %v346, %v477
      %v479 = vpop.f32.mrf.mxu0
      %480 = vmatprep.mubr.f32.mxu0 0.0
      %481 = vmatmul.mubr.f32.gmra.mxu0 %v388
      %v482 = vpop.f32.mrf.mxu0
      %v483 = vadd.f32 %v351, %v482
      %v484 = vpop.f32.mrf.mxu0
      %485 = vmatprep.mubr.f32.mxu0 0.0
      %486 = vmatmul.mubr.f32.gmra.mxu0 %v391
      %v487 = vpop.f32.mrf.mxu0
      %v488 = vadd.f32 %v356, %v487
      %v489 = vpop.f32.mrf.mxu0
      %490 = vmatprep.mubr.f32.mxu0 0.0
      %491 = vmatmul.mubr.f32.gmra.mxu0 %v394
      %v492 = vpop.f32.mrf.mxu0
      %v493 = vadd.f32 %v361, %v492
      %v494 = vpop.f32.mrf.mxu0
      %495 = vmatprep.mubr.f32.mxu0 0.0
      %496 = vmatmul.mubr.f32.gmra.mxu0 %v397
      %v497 = vpop.f32.mrf.mxu0
      %v498 = vadd.f32 %v366, %v497
      %v499 = vpop.f32.mrf.mxu0
      %500 = vmatprep.mubr.f32.mxu0 0.0
      %501 = vmatmul.mubr.f32.gmra.mxu0 %v400
      %v502 = vpop.f32.mrf.mxu0
      %v503 = vadd.f32 %v371, %v502
      %v504 = vpop.f32.mrf.mxu0
      %505 = vmatprep.mubr.f32.mxu0 0.0
      %506 = vmatmul.mubr.f32.gmra.mxu0 %v403
      %v507 = vpop.f32.mrf.mxu0
      %v508 = vadd.f32 %v376, %v507
      %v509 = vpop.f32.mrf.mxu0
      %510 = vmatprep.mubr.f32.mxu0 0.0
      %511 = vmatmul.mubr.f32.gmra.mxu0 %v406
      %v512 = vpop.f32.mrf.mxu0
      %v513 = vadd.f32 %v381, %v512
      %v514 = vpop.f32.mrf.mxu0
      %515 = vdwg.mxu0
      %vm524 = vcmask 1046528
      %v525 = vrot.slane %v171, 1
      %v526 = vrot.slane %v172, 1
      %v527 = vsel %vm524, %v525, %v526
      %v528 = vrot.slane %v173, 1
      %v529 = vrot.slane %v174, 1
      %v530 = vsel %vm524, %v528, %v529
      %v531 = vrot.slane %v175, 1
      %v532 = vrot.slane %v176, 1
      %v533 = vsel %vm524, %v531, %v532
      %v534 = vrot.slane %v177, 1
      %v535 = vrot.slane %v178, 1
      %v536 = vsel %vm524, %v534, %v535
      %v537 = vrot.slane %v179, 1
      %v538 = vrot.slane %v180, 1
      %v539 = vsel %vm524, %v537, %v538
      %v540 = vrot.slane %v181, 1
      %v541 = vrot.slane %v182, 1
      %v542 = vsel %vm524, %v540, %v541
      %v543 = vrot.slane %v183, 1
      %v544 = vrot.slane %v184, 1
      %v545 = vsel %vm524, %v543, %v544
      %v546 = vrot.slane %v185, 1
      %v547 = vrot.slane %v186, 1
      %v548 = vsel %vm524, %v546, %v547
      %s549 = scalar_lea.vmem %s1, 8
      %v550 = vld [vmem:[%s549] sm:$0xf]
      %v551 = vsel %vm250, %v527, 0
      %v553 = vsel %vm250, %v530, 0
      %v555 = vsel %vm250, %v533, 0
      %v557 = vsel %vm250, %v536, 0
      %v559 = vsel %vm250, %v539, 0
      %v561 = vsel %vm250, %v542, 0
      %v563 = vsel %vm250, %v545, 0
      %v565 = vsel %vm250, %v548, 0
      %v568 = vsel %vm275, %v550, 0
      %570 = vmatprep.subr.mxu0 0.0
      %571 = vmatpush1.msra.mxu0 0.0
      %572 = vmatprep.subr.mxu0 0.0
      %573 = vmatpush1.msra.mxu0 0.0
      %574 = vmatprep.subr.mxu0 0.0
      %575 = vmatpush1.msra.mxu0 0.0
      %576 = vmatprep.subr.mxu0 0.0
      %577 = vmatpush1.msra.mxu0 0.0
      %578 = vmatprep.subr.mxu0 0.0
      %579 = vmatpush1.msra.mxu0 0.0
      %580 = vmatprep.subr.mxu0 0.0
      %581 = vmatpush1.msra.mxu0 0.0
      %582 = vmatprep.subr.mxu0 0.0
      %583 = vmatpush1.msra.mxu0 0.0
      %584 = vmatprep.subr.mxu0 0.0
      %585 = vmatpush1.msra.mxu0 0.0
      %586 = vmatprep.subr.mxu0 0.0
      %587 = vmatpush1.msra.mxu0 0.0
      %588 = vmatprep.subr.mxu0 0.0
      %589 = vmatpush1.msra.mxu0 0.0
      %590 = vmatprep.subr.mxu0 0.0
      %591 = vmatpush1.msra.mxu0 0.0
      %592 = vmatprep.subr.mxu0 0.0
      %593 = vmatpush1.msra.mxu0 0.0
      %594 = vmatprep.subr.mxu0 0.0
      %595 = vmatpush1.msra.mxu0 0.0
      %596 = vmatprep.subr.mxu0 0.0
      %597 = vmatpush1.msra.mxu0 0.0
      %598 = vmatprep.subr.mxu0 0.0
      %599 = vmatpush1.msra.mxu0 0.0
      %600 = vmatprep.subr.mxu0 0.0
      %601 = vmatpush1.msra.mxu0 %v568
      %602 = vmatprep.subr.mxu0 0.0
      %603 = vmatpush2.msra.mxu0 0.0
      %604 = vmatprep.subr.mxu0 0.0
      %605 = vmatpush2.msra.mxu0 0.0
      %606 = vmatprep.subr.mxu0 0.0
      %607 = vmatpush2.msra.mxu0 0.0
      %608 = vmatprep.subr.mxu0 0.0
      %609 = vmatpush2.msra.mxu0 0.0
      %610 = vmatprep.subr.mxu0 0.0
      %611 = vmatpush2.msra.mxu0 0.0
      %612 = vmatprep.subr.mxu0 0.0
      %613 = vmatpush2.msra.mxu0 0.0
      %614 = vmatprep.subr.mxu0 0.0
      %615 = vmatpush2.msra.mxu0 0.0
      %616 = vmatprep.subr.mxu0 0.0
      %617 = vmatpush2.msra.mxu0 0.0
      %618 = vmatprep.subr.mxu0 0.0
      %619 = vmatpush2.msra.mxu0 0.0
      %620 = vmatprep.subr.mxu0 0.0
      %621 = vmatpush2.msra.mxu0 0.0
      %622 = vmatprep.subr.mxu0 0.0
      %623 = vmatpush2.msra.mxu0 0.0
      %624 = vmatprep.subr.mxu0 0.0
      %625 = vmatpush2.msra.mxu0 0.0
      %626 = vmatprep.subr.mxu0 0.0
      %627 = vmatpush2.msra.mxu0 0.0
      %628 = vmatprep.subr.mxu0 0.0
      %629 = vmatpush2.msra.mxu0 0.0
      %630 = vmatprep.subr.mxu0 0.0
      %631 = vmatpush2.msra.mxu0 0.0
      %632 = vmatprep.subr.mxu0 0.0
      %633 = vmatpush2.msra.mxu0 0.0
      %634 = vmatprep.mubr.f32.mxu0 0.0
      %635 = vmatmul.mubr.f32.gmra.mxu0 %v551
      %v636 = vpop.f32.mrf.mxu0
      %v637 = vadd.f32 0.0, %v636
      %v638 = vpop.f32.mrf.mxu0
      %639 = vmatprep.mubr.f32.mxu0 0.0
      %640 = vmatmul.mubr.f32.gmra.mxu0 %v553
      %v641 = vpop.f32.mrf.mxu0
      %v642 = vadd.f32 0.0, %v641
      %v643 = vpop.f32.mrf.mxu0
      %644 = vmatprep.mubr.f32.mxu0 0.0
      %645 = vmatmul.mubr.f32.gmra.mxu0 %v555
      %v646 = vpop.f32.mrf.mxu0
      %v647 = vadd.f32 0.0, %v646
      %v648 = vpop.f32.mrf.mxu0
      %649 = vmatprep.mubr.f32.mxu0 0.0
      %650 = vmatmul.mubr.f32.gmra.mxu0 %v557
      %v651 = vpop.f32.mrf.mxu0
      %v652 = vadd.f32 0.0, %v651
      %v653 = vpop.f32.mrf.mxu0
      %654 = vmatprep.mubr.f32.mxu0 0.0
      %655 = vmatmul.mubr.f32.gmra.mxu0 %v559
      %v656 = vpop.f32.mrf.mxu0
      %v657 = vadd.f32 0.0, %v656
      %v658 = vpop.f32.mrf.mxu0
      %659 = vmatprep.mubr.f32.mxu0 0.0
      %660 = vmatmul.mubr.f32.gmra.mxu0 %v561
      %v661 = vpop.f32.mrf.mxu0
      %v662 = vadd.f32 0.0, %v661
      %v663 = vpop.f32.mrf.mxu0
      %664 = vmatprep.mubr.f32.mxu0 0.0
      %665 = vmatmul.mubr.f32.gmra.mxu0 %v563
      %v666 = vpop.f32.mrf.mxu0
      %v667 = vadd.f32 0.0, %v666
      %v668 = vpop.f32.mrf.mxu0
      %669 = vmatprep.mubr.f32.mxu0 0.0
      %670 = vmatmul.mubr.f32.gmra.mxu0 %v565
      %v671 = vpop.f32.mrf.mxu0
      %v672 = vadd.f32 0.0, %v671
      %v673 = vpop.f32.mrf.mxu0
      %674 = vdwg.mxu0
      %v675 = vadd.f32 %v478, %v637
      %v676 = vadd.f32 %v483, %v642
      %v677 = vadd.f32 %v488, %v647
      %v678 = vadd.f32 %v493, %v652
      %v679 = vadd.f32 %v498, %v657
      %v680 = vadd.f32 %v503, %v662
      %v681 = vadd.f32 %v508, %v667
      %v682 = vadd.f32 %v513, %v672
      %v691 = vrot.slane %v191, 1
      %v692 = vrot.slane %v192, 1
      %v693 = vsel %vm524, %v691, %v692
      %v694 = vrot.slane %v193, 1
      %v695 = vrot.slane %v194, 1
      %v696 = vsel %vm524, %v694, %v695
      %v697 = vrot.slane %v195, 1
      %v698 = vrot.slane %v196, 1
      %v699 = vsel %vm524, %v697, %v698
      %v700 = vrot.slane %v197, 1
      %v701 = vrot.slane %v198, 1
      %v702 = vsel %vm524, %v700, %v701
      %v703 = vrot.slane %v199, 1
      %v704 = vrot.slane %v200, 1
      %v705 = vsel %vm524, %v703, %v704
      %v706 = vrot.slane %v201, 1
      %v707 = vrot.slane %v202, 1
      %v708 = vsel %vm524, %v706, %v707
      %v709 = vrot.slane %v203, 1
      %v710 = vrot.slane %v204, 1
      %v711 = vsel %vm524, %v709, %v710
      %v712 = vrot.slane %v205, 1
      %v713 = vrot.slane %v206, 1
      %v714 = vsel %vm524, %v712, %v713
      %s715 = scalar_lea.vmem %s1, 12
      %v716 = vld [vmem:[%s715] sm:$0xf]
      %v717 = vsel %vm250, %v693, 0
      %v719 = vsel %vm250, %v696, 0
      %v721 = vsel %vm250, %v699, 0
      %v723 = vsel %vm250, %v702, 0
      %v725 = vsel %vm250, %v705, 0
      %v727 = vsel %vm250, %v708, 0
      %v729 = vsel %vm250, %v711, 0
      %v731 = vsel %vm250, %v714, 0
      %v734 = vsel %vm275, %v716, 0
      %736 = vmatprep.subr.mxu0 0.0
      %737 = vmatpush1.msra.mxu0 0.0
      %738 = vmatprep.subr.mxu0 0.0
      %739 = vmatpush1.msra.mxu0 0.0
      %740 = vmatprep.subr.mxu0 0.0
      %741 = vmatpush1.msra.mxu0 0.0
      %742 = vmatprep.subr.mxu0 0.0
      %743 = vmatpush1.msra.mxu0 0.0
      %744 = vmatprep.subr.mxu0 0.0
      %745 = vmatpush1.msra.mxu0 0.0
      %746 = vmatprep.subr.mxu0 0.0
      %747 = vmatpush1.msra.mxu0 0.0
      %748 = vmatprep.subr.mxu0 0.0
      %749 = vmatpush1.msra.mxu0 0.0
      %750 = vmatprep.subr.mxu0 0.0
      %751 = vmatpush1.msra.mxu0 0.0
      %752 = vmatprep.subr.mxu0 0.0
      %753 = vmatpush1.msra.mxu0 0.0
      %754 = vmatprep.subr.mxu0 0.0
      %755 = vmatpush1.msra.mxu0 0.0
      %756 = vmatprep.subr.mxu0 0.0
      %757 = vmatpush1.msra.mxu0 0.0
      %758 = vmatprep.subr.mxu0 0.0
      %759 = vmatpush1.msra.mxu0 0.0
      %760 = vmatprep.subr.mxu0 0.0
      %761 = vmatpush1.msra.mxu0 0.0
      %762 = vmatprep.subr.mxu0 0.0
      %763 = vmatpush1.msra.mxu0 0.0
      %764 = vmatprep.subr.mxu0 0.0
      %765 = vmatpush1.msra.mxu0 0.0
      %766 = vmatprep.subr.mxu0 0.0
      %767 = vmatpush1.msra.mxu0 %v734
      %768 = vmatprep.subr.mxu0 0.0
      %769 = vmatpush2.msra.mxu0 0.0
      %770 = vmatprep.subr.mxu0 0.0
      %771 = vmatpush2.msra.mxu0 0.0
      %772 = vmatprep.subr.mxu0 0.0
      %773 = vmatpush2.msra.mxu0 0.0
      %774 = vmatprep.subr.mxu0 0.0
      %775 = vmatpush2.msra.mxu0 0.0
      %776 = vmatprep.subr.mxu0 0.0
      %777 = vmatpush2.msra.mxu0 0.0
      %778 = vmatprep.subr.mxu0 0.0
      %779 = vmatpush2.msra.mxu0 0.0
      %780 = vmatprep.subr.mxu0 0.0
      %781 = vmatpush2.msra.mxu0 0.0
      %782 = vmatprep.subr.mxu0 0.0
      %783 = vmatpush2.msra.mxu0 0.0
      %784 = vmatprep.subr.mxu0 0.0
      %785 = vmatpush2.msra.mxu0 0.0
      %786 = vmatprep.subr.mxu0 0.0
      %787 = vmatpush2.msra.mxu0 0.0
      %788 = vmatprep.subr.mxu0 0.0
      %789 = vmatpush2.msra.mxu0 0.0
      %790 = vmatprep.subr.mxu0 0.0
      %791 = vmatpush2.msra.mxu0 0.0
      %792 = vmatprep.subr.mxu0 0.0
      %793 = vmatpush2.msra.mxu0 0.0
      %794 = vmatprep.subr.mxu0 0.0
      %795 = vmatpush2.msra.mxu0 0.0
      %796 = vmatprep.subr.mxu0 0.0
      %797 = vmatpush2.msra.mxu0 0.0
      %798 = vmatprep.subr.mxu0 0.0
      %799 = vmatpush2.msra.mxu0 0.0
      %800 = vmatprep.mubr.f32.mxu0 0.0
      %801 = vmatmul.mubr.f32.gmra.mxu0 %v717
      %v802 = vpop.f32.mrf.mxu0
      %v803 = vadd.f32 0.0, %v802
      %v804 = vpop.f32.mrf.mxu0
      %805 = vmatprep.mubr.f32.mxu0 0.0
      %806 = vmatmul.mubr.f32.gmra.mxu0 %v719
      %v807 = vpop.f32.mrf.mxu0
      %v808 = vadd.f32 0.0, %v807
      %v809 = vpop.f32.mrf.mxu0
      %810 = vmatprep.mubr.f32.mxu0 0.0
      %811 = vmatmul.mubr.f32.gmra.mxu0 %v721
      %v812 = vpop.f32.mrf.mxu0
      %v813 = vadd.f32 0.0, %v812
      %v814 = vpop.f32.mrf.mxu0
      %815 = vmatprep.mubr.f32.mxu0 0.0
      %816 = vmatmul.mubr.f32.gmra.mxu0 %v723
      %v817 = vpop.f32.mrf.mxu0
      %v818 = vadd.f32 0.0, %v817
      %v819 = vpop.f32.mrf.mxu0
      %820 = vmatprep.mubr.f32.mxu0 0.0
      %821 = vmatmul.mubr.f32.gmra.mxu0 %v725
      %v822 = vpop.f32.mrf.mxu0
      %v823 = vadd.f32 0.0, %v822
      %v824 = vpop.f32.mrf.mxu0
      %825 = vmatprep.mubr.f32.mxu0 0.0
      %826 = vmatmul.mubr.f32.gmra.mxu0 %v727
      %v827 = vpop.f32.mrf.mxu0
      %v828 = vadd.f32 0.0, %v827
      %v829 = vpop.f32.mrf.mxu0
      %830 = vmatprep.mubr.f32.mxu0 0.0
      %831 = vmatmul.mubr.f32.gmra.mxu0 %v729
      %v832 = vpop.f32.mrf.mxu0
      %v833 = vadd.f32 0.0, %v832
      %v834 = vpop.f32.mrf.mxu0
      %835 = vmatprep.mubr.f32.mxu0 0.0
      %836 = vmatmul.mubr.f32.gmra.mxu0 %v731
      %v837 = vpop.f32.mrf.mxu0
      %v838 = vadd.f32 0.0, %v837
      %v839 = vpop.f32.mrf.mxu0
      %840 = vdwg.mxu0
      %v841 = vadd.f32 %v675, %v803
      %v842 = vadd.f32 %v676, %v808
      %v843 = vadd.f32 %v677, %v813
      %v844 = vadd.f32 %v678, %v818
      %v845 = vadd.f32 %v679, %v823
      %v846 = vadd.f32 %v680, %v828
      %v847 = vadd.f32 %v681, %v833
      %v848 = vadd.f32 %v682, %v838
      %vm849 = vcmask 1045504
      %v850 = vrot.slane %v171, 2
      %v851 = vrot.slane %v172, 2
      %v852 = vsel %vm849, %v850, %v851
      %v853 = vrot.slane %v173, 2
      %v854 = vrot.slane %v174, 2
      %v855 = vsel %vm849, %v853, %v854
      %v856 = vrot.slane %v175, 2
      %v857 = vrot.slane %v176, 2
      %v858 = vsel %vm849, %v856, %v857
      %v859 = vrot.slane %v177, 2
      %v860 = vrot.slane %v178, 2
      %v861 = vsel %vm849, %v859, %v860
      %v862 = vrot.slane %v179, 2
      %v863 = vrot.slane %v180, 2
      %v864 = vsel %vm849, %v862, %v863
      %v865 = vrot.slane %v181, 2
      %v866 = vrot.slane %v182, 2
      %v867 = vsel %vm849, %v865, %v866
      %v868 = vrot.slane %v183, 2
      %v869 = vrot.slane %v184, 2
      %v870 = vsel %vm849, %v868, %v869
      %v871 = vrot.slane %v185, 2
      %v872 = vrot.slane %v186, 2
      %v873 = vsel %vm849, %v871, %v872
      %s874 = scalar_lea.vmem %s1, 16
      %v875 = vld [vmem:[%s874] sm:$0xf]
      %v876 = vsel %vm250, %v852, 0
      %v878 = vsel %vm250, %v855, 0
      %v880 = vsel %vm250, %v858, 0
      %v882 = vsel %vm250, %v861, 0
      %v884 = vsel %vm250, %v864, 0
      %v886 = vsel %vm250, %v867, 0
      %v888 = vsel %vm250, %v870, 0
      %v890 = vsel %vm250, %v873, 0
      %v893 = vsel %vm275, %v875, 0
      %895 = vmatprep.subr.mxu0 0.0
      %896 = vmatpush1.msra.mxu0 0.0
      %897 = vmatprep.subr.mxu0 0.0
      %898 = vmatpush1.msra.mxu0 0.0
      %899 = vmatprep.subr.mxu0 0.0
      %900 = vmatpush1.msra.mxu0 0.0
      %901 = vmatprep.subr.mxu0 0.0
      %902 = vmatpush1.msra.mxu0 0.0
      %903 = vmatprep.subr.mxu0 0.0
      %904 = vmatpush1.msra.mxu0 0.0
      %905 = vmatprep.subr.mxu0 0.0
      %906 = vmatpush1.msra.mxu0 0.0
      %907 = vmatprep.subr.mxu0 0.0
      %908 = vmatpush1.msra.mxu0 0.0
      %909 = vmatprep.subr.mxu0 0.0
      %910 = vmatpush1.msra.mxu0 0.0
      %911 = vmatprep.subr.mxu0 0.0
      %912 = vmatpush1.msra.mxu0 0.0
      %913 = vmatprep.subr.mxu0 0.0
      %914 = vmatpush1.msra.mxu0 0.0
      %915 = vmatprep.subr.mxu0 0.0
      %916 = vmatpush1.msra.mxu0 0.0
      %917 = vmatprep.subr.mxu0 0.0
      %918 = vmatpush1.msra.mxu0 0.0
      %919 = vmatprep.subr.mxu0 0.0
      %920 = vmatpush1.msra.mxu0 0.0
      %921 = vmatprep.subr.mxu0 0.0
      %922 = vmatpush1.msra.mxu0 0.0
      %923 = vmatprep.subr.mxu0 0.0
      %924 = vmatpush1.msra.mxu0 0.0
      %925 = vmatprep.subr.mxu0 0.0
      %926 = vmatpush1.msra.mxu0 %v893
      %927 = vmatprep.subr.mxu0 0.0
      %928 = vmatpush2.msra.mxu0 0.0
      %929 = vmatprep.subr.mxu0 0.0
      %930 = vmatpush2.msra.mxu0 0.0
      %931 = vmatprep.subr.mxu0 0.0
      %932 = vmatpush2.msra.mxu0 0.0
      %933 = vmatprep.subr.mxu0 0.0
      %934 = vmatpush2.msra.mxu0 0.0
      %935 = vmatprep.subr.mxu0 0.0
      %936 = vmatpush2.msra.mxu0 0.0
      %937 = vmatprep.subr.mxu0 0.0
      %938 = vmatpush2.msra.mxu0 0.0
      %939 = vmatprep.subr.mxu0 0.0
      %940 = vmatpush2.msra.mxu0 0.0
      %941 = vmatprep.subr.mxu0 0.0
      %942 = vmatpush2.msra.mxu0 0.0
      %943 = vmatprep.subr.mxu0 0.0
      %944 = vmatpush2.msra.mxu0 0.0
      %945 = vmatprep.subr.mxu0 0.0
      %946 = vmatpush2.msra.mxu0 0.0
      %947 = vmatprep.subr.mxu0 0.0
      %948 = vmatpush2.msra.mxu0 0.0
      %949 = vmatprep.subr.mxu0 0.0
      %950 = vmatpush2.msra.mxu0 0.0
      %951 = vmatprep.subr.mxu0 0.0
      %952 = vmatpush2.msra.mxu0 0.0
      %953 = vmatprep.subr.mxu0 0.0
      %954 = vmatpush2.msra.mxu0 0.0
      %955 = vmatprep.subr.mxu0 0.0
      %956 = vmatpush2.msra.mxu0 0.0
      %957 = vmatprep.subr.mxu0 0.0
      %958 = vmatpush2.msra.mxu0 0.0
      %959 = vmatprep.mubr.f32.mxu0 0.0
      %960 = vmatmul.mubr.f32.gmra.mxu0 %v876
      %v961 = vpop.f32.mrf.mxu0
      %v962 = vadd.f32 0.0, %v961
      %v963 = vpop.f32.mrf.mxu0
      %964 = vmatprep.mubr.f32.mxu0 0.0
      %965 = vmatmul.mubr.f32.gmra.mxu0 %v878
      %v966 = vpop.f32.mrf.mxu0
      %v967 = vadd.f32 0.0, %v966
      %v968 = vpop.f32.mrf.mxu0
      %969 = vmatprep.mubr.f32.mxu0 0.0
      %970 = vmatmul.mubr.f32.gmra.mxu0 %v880
      %v971 = vpop.f32.mrf.mxu0
      %v972 = vadd.f32 0.0, %v971
      %v973 = vpop.f32.mrf.mxu0
      %974 = vmatprep.mubr.f32.mxu0 0.0
      %975 = vmatmul.mubr.f32.gmra.mxu0 %v882
      %v976 = vpop.f32.mrf.mxu0
      %v977 = vadd.f32 0.0, %v976
      %v978 = vpop.f32.mrf.mxu0
      %979 = vmatprep.mubr.f32.mxu0 0.0
      %980 = vmatmul.mubr.f32.gmra.mxu0 %v884
      %v981 = vpop.f32.mrf.mxu0
      %v982 = vadd.f32 0.0, %v981
      %v983 = vpop.f32.mrf.mxu0
      %984 = vmatprep.mubr.f32.mxu0 0.0
      %985 = vmatmul.mubr.f32.gmra.mxu0 %v886
      %v986 = vpop.f32.mrf.mxu0
      %v987 = vadd.f32 0.0, %v986
      %v988 = vpop.f32.mrf.mxu0
      %989 = vmatprep.mubr.f32.mxu0 0.0
      %990 = vmatmul.mubr.f32.gmra.mxu0 %v888
      %v991 = vpop.f32.mrf.mxu0
      %v992 = vadd.f32 0.0, %v991
      %v993 = vpop.f32.mrf.mxu0
      %994 = vmatprep.mubr.f32.mxu0 0.0
      %995 = vmatmul.mubr.f32.gmra.mxu0 %v890
      %v996 = vpop.f32.mrf.mxu0
      %v997 = vadd.f32 0.0, %v996
      %v998 = vpop.f32.mrf.mxu0
      %999 = vdwg.mxu0
      %v1000 = vadd.f32 %v841, %v962
      %v1001 = vadd.f32 %v842, %v967
      %v1002 = vadd.f32 %v843, %v972
      %v1003 = vadd.f32 %v844, %v977
      %v1004 = vadd.f32 %v845, %v982
      %v1005 = vadd.f32 %v846, %v987
      %v1006 = vadd.f32 %v847, %v992
      %v1007 = vadd.f32 %v848, %v997
      %s1008 = scalar_lea.vmem %s1, 20
      %v1009 = vld [vmem:[%s1008] sm:$0xf]
      %v1011 = vsel %vm250, %v211, 0
      %v1014 = vsel %vm250, %v213, 0
      %v1017 = vsel %vm250, %v215, 0
      %v1020 = vsel %vm250, %v217, 0
      %v1023 = vsel %vm250, %v219, 0
      %v1026 = vsel %vm250, %v221, 0
      %v1029 = vsel %vm250, %v223, 0
      %v1032 = vsel %vm250, %v225, 0
      %v1035 = vsel %vm275, %v1009, 0
      %1037 = vmatprep.subr.mxu0 0.0
      %1038 = vmatpush1.msra.mxu0 0.0
      %1039 = vmatprep.subr.mxu0 0.0
      %1040 = vmatpush1.msra.mxu0 0.0
      %1041 = vmatprep.subr.mxu0 0.0
      %1042 = vmatpush1.msra.mxu0 0.0
      %1043 = vmatprep.subr.mxu0 0.0
      %1044 = vmatpush1.msra.mxu0 0.0
      %1045 = vmatprep.subr.mxu0 0.0
      %1046 = vmatpush1.msra.mxu0 0.0
      %1047 = vmatprep.subr.mxu0 0.0
      %1048 = vmatpush1.msra.mxu0 0.0
      %1049 = vmatprep.subr.mxu0 0.0
      %1050 = vmatpush1.msra.mxu0 0.0
      %1051 = vmatprep.subr.mxu0 0.0
      %1052 = vmatpush1.msra.mxu0 0.0
      %1053 = vmatprep.subr.mxu0 0.0
      %1054 = vmatpush1.msra.mxu0 0.0
      %1055 = vmatprep.subr.mxu0 0.0
      %1056 = vmatpush1.msra.mxu0 0.0
      %1057 = vmatprep.subr.mxu0 0.0
      %1058 = vmatpush1.msra.mxu0 0.0
      %1059 = vmatprep.subr.mxu0 0.0
      %1060 = vmatpush1.msra.mxu0 0.0
      %1061 = vmatprep.subr.mxu0 0.0
      %1062 = vmatpush1.msra.mxu0 0.0
      %1063 = vmatprep.subr.mxu0 0.0
      %1064 = vmatpush1.msra.mxu0 0.0
      %1065 = vmatprep.subr.mxu0 0.0
      %1066 = vmatpush1.msra.mxu0 0.0
      %1067 = vmatprep.subr.mxu0 0.0
      %1068 = vmatpush1.msra.mxu0 %v1035
      %1069 = vmatprep.subr.mxu0 0.0
      %1070 = vmatpush2.msra.mxu0 0.0
      %1071 = vmatprep.subr.mxu0 0.0
      %1072 = vmatpush2.msra.mxu0 0.0
      %1073 = vmatprep.subr.mxu0 0.0
      %1074 = vmatpush2.msra.mxu0 0.0
      %1075 = vmatprep.subr.mxu0 0.0
      %1076 = vmatpush2.msra.mxu0 0.0
      %1077 = vmatprep.subr.mxu0 0.0
      %1078 = vmatpush2.msra.mxu0 0.0
      %1079 = vmatprep.subr.mxu0 0.0
      %1080 = vmatpush2.msra.mxu0 0.0
      %1081 = vmatprep.subr.mxu0 0.0
      %1082 = vmatpush2.msra.mxu0 0.0
      %1083 = vmatprep.subr.mxu0 0.0
      %1084 = vmatpush2.msra.mxu0 0.0
      %1085 = vmatprep.subr.mxu0 0.0
      %1086 = vmatpush2.msra.mxu0 0.0
      %1087 = vmatprep.subr.mxu0 0.0
      %1088 = vmatpush2.msra.mxu0 0.0
      %1089 = vmatprep.subr.mxu0 0.0
      %1090 = vmatpush2.msra.mxu0 0.0
      %1091 = vmatprep.subr.mxu0 0.0
      %1092 = vmatpush2.msra.mxu0 0.0
      %1093 = vmatprep.subr.mxu0 0.0
      %1094 = vmatpush2.msra.mxu0 0.0
      %1095 = vmatprep.subr.mxu0 0.0
      %1096 = vmatpush2.msra.mxu0 0.0
      %1097 = vmatprep.subr.mxu0 0.0
      %1098 = vmatpush2.msra.mxu0 0.0
      %1099 = vmatprep.subr.mxu0 0.0
      %1100 = vmatpush2.msra.mxu0 0.0
      %1101 = vmatprep.mubr.f32.mxu0 0.0
      %1102 = vmatmul.mubr.f32.gmra.mxu0 %v1011
      %v1103 = vpop.f32.mrf.mxu0
      %v1104 = vadd.f32 0.0, %v1103
      %v1105 = vpop.f32.mrf.mxu0
      %1106 = vmatprep.mubr.f32.mxu0 0.0
      %1107 = vmatmul.mubr.f32.gmra.mxu0 %v1014
      %v1108 = vpop.f32.mrf.mxu0
      %v1109 = vadd.f32 0.0, %v1108
      %v1110 = vpop.f32.mrf.mxu0
      %1111 = vmatprep.mubr.f32.mxu0 0.0
      %1112 = vmatmul.mubr.f32.gmra.mxu0 %v1017
      %v1113 = vpop.f32.mrf.mxu0
      %v1114 = vadd.f32 0.0, %v1113
      %v1115 = vpop.f32.mrf.mxu0
      %1116 = vmatprep.mubr.f32.mxu0 0.0
      %1117 = vmatmul.mubr.f32.gmra.mxu0 %v1020
      %v1118 = vpop.f32.mrf.mxu0
      %v1119 = vadd.f32 0.0, %v1118
      %v1120 = vpop.f32.mrf.mxu0
      %1121 = vmatprep.mubr.f32.mxu0 0.0
      %1122 = vmatmul.mubr.f32.gmra.mxu0 %v1023
      %v1123 = vpop.f32.mrf.mxu0
      %v1124 = vadd.f32 0.0, %v1123
      %v1125 = vpop.f32.mrf.mxu0
      %1126 = vmatprep.mubr.f32.mxu0 0.0
      %1127 = vmatmul.mubr.f32.gmra.mxu0 %v1026
      %v1128 = vpop.f32.mrf.mxu0
      %v1129 = vadd.f32 0.0, %v1128
      %v1130 = vpop.f32.mrf.mxu0
      %1131 = vmatprep.mubr.f32.mxu0 0.0
      %1132 = vmatmul.mubr.f32.gmra.mxu0 %v1029
      %v1133 = vpop.f32.mrf.mxu0
      %v1134 = vadd.f32 0.0, %v1133
      %v1135 = vpop.f32.mrf.mxu0
      %1136 = vmatprep.mubr.f32.mxu0 0.0
      %1137 = vmatmul.mubr.f32.gmra.mxu0 %v1032
      %v1138 = vpop.f32.mrf.mxu0
      %v1139 = vadd.f32 0.0, %v1138
      %v1140 = vpop.f32.mrf.mxu0
      %1141 = vdwg.mxu0
      %v1142 = vadd.f32 %v1000, %v1104
      %v1143 = vadd.f32 %v1001, %v1109
      %v1144 = vadd.f32 %v1002, %v1114
      %v1145 = vadd.f32 %v1003, %v1119
      %v1146 = vadd.f32 %v1004, %v1124
      %v1147 = vadd.f32 %v1005, %v1129
      %v1148 = vadd.f32 %v1006, %v1134
      %v1149 = vadd.f32 %v1007, %v1139
      %s1150 = scalar_lea.vmem %s1, 24
      %v1151 = vld [vmem:[%s1150] sm:$0xf]
      %v1153 = vsel %vm250, %v229, 0
      %v1156 = vsel %vm250, %v231, 0
      %v1159 = vsel %vm250, %v233, 0
      %v1162 = vsel %vm250, %v235, 0
      %v1165 = vsel %vm250, %v237, 0
      %v1168 = vsel %vm250, %v239, 0
      %v1171 = vsel %vm250, %v241, 0
      %v1174 = vsel %vm250, %v243, 0
      %v1177 = vsel %vm275, %v1151, 0
      %1179 = vmatprep.subr.mxu0 0.0
      %1180 = vmatpush1.msra.mxu0 0.0
      %1181 = vmatprep.subr.mxu0 0.0
      %1182 = vmatpush1.msra.mxu0 0.0
      %1183 = vmatprep.subr.mxu0 0.0
      %1184 = vmatpush1.msra.mxu0 0.0
      %1185 = vmatprep.subr.mxu0 0.0
      %1186 = vmatpush1.msra.mxu0 0.0
      %1187 = vmatprep.subr.mxu0 0.0
      %1188 = vmatpush1.msra.mxu0 0.0
      %1189 = vmatprep.subr.mxu0 0.0
      %1190 = vmatpush1.msra.mxu0 0.0
      %1191 = vmatprep.subr.mxu0 0.0
      %1192 = vmatpush1.msra.mxu0 0.0
      %1193 = vmatprep.subr.mxu0 0.0
      %1194 = vmatpush1.msra.mxu0 0.0
      %1195 = vmatprep.subr.mxu0 0.0
      %1196 = vmatpush1.msra.mxu0 0.0
      %1197 = vmatprep.subr.mxu0 0.0
      %1198 = vmatpush1.msra.mxu0 0.0
      %1199 = vmatprep.subr.mxu0 0.0
      %1200 = vmatpush1.msra.mxu0 0.0
      %1201 = vmatprep.subr.mxu0 0.0
      %1202 = vmatpush1.msra.mxu0 0.0
      %1203 = vmatprep.subr.mxu0 0.0
      %1204 = vmatpush1.msra.mxu0 0.0
      %1205 = vmatprep.subr.mxu0 0.0
      %1206 = vmatpush1.msra.mxu0 0.0
      %1207 = vmatprep.subr.mxu0 0.0
      %1208 = vmatpush1.msra.mxu0 0.0
      %1209 = vmatprep.subr.mxu0 0.0
      %1210 = vmatpush1.msra.mxu0 %v1177
      %1211 = vmatprep.subr.mxu0 0.0
      %1212 = vmatpush2.msra.mxu0 0.0
      %1213 = vmatprep.subr.mxu0 0.0
      %1214 = vmatpush2.msra.mxu0 0.0
      %1215 = vmatprep.subr.mxu0 0.0
      %1216 = vmatpush2.msra.mxu0 0.0
      %1217 = vmatprep.subr.mxu0 0.0
      %1218 = vmatpush2.msra.mxu0 0.0
      %1219 = vmatprep.subr.mxu0 0.0
      %1220 = vmatpush2.msra.mxu0 0.0
      %1221 = vmatprep.subr.mxu0 0.0
      %1222 = vmatpush2.msra.mxu0 0.0
      %1223 = vmatprep.subr.mxu0 0.0
      %1224 = vmatpush2.msra.mxu0 0.0
      %1225 = vmatprep.subr.mxu0 0.0
      %1226 = vmatpush2.msra.mxu0 0.0
      %1227 = vmatprep.subr.mxu0 0.0
      %1228 = vmatpush2.msra.mxu0 0.0
      %1229 = vmatprep.subr.mxu0 0.0
      %1230 = vmatpush2.msra.mxu0 0.0
      %1231 = vmatprep.subr.mxu0 0.0
      %1232 = vmatpush2.msra.mxu0 0.0
      %1233 = vmatprep.subr.mxu0 0.0
      %1234 = vmatpush2.msra.mxu0 0.0
      %1235 = vmatprep.subr.mxu0 0.0
      %1236 = vmatpush2.msra.mxu0 0.0
      %1237 = vmatprep.subr.mxu0 0.0
      %1238 = vmatpush2.msra.mxu0 0.0
      %1239 = vmatprep.subr.mxu0 0.0
      %1240 = vmatpush2.msra.mxu0 0.0
      %1241 = vmatprep.subr.mxu0 0.0
      %1242 = vmatpush2.msra.mxu0 0.0
      %1243 = vmatprep.mubr.f32.mxu0 0.0
      %1244 = vmatmul.mubr.f32.gmra.mxu0 %v1153
      %v1245 = vpop.f32.mrf.mxu0
      %v1246 = vadd.f32 0.0, %v1245
      %v1247 = vpop.f32.mrf.mxu0
      %1248 = vmatprep.mubr.f32.mxu0 0.0
      %1249 = vmatmul.mubr.f32.gmra.mxu0 %v1156
      %v1250 = vpop.f32.mrf.mxu0
      %v1251 = vadd.f32 0.0, %v1250
      %v1252 = vpop.f32.mrf.mxu0
      %1253 = vmatprep.mubr.f32.mxu0 0.0
      %1254 = vmatmul.mubr.f32.gmra.mxu0 %v1159
      %v1255 = vpop.f32.mrf.mxu0
      %v1256 = vadd.f32 0.0, %v1255
      %v1257 = vpop.f32.mrf.mxu0
      %1258 = vmatprep.mubr.f32.mxu0 0.0
      %1259 = vmatmul.mubr.f32.gmra.mxu0 %v1162
      %v1260 = vpop.f32.mrf.mxu0
      %v1261 = vadd.f32 0.0, %v1260
      %v1262 = vpop.f32.mrf.mxu0
      %1263 = vmatprep.mubr.f32.mxu0 0.0
      %1264 = vmatmul.mubr.f32.gmra.mxu0 %v1165
      %v1265 = vpop.f32.mrf.mxu0
      %v1266 = vadd.f32 0.0, %v1265
      %v1267 = vpop.f32.mrf.mxu0
      %1268 = vmatprep.mubr.f32.mxu0 0.0
      %1269 = vmatmul.mubr.f32.gmra.mxu0 %v1168
      %v1270 = vpop.f32.mrf.mxu0
      %v1271 = vadd.f32 0.0, %v1270
      %v1272 = vpop.f32.mrf.mxu0
      %1273 = vmatprep.mubr.f32.mxu0 0.0
      %1274 = vmatmul.mubr.f32.gmra.mxu0 %v1171
      %v1275 = vpop.f32.mrf.mxu0
      %v1276 = vadd.f32 0.0, %v1275
      %v1277 = vpop.f32.mrf.mxu0
      %1278 = vmatprep.mubr.f32.mxu0 0.0
      %1279 = vmatmul.mubr.f32.gmra.mxu0 %v1174
      %v1280 = vpop.f32.mrf.mxu0
      %v1281 = vadd.f32 0.0, %v1280
      %v1282 = vpop.f32.mrf.mxu0
      %1283 = vdwg.mxu0
      %v1284 = vadd.f32 %v1142, %v1246
      %v1285 = vadd.f32 %v1143, %v1251
      %v1286 = vadd.f32 %v1144, %v1256
      %v1287 = vadd.f32 %v1145, %v1261
      %v1288 = vadd.f32 %v1146, %v1266
      %v1289 = vadd.f32 %v1147, %v1271
      %v1290 = vadd.f32 %v1148, %v1276
      %v1291 = vadd.f32 %v1149, %v1281
      %v1300 = vrot.slane %v211, 1
      %v1301 = vrot.slane %v212, 1
      %v1302 = vsel %vm524, %v1300, %v1301
      %v1303 = vrot.slane %v213, 1
      %v1304 = vrot.slane %v214, 1
      %v1305 = vsel %vm524, %v1303, %v1304
      %v1306 = vrot.slane %v215, 1
      %v1307 = vrot.slane %v216, 1
      %v1308 = vsel %vm524, %v1306, %v1307
      %v1309 = vrot.slane %v217, 1
      %v1310 = vrot.slane %v218, 1
      %v1311 = vsel %vm524, %v1309, %v1310
      %v1312 = vrot.slane %v219, 1
      %v1313 = vrot.slane %v220, 1
      %v1314 = vsel %vm524, %v1312, %v1313
      %v1315 = vrot.slane %v221, 1
      %v1316 = vrot.slane %v222, 1
      %v1317 = vsel %vm524, %v1315, %v1316
      %v1318 = vrot.slane %v223, 1
      %v1319 = vrot.slane %v224, 1
      %v1320 = vsel %vm524, %v1318, %v1319
      %v1321 = vrot.slane %v225, 1
      %v1322 = vrot.slane %v226, 1
      %v1323 = vsel %vm524, %v1321, %v1322
      %s1324 = scalar_lea.vmem %s1, 28
      %v1325 = vld [vmem:[%s1324] sm:$0xf]
      %v1326 = vsel %vm250, %v1302, 0
      %v1328 = vsel %vm250, %v1305, 0
      %v1330 = vsel %vm250, %v1308, 0
      %v1332 = vsel %vm250, %v1311, 0
      %v1334 = vsel %vm250, %v1314, 0
      %v1336 = vsel %vm250, %v1317, 0
      %v1338 = vsel %vm250, %v1320, 0
      %v1340 = vsel %vm250, %v1323, 0
      %v1343 = vsel %vm275, %v1325, 0
      %1345 = vmatprep.subr.mxu0 0.0
      %1346 = vmatpush1.msra.mxu0 0.0
      %1347 = vmatprep.subr.mxu0 0.0
      %1348 = vmatpush1.msra.mxu0 0.0
      %1349 = vmatprep.subr.mxu0 0.0
      %1350 = vmatpush1.msra.mxu0 0.0
      %1351 = vmatprep.subr.mxu0 0.0
      %1352 = vmatpush1.msra.mxu0 0.0
      %1353 = vmatprep.subr.mxu0 0.0
      %1354 = vmatpush1.msra.mxu0 0.0
      %1355 = vmatprep.subr.mxu0 0.0
      %1356 = vmatpush1.msra.mxu0 0.0
      %1357 = vmatprep.subr.mxu0 0.0
      %1358 = vmatpush1.msra.mxu0 0.0
      %1359 = vmatprep.subr.mxu0 0.0
      %1360 = vmatpush1.msra.mxu0 0.0
      %1361 = vmatprep.subr.mxu0 0.0
      %1362 = vmatpush1.msra.mxu0 0.0
      %1363 = vmatprep.subr.mxu0 0.0
      %1364 = vmatpush1.msra.mxu0 0.0
      %1365 = vmatprep.subr.mxu0 0.0
      %1366 = vmatpush1.msra.mxu0 0.0
      %1367 = vmatprep.subr.mxu0 0.0
      %1368 = vmatpush1.msra.mxu0 0.0
      %1369 = vmatprep.subr.mxu0 0.0
      %1370 = vmatpush1.msra.mxu0 0.0
      %1371 = vmatprep.subr.mxu0 0.0
      %1372 = vmatpush1.msra.mxu0 0.0
      %1373 = vmatprep.subr.mxu0 0.0
      %1374 = vmatpush1.msra.mxu0 0.0
      %1375 = vmatprep.subr.mxu0 0.0
      %1376 = vmatpush1.msra.mxu0 %v1343
      %1377 = vmatprep.subr.mxu0 0.0
      %1378 = vmatpush2.msra.mxu0 0.0
      %1379 = vmatprep.subr.mxu0 0.0
      %1380 = vmatpush2.msra.mxu0 0.0
      %1381 = vmatprep.subr.mxu0 0.0
      %1382 = vmatpush2.msra.mxu0 0.0
      %1383 = vmatprep.subr.mxu0 0.0
      %1384 = vmatpush2.msra.mxu0 0.0
      %1385 = vmatprep.subr.mxu0 0.0
      %1386 = vmatpush2.msra.mxu0 0.0
      %1387 = vmatprep.subr.mxu0 0.0
      %1388 = vmatpush2.msra.mxu0 0.0
      %1389 = vmatprep.subr.mxu0 0.0
      %1390 = vmatpush2.msra.mxu0 0.0
      %1391 = vmatprep.subr.mxu0 0.0
      %1392 = vmatpush2.msra.mxu0 0.0
      %1393 = vmatprep.subr.mxu0 0.0
      %1394 = vmatpush2.msra.mxu0 0.0
      %1395 = vmatprep.subr.mxu0 0.0
      %1396 = vmatpush2.msra.mxu0 0.0
      %1397 = vmatprep.subr.mxu0 0.0
      %1398 = vmatpush2.msra.mxu0 0.0
      %1399 = vmatprep.subr.mxu0 0.0
      %1400 = vmatpush2.msra.mxu0 0.0
      %1401 = vmatprep.subr.mxu0 0.0
      %1402 = vmatpush2.msra.mxu0 0.0
      %1403 = vmatprep.subr.mxu0 0.0
      %1404 = vmatpush2.msra.mxu0 0.0
      %1405 = vmatprep.subr.mxu0 0.0
      %1406 = vmatpush2.msra.mxu0 0.0
      %1407 = vmatprep.subr.mxu0 0.0
      %1408 = vmatpush2.msra.mxu0 0.0
      %1409 = vmatprep.mubr.f32.mxu0 0.0
      %1410 = vmatmul.mubr.f32.gmra.mxu0 %v1326
      %v1411 = vpop.f32.mrf.mxu0
      %v1412 = vadd.f32 0.0, %v1411
      %v1413 = vpop.f32.mrf.mxu0
      %1414 = vmatprep.mubr.f32.mxu0 0.0
      %1415 = vmatmul.mubr.f32.gmra.mxu0 %v1328
      %v1416 = vpop.f32.mrf.mxu0
      %v1417 = vadd.f32 0.0, %v1416
      %v1418 = vpop.f32.mrf.mxu0
      %1419 = vmatprep.mubr.f32.mxu0 0.0
      %1420 = vmatmul.mubr.f32.gmra.mxu0 %v1330
      %v1421 = vpop.f32.mrf.mxu0
      %v1422 = vadd.f32 0.0, %v1421
      %v1423 = vpop.f32.mrf.mxu0
      %1424 = vmatprep.mubr.f32.mxu0 0.0
      %1425 = vmatmul.mubr.f32.gmra.mxu0 %v1332
      %v1426 = vpop.f32.mrf.mxu0
      %v1427 = vadd.f32 0.0, %v1426
      %v1428 = vpop.f32.mrf.mxu0
      %1429 = vmatprep.mubr.f32.mxu0 0.0
      %1430 = vmatmul.mubr.f32.gmra.mxu0 %v1334
      %v1431 = vpop.f32.mrf.mxu0
      %v1432 = vadd.f32 0.0, %v1431
      %v1433 = vpop.f32.mrf.mxu0
      %1434 = vmatprep.mubr.f32.mxu0 0.0
      %1435 = vmatmul.mubr.f32.gmra.mxu0 %v1336
      %v1436 = vpop.f32.mrf.mxu0
      %v1437 = vadd.f32 0.0, %v1436
      %v1438 = vpop.f32.mrf.mxu0
      %1439 = vmatprep.mubr.f32.mxu0 0.0
      %1440 = vmatmul.mubr.f32.gmra.mxu0 %v1338
      %v1441 = vpop.f32.mrf.mxu0
      %v1442 = vadd.f32 0.0, %v1441
      %v1443 = vpop.f32.mrf.mxu0
      %1444 = vmatprep.mubr.f32.mxu0 0.0
      %1445 = vmatmul.mubr.f32.gmra.mxu0 %v1340
      %v1446 = vpop.f32.mrf.mxu0
      %v1447 = vadd.f32 0.0, %v1446
      %v1448 = vpop.f32.mrf.mxu0
      %1449 = vdwg.mxu0
      %v1450 = vadd.f32 %v1284, %v1412
      %v1451 = vadd.f32 %v1285, %v1417
      %v1452 = vadd.f32 %v1286, %v1422
      %v1453 = vadd.f32 %v1287, %v1427
      %v1454 = vadd.f32 %v1288, %v1432
      %v1455 = vadd.f32 %v1289, %v1437
      %v1456 = vadd.f32 %v1290, %v1442
      %v1457 = vadd.f32 %v1291, %v1447
      %v1466 = vrot.slane %v229, 1
      %v1467 = vrot.slane %v230, 1
      %v1468 = vsel %vm524, %v1466, %v1467
      %v1469 = vrot.slane %v231, 1
      %v1470 = vrot.slane %v232, 1
      %v1471 = vsel %vm524, %v1469, %v1470
      %v1472 = vrot.slane %v233, 1
      %v1473 = vrot.slane %v234, 1
      %v1474 = vsel %vm524, %v1472, %v1473
      %v1475 = vrot.slane %v235, 1
      %v1476 = vrot.slane %v236, 1
      %v1477 = vsel %vm524, %v1475, %v1476
      %v1478 = vrot.slane %v237, 1
      %v1479 = vrot.slane %v238, 1
      %v1480 = vsel %vm524, %v1478, %v1479
      %v1481 = vrot.slane %v239, 1
      %v1482 = vrot.slane %v240, 1
      %v1483 = vsel %vm524, %v1481, %v1482
      %v1484 = vrot.slane %v241, 1
      %v1485 = vrot.slane %v242, 1
      %v1486 = vsel %vm524, %v1484, %v1485
      %v1487 = vrot.slane %v243, 1
      %v1488 = vrot.slane %v244, 1
      %v1489 = vsel %vm524, %v1487, %v1488
      %s1490 = scalar_lea.vmem %s1, 32
      %v1491 = vld [vmem:[%s1490] sm:$0xf]
      %v1492 = vsel %vm250, %v1468, 0
      %v1494 = vsel %vm250, %v1471, 0
      %v1496 = vsel %vm250, %v1474, 0
      %v1498 = vsel %vm250, %v1477, 0
      %v1500 = vsel %vm250, %v1480, 0
      %v1502 = vsel %vm250, %v1483, 0
      %v1504 = vsel %vm250, %v1486, 0
      %v1506 = vsel %vm250, %v1489, 0
      %v1509 = vsel %vm275, %v1491, 0
      %1511 = vmatprep.subr.mxu0 0.0
      %1512 = vmatpush1.msra.mxu0 0.0
      %1513 = vmatprep.subr.mxu0 0.0
      %1514 = vmatpush1.msra.mxu0 0.0
      %1515 = vmatprep.subr.mxu0 0.0
      %1516 = vmatpush1.msra.mxu0 0.0
      %1517 = vmatprep.subr.mxu0 0.0
      %1518 = vmatpush1.msra.mxu0 0.0
      %1519 = vmatprep.subr.mxu0 0.0
      %1520 = vmatpush1.msra.mxu0 0.0
      %1521 = vmatprep.subr.mxu0 0.0
      %1522 = vmatpush1.msra.mxu0 0.0
      %1523 = vmatprep.subr.mxu0 0.0
      %1524 = vmatpush1.msra.mxu0 0.0
      %1525 = vmatprep.subr.mxu0 0.0
      %1526 = vmatpush1.msra.mxu0 0.0
      %1527 = vmatprep.subr.mxu0 0.0
      %1528 = vmatpush1.msra.mxu0 0.0
      %1529 = vmatprep.subr.mxu0 0.0
      %1530 = vmatpush1.msra.mxu0 0.0
      %1531 = vmatprep.subr.mxu0 0.0
      %1532 = vmatpush1.msra.mxu0 0.0
      %1533 = vmatprep.subr.mxu0 0.0
      %1534 = vmatpush1.msra.mxu0 0.0
      %1535 = vmatprep.subr.mxu0 0.0
      %1536 = vmatpush1.msra.mxu0 0.0
      %1537 = vmatprep.subr.mxu0 0.0
      %1538 = vmatpush1.msra.mxu0 0.0
      %1539 = vmatprep.subr.mxu0 0.0
      %1540 = vmatpush1.msra.mxu0 0.0
      %1541 = vmatprep.subr.mxu0 0.0
      %1542 = vmatpush1.msra.mxu0 %v1509
      %1543 = vmatprep.subr.mxu0 0.0
      %1544 = vmatpush2.msra.mxu0 0.0
      %1545 = vmatprep.subr.mxu0 0.0
      %1546 = vmatpush2.msra.mxu0 0.0
      %1547 = vmatprep.subr.mxu0 0.0
      %1548 = vmatpush2.msra.mxu0 0.0
      %1549 = vmatprep.subr.mxu0 0.0
      %1550 = vmatpush2.msra.mxu0 0.0
      %1551 = vmatprep.subr.mxu0 0.0
      %1552 = vmatpush2.msra.mxu0 0.0
      %1553 = vmatprep.subr.mxu0 0.0
      %1554 = vmatpush2.msra.mxu0 0.0
      %1555 = vmatprep.subr.mxu0 0.0
      %1556 = vmatpush2.msra.mxu0 0.0
      %1557 = vmatprep.subr.mxu0 0.0
      %1558 = vmatpush2.msra.mxu0 0.0
      %1559 = vmatprep.subr.mxu0 0.0
      %1560 = vmatpush2.msra.mxu0 0.0
      %1561 = vmatprep.subr.mxu0 0.0
      %1562 = vmatpush2.msra.mxu0 0.0
      %1563 = vmatprep.subr.mxu0 0.0
      %1564 = vmatpush2.msra.mxu0 0.0
      %1565 = vmatprep.subr.mxu0 0.0
      %1566 = vmatpush2.msra.mxu0 0.0
      %1567 = vmatprep.subr.mxu0 0.0
      %1568 = vmatpush2.msra.mxu0 0.0
      %1569 = vmatprep.subr.mxu0 0.0
      %1570 = vmatpush2.msra.mxu0 0.0
      %1571 = vmatprep.subr.mxu0 0.0
      %1572 = vmatpush2.msra.mxu0 0.0
      %1573 = vmatprep.subr.mxu0 0.0
      %1574 = vmatpush2.msra.mxu0 0.0
      %1575 = vmatprep.mubr.f32.mxu0 0.0
      %1576 = vmatmul.mubr.f32.gmra.mxu0 %v1492
      %v1577 = vpop.f32.mrf.mxu0
      %v1578 = vadd.f32 0.0, %v1577
      %v1579 = vpop.f32.mrf.mxu0
      %1580 = vmatprep.mubr.f32.mxu0 0.0
      %1581 = vmatmul.mubr.f32.gmra.mxu0 %v1494
      %v1582 = vpop.f32.mrf.mxu0
      %v1583 = vadd.f32 0.0, %v1582
      %v1584 = vpop.f32.mrf.mxu0
      %1585 = vmatprep.mubr.f32.mxu0 0.0
      %1586 = vmatmul.mubr.f32.gmra.mxu0 %v1496
      %v1587 = vpop.f32.mrf.mxu0
      %v1588 = vadd.f32 0.0, %v1587
      %v1589 = vpop.f32.mrf.mxu0
      %1590 = vmatprep.mubr.f32.mxu0 0.0
      %1591 = vmatmul.mubr.f32.gmra.mxu0 %v1498
      %v1592 = vpop.f32.mrf.mxu0
      %v1593 = vadd.f32 0.0, %v1592
      %v1594 = vpop.f32.mrf.mxu0
      %1595 = vmatprep.mubr.f32.mxu0 0.0
      %1596 = vmatmul.mubr.f32.gmra.mxu0 %v1500
      %v1597 = vpop.f32.mrf.mxu0
      %v1598 = vadd.f32 0.0, %v1597
      %v1599 = vpop.f32.mrf.mxu0
      %1600 = vmatprep.mubr.f32.mxu0 0.0
      %1601 = vmatmul.mubr.f32.gmra.mxu0 %v1502
      %v1602 = vpop.f32.mrf.mxu0
      %v1603 = vadd.f32 0.0, %v1602
      %v1604 = vpop.f32.mrf.mxu0
      %1605 = vmatprep.mubr.f32.mxu0 0.0
      %1606 = vmatmul.mubr.f32.gmra.mxu0 %v1504
      %v1607 = vpop.f32.mrf.mxu0
      %v1608 = vadd.f32 0.0, %v1607
      %v1609 = vpop.f32.mrf.mxu0
      %1610 = vmatprep.mubr.f32.mxu0 0.0
      %1611 = vmatmul.mubr.f32.gmra.mxu0 %v1506
      %v1612 = vpop.f32.mrf.mxu0
      %v1613 = vadd.f32 0.0, %v1612
      %v1614 = vpop.f32.mrf.mxu0
      %1615 = vdwg.mxu0
      %v1616 = vadd.f32 %v1450, %v1578
      %v1617 = vadd.f32 %v1451, %v1583
      %v1618 = vadd.f32 %v1452, %v1588
      %v1619 = vadd.f32 %v1453, %v1593
      %v1620 = vadd.f32 %v1454, %v1598
      %v1621 = vadd.f32 %v1455, %v1603
      %v1622 = vadd.f32 %v1456, %v1608
      %v1623 = vadd.f32 %v1457, %v1613
      %v1624 = vrot.slane %v211, 2
      %v1625 = vrot.slane %v212, 2
      %v1626 = vsel %vm849, %v1624, %v1625
      %v1627 = vrot.slane %v213, 2
      %v1628 = vrot.slane %v214, 2
      %v1629 = vsel %vm849, %v1627, %v1628
      %v1630 = vrot.slane %v215, 2
      %v1631 = vrot.slane %v216, 2
      %v1632 = vsel %vm849, %v1630, %v1631
      %v1633 = vrot.slane %v217, 2
      %v1634 = vrot.slane %v218, 2
      %v1635 = vsel %vm849, %v1633, %v1634
      %v1636 = vrot.slane %v219, 2
      %v1637 = vrot.slane %v220, 2
      %v1638 = vsel %vm849, %v1636, %v1637
      %v1639 = vrot.slane %v221, 2
      %v1640 = vrot.slane %v222, 2
      %v1641 = vsel %vm849, %v1639, %v1640
      %v1642 = vrot.slane %v223, 2
      %v1643 = vrot.slane %v224, 2
      %v1644 = vsel %vm849, %v1642, %v1643
      %v1645 = vrot.slane %v225, 2
      %v1646 = vrot.slane %v226, 2
      %v1647 = vsel %vm849, %v1645, %v1646
      %s1648 = scalar_lea.vmem %s1, 36
      %v1649 = vld [vmem:[%s1648] sm:$0xf]
      %v1650 = vsel %vm250, %v1626, 0
      %v1652 = vsel %vm250, %v1629, 0
      %v1654 = vsel %vm250, %v1632, 0
      %v1656 = vsel %vm250, %v1635, 0
      %v1658 = vsel %vm250, %v1638, 0
      %v1660 = vsel %vm250, %v1641, 0
      %v1662 = vsel %vm250, %v1644, 0
      %v1664 = vsel %vm250, %v1647, 0
      %v1667 = vsel %vm275, %v1649, 0
      %1669 = vmatprep.subr.mxu0 0.0
      %1670 = vmatpush1.msra.mxu0 0.0
      %1671 = vmatprep.subr.mxu0 0.0
      %1672 = vmatpush1.msra.mxu0 0.0
      %1673 = vmatprep.subr.mxu0 0.0
      %1674 = vmatpush1.msra.mxu0 0.0
      %1675 = vmatprep.subr.mxu0 0.0
      %1676 = vmatpush1.msra.mxu0 0.0
      %1677 = vmatprep.subr.mxu0 0.0
      %1678 = vmatpush1.msra.mxu0 0.0
      %1679 = vmatprep.subr.mxu0 0.0
      %1680 = vmatpush1.msra.mxu0 0.0
      %1681 = vmatprep.subr.mxu0 0.0
      %1682 = vmatpush1.msra.mxu0 0.0
      %1683 = vmatprep.subr.mxu0 0.0
      %1684 = vmatpush1.msra.mxu0 0.0
      %1685 = vmatprep.subr.mxu0 0.0
      %1686 = vmatpush1.msra.mxu0 0.0
      %1687 = vmatprep.subr.mxu0 0.0
      %1688 = vmatpush1.msra.mxu0 0.0
      %1689 = vmatprep.subr.mxu0 0.0
      %1690 = vmatpush1.msra.mxu0 0.0
      %1691 = vmatprep.subr.mxu0 0.0
      %1692 = vmatpush1.msra.mxu0 0.0
      %1693 = vmatprep.subr.mxu0 0.0
      %1694 = vmatpush1.msra.mxu0 0.0
      %1695 = vmatprep.subr.mxu0 0.0
      %1696 = vmatpush1.msra.mxu0 0.0
      %1697 = vmatprep.subr.mxu0 0.0
      %1698 = vmatpush1.msra.mxu0 0.0
      %1699 = vmatprep.subr.mxu0 0.0
      %1700 = vmatpush1.msra.mxu0 %v1667
      %1701 = vmatprep.subr.mxu0 0.0
      %1702 = vmatpush2.msra.mxu0 0.0
      %1703 = vmatprep.subr.mxu0 0.0
      %1704 = vmatpush2.msra.mxu0 0.0
      %1705 = vmatprep.subr.mxu0 0.0
      %1706 = vmatpush2.msra.mxu0 0.0
      %1707 = vmatprep.subr.mxu0 0.0
      %1708 = vmatpush2.msra.mxu0 0.0
      %1709 = vmatprep.subr.mxu0 0.0
      %1710 = vmatpush2.msra.mxu0 0.0
      %1711 = vmatprep.subr.mxu0 0.0
      %1712 = vmatpush2.msra.mxu0 0.0
      %1713 = vmatprep.subr.mxu0 0.0
      %1714 = vmatpush2.msra.mxu0 0.0
      %1715 = vmatprep.subr.mxu0 0.0
      %1716 = vmatpush2.msra.mxu0 0.0
      %1717 = vmatprep.subr.mxu0 0.0
      %1718 = vmatpush2.msra.mxu0 0.0
      %1719 = vmatprep.subr.mxu0 0.0
      %1720 = vmatpush2.msra.mxu0 0.0
      %1721 = vmatprep.subr.mxu0 0.0
      %1722 = vmatpush2.msra.mxu0 0.0
      %1723 = vmatprep.subr.mxu0 0.0
      %1724 = vmatpush2.msra.mxu0 0.0
      %1725 = vmatprep.subr.mxu0 0.0
      %1726 = vmatpush2.msra.mxu0 0.0
      %1727 = vmatprep.subr.mxu0 0.0
      %1728 = vmatpush2.msra.mxu0 0.0
      %1729 = vmatprep.subr.mxu0 0.0
      %1730 = vmatpush2.msra.mxu0 0.0
      %1731 = vmatprep.subr.mxu0 0.0
      %1732 = vmatpush2.msra.mxu0 0.0
      %1733 = vmatprep.mubr.f32.mxu0 0.0
      %1734 = vmatmul.mubr.f32.gmra.mxu0 %v1650
      %v1735 = vpop.f32.mrf.mxu0
      %v1736 = vadd.f32 0.0, %v1735
      %v1737 = vpop.f32.mrf.mxu0
      %1738 = vmatprep.mubr.f32.mxu0 0.0
      %1739 = vmatmul.mubr.f32.gmra.mxu0 %v1652
      %v1740 = vpop.f32.mrf.mxu0
      %v1741 = vadd.f32 0.0, %v1740
      %v1742 = vpop.f32.mrf.mxu0
      %1743 = vmatprep.mubr.f32.mxu0 0.0
      %1744 = vmatmul.mubr.f32.gmra.mxu0 %v1654
      %v1745 = vpop.f32.mrf.mxu0
      %v1746 = vadd.f32 0.0, %v1745
      %v1747 = vpop.f32.mrf.mxu0
      %1748 = vmatprep.mubr.f32.mxu0 0.0
      %1749 = vmatmul.mubr.f32.gmra.mxu0 %v1656
      %v1750 = vpop.f32.mrf.mxu0
      %v1751 = vadd.f32 0.0, %v1750
      %v1752 = vpop.f32.mrf.mxu0
      %1753 = vmatprep.mubr.f32.mxu0 0.0
      %1754 = vmatmul.mubr.f32.gmra.mxu0 %v1658
      %v1755 = vpop.f32.mrf.mxu0
      %v1756 = vadd.f32 0.0, %v1755
      %v1757 = vpop.f32.mrf.mxu0
      %1758 = vmatprep.mubr.f32.mxu0 0.0
      %1759 = vmatmul.mubr.f32.gmra.mxu0 %v1660
      %v1760 = vpop.f32.mrf.mxu0
      %v1761 = vadd.f32 0.0, %v1760
      %v1762 = vpop.f32.mrf.mxu0
      %1763 = vmatprep.mubr.f32.mxu0 0.0
      %1764 = vmatmul.mubr.f32.gmra.mxu0 %v1662
      %v1765 = vpop.f32.mrf.mxu0
      %v1766 = vadd.f32 0.0, %v1765
      %v1767 = vpop.f32.mrf.mxu0
      %1768 = vmatprep.mubr.f32.mxu0 0.0
      %1769 = vmatmul.mubr.f32.gmra.mxu0 %v1664
      %v1770 = vpop.f32.mrf.mxu0
      %v1771 = vadd.f32 0.0, %v1770
      %v1772 = vpop.f32.mrf.mxu0
      %1773 = vdwg.mxu0
      %v1774 = vadd.f32 %v1616, %v1736
      %v1775 = vadd.f32 %v1617, %v1741
      %v1776 = vadd.f32 %v1618, %v1746
      %v1777 = vadd.f32 %v1619, %v1751
      %v1778 = vadd.f32 %v1620, %v1756
      %v1779 = vadd.f32 %v1621, %v1761
      %v1780 = vadd.f32 %v1622, %v1766
      %v1781 = vadd.f32 %v1623, %v1771
      %s1782 = scalar_lea.vmem %s1, 40
      %v1783 = vld [vmem:[%s1782] sm:$0xf]
      %v1785 = vsel %vm250, %v187, 0
      %v1788 = vsel %vm275, %v1783, 0
      %1790 = vmatprep.subr.mxu0 0.0
      %1791 = vmatpush1.msra.mxu0 0.0
      %1792 = vmatprep.subr.mxu0 0.0
      %1793 = vmatpush1.msra.mxu0 0.0
      %1794 = vmatprep.subr.mxu0 0.0
      %1795 = vmatpush1.msra.mxu0 0.0
      %1796 = vmatprep.subr.mxu0 0.0
      %1797 = vmatpush1.msra.mxu0 0.0
      %1798 = vmatprep.subr.mxu0 0.0
      %1799 = vmatpush1.msra.mxu0 0.0
      %1800 = vmatprep.subr.mxu0 0.0
      %1801 = vmatpush1.msra.mxu0 0.0
      %1802 = vmatprep.subr.mxu0 0.0
      %1803 = vmatpush1.msra.mxu0 0.0
      %1804 = vmatprep.subr.mxu0 0.0
      %1805 = vmatpush1.msra.mxu0 0.0
      %1806 = vmatprep.subr.mxu0 0.0
      %1807 = vmatpush1.msra.mxu0 0.0
      %1808 = vmatprep.subr.mxu0 0.0
      %1809 = vmatpush1.msra.mxu0 0.0
      %1810 = vmatprep.subr.mxu0 0.0
      %1811 = vmatpush1.msra.mxu0 0.0
      %1812 = vmatprep.subr.mxu0 0.0
      %1813 = vmatpush1.msra.mxu0 0.0
      %1814 = vmatprep.subr.mxu0 0.0
      %1815 = vmatpush1.msra.mxu0 0.0
      %1816 = vmatprep.subr.mxu0 0.0
      %1817 = vmatpush1.msra.mxu0 0.0
      %1818 = vmatprep.subr.mxu0 0.0
      %1819 = vmatpush1.msra.mxu0 0.0
      %1820 = vmatprep.subr.mxu0 0.0
      %1821 = vmatpush1.msra.mxu0 %v1788
      %1822 = vmatprep.subr.mxu0 0.0
      %1823 = vmatpush2.msra.mxu0 0.0
      %1824 = vmatprep.subr.mxu0 0.0
      %1825 = vmatpush2.msra.mxu0 0.0
      %1826 = vmatprep.subr.mxu0 0.0
      %1827 = vmatpush2.msra.mxu0 0.0
      %1828 = vmatprep.subr.mxu0 0.0
      %1829 = vmatpush2.msra.mxu0 0.0
      %1830 = vmatprep.subr.mxu0 0.0
      %1831 = vmatpush2.msra.mxu0 0.0
      %1832 = vmatprep.subr.mxu0 0.0
      %1833 = vmatpush2.msra.mxu0 0.0
      %1834 = vmatprep.subr.mxu0 0.0
      %1835 = vmatpush2.msra.mxu0 0.0
      %1836 = vmatprep.subr.mxu0 0.0
      %1837 = vmatpush2.msra.mxu0 0.0
      %1838 = vmatprep.subr.mxu0 0.0
      %1839 = vmatpush2.msra.mxu0 0.0
      %1840 = vmatprep.subr.mxu0 0.0
      %1841 = vmatpush2.msra.mxu0 0.0
      %1842 = vmatprep.subr.mxu0 0.0
      %1843 = vmatpush2.msra.mxu0 0.0
      %1844 = vmatprep.subr.mxu0 0.0
      %1845 = vmatpush2.msra.mxu0 0.0
      %1846 = vmatprep.subr.mxu0 0.0
      %1847 = vmatpush2.msra.mxu0 0.0
      %1848 = vmatprep.subr.mxu0 0.0
      %1849 = vmatpush2.msra.mxu0 0.0
      %1850 = vmatprep.subr.mxu0 0.0
      %1851 = vmatpush2.msra.mxu0 0.0
      %1852 = vmatprep.subr.mxu0 0.0
      %1853 = vmatpush2.msra.mxu0 0.0
      %1854 = vmatprep.mubr.f32.mxu0 0.0
      %1855 = vmatmul.mubr.f32.gmra.mxu0 %v388
      %v1856 = vpop.f32.mrf.mxu0
      %v1857 = vadd.f32 0.0, %v1856
      %v1858 = vpop.f32.mrf.mxu0
      %1859 = vmatprep.mubr.f32.mxu0 0.0
      %1860 = vmatmul.mubr.f32.gmra.mxu0 %v391
      %v1861 = vpop.f32.mrf.mxu0
      %v1862 = vadd.f32 0.0, %v1861
      %v1863 = vpop.f32.mrf.mxu0
      %1864 = vmatprep.mubr.f32.mxu0 0.0
      %1865 = vmatmul.mubr.f32.gmra.mxu0 %v394
      %v1866 = vpop.f32.mrf.mxu0
      %v1867 = vadd.f32 0.0, %v1866
      %v1868 = vpop.f32.mrf.mxu0
      %1869 = vmatprep.mubr.f32.mxu0 0.0
      %1870 = vmatmul.mubr.f32.gmra.mxu0 %v397
      %v1871 = vpop.f32.mrf.mxu0
      %v1872 = vadd.f32 0.0, %v1871
      %v1873 = vpop.f32.mrf.mxu0
      %1874 = vmatprep.mubr.f32.mxu0 0.0
      %1875 = vmatmul.mubr.f32.gmra.mxu0 %v400
      %v1876 = vpop.f32.mrf.mxu0
      %v1877 = vadd.f32 0.0, %v1876
      %v1878 = vpop.f32.mrf.mxu0
      %1879 = vmatprep.mubr.f32.mxu0 0.0
      %1880 = vmatmul.mubr.f32.gmra.mxu0 %v403
      %v1881 = vpop.f32.mrf.mxu0
      %v1882 = vadd.f32 0.0, %v1881
      %v1883 = vpop.f32.mrf.mxu0
      %1884 = vmatprep.mubr.f32.mxu0 0.0
      %1885 = vmatmul.mubr.f32.gmra.mxu0 %v406
      %v1886 = vpop.f32.mrf.mxu0
      %v1887 = vadd.f32 0.0, %v1886
      %v1888 = vpop.f32.mrf.mxu0
      %1889 = vmatprep.mubr.f32.mxu0 0.0
      %1890 = vmatmul.mubr.f32.gmra.mxu0 %v1785
      %v1891 = vpop.f32.mrf.mxu0
      %v1892 = vadd.f32 0.0, %v1891
      %v1893 = vpop.f32.mrf.mxu0
      %1894 = vdwg.mxu0
      %v1895 = vadd.f32 %v1774, %v1857
      %v1896 = vadd.f32 %v1775, %v1862
      %v1897 = vadd.f32 %v1776, %v1867
      %v1898 = vadd.f32 %v1777, %v1872
      %v1899 = vadd.f32 %v1778, %v1877
      %v1900 = vadd.f32 %v1779, %v1882
      %v1901 = vadd.f32 %v1780, %v1887
      %v1902 = vadd.f32 %v1781, %v1892
      %s1903 = scalar_lea.vmem %s1, 44
      %v1904 = vld [vmem:[%s1903] sm:$0xf]
      %v1906 = vsel %vm250, %v207, 0
      %v1909 = vsel %vm275, %v1904, 0
      %1911 = vmatprep.subr.mxu0 0.0
      %1912 = vmatpush1.msra.mxu0 0.0
      %1913 = vmatprep.subr.mxu0 0.0
      %1914 = vmatpush1.msra.mxu0 0.0
      %1915 = vmatprep.subr.mxu0 0.0
      %1916 = vmatpush1.msra.mxu0 0.0
      %1917 = vmatprep.subr.mxu0 0.0
      %1918 = vmatpush1.msra.mxu0 0.0
      %1919 = vmatprep.subr.mxu0 0.0
      %1920 = vmatpush1.msra.mxu0 0.0
      %1921 = vmatprep.subr.mxu0 0.0
      %1922 = vmatpush1.msra.mxu0 0.0
      %1923 = vmatprep.subr.mxu0 0.0
      %1924 = vmatpush1.msra.mxu0 0.0
      %1925 = vmatprep.subr.mxu0 0.0
      %1926 = vmatpush1.msra.mxu0 0.0
      %1927 = vmatprep.subr.mxu0 0.0
      %1928 = vmatpush1.msra.mxu0 0.0
      %1929 = vmatprep.subr.mxu0 0.0
      %1930 = vmatpush1.msra.mxu0 0.0
      %1931 = vmatprep.subr.mxu0 0.0
      %1932 = vmatpush1.msra.mxu0 0.0
      %1933 = vmatprep.subr.mxu0 0.0
      %1934 = vmatpush1.msra.mxu0 0.0
      %1935 = vmatprep.subr.mxu0 0.0
      %1936 = vmatpush1.msra.mxu0 0.0
      %1937 = vmatprep.subr.mxu0 0.0
      %1938 = vmatpush1.msra.mxu0 0.0
      %1939 = vmatprep.subr.mxu0 0.0
      %1940 = vmatpush1.msra.mxu0 0.0
      %1941 = vmatprep.subr.mxu0 0.0
      %1942 = vmatpush1.msra.mxu0 %v1909
      %1943 = vmatprep.subr.mxu0 0.0
      %1944 = vmatpush2.msra.mxu0 0.0
      %1945 = vmatprep.subr.mxu0 0.0
      %1946 = vmatpush2.msra.mxu0 0.0
      %1947 = vmatprep.subr.mxu0 0.0
      %1948 = vmatpush2.msra.mxu0 0.0
      %1949 = vmatprep.subr.mxu0 0.0
      %1950 = vmatpush2.msra.mxu0 0.0
      %1951 = vmatprep.subr.mxu0 0.0
      %1952 = vmatpush2.msra.mxu0 0.0
      %1953 = vmatprep.subr.mxu0 0.0
      %1954 = vmatpush2.msra.mxu0 0.0
      %1955 = vmatprep.subr.mxu0 0.0
      %1956 = vmatpush2.msra.mxu0 0.0
      %1957 = vmatprep.subr.mxu0 0.0
      %1958 = vmatpush2.msra.mxu0 0.0
      %1959 = vmatprep.subr.mxu0 0.0
      %1960 = vmatpush2.msra.mxu0 0.0
      %1961 = vmatprep.subr.mxu0 0.0
      %1962 = vmatpush2.msra.mxu0 0.0
      %1963 = vmatprep.subr.mxu0 0.0
      %1964 = vmatpush2.msra.mxu0 0.0
      %1965 = vmatprep.subr.mxu0 0.0
      %1966 = vmatpush2.msra.mxu0 0.0
      %1967 = vmatprep.subr.mxu0 0.0
      %1968 = vmatpush2.msra.mxu0 0.0
      %1969 = vmatprep.subr.mxu0 0.0
      %1970 = vmatpush2.msra.mxu0 0.0
      %1971 = vmatprep.subr.mxu0 0.0
      %1972 = vmatpush2.msra.mxu0 0.0
      %1973 = vmatprep.subr.mxu0 0.0
      %1974 = vmatpush2.msra.mxu0 0.0
      %1975 = vmatprep.mubr.f32.mxu0 0.0
      %1976 = vmatmul.mubr.f32.gmra.mxu0 %v255
      %v1977 = vpop.f32.mrf.mxu0
      %v1978 = vadd.f32 0.0, %v1977
      %v1979 = vpop.f32.mrf.mxu0
      %1980 = vmatprep.mubr.f32.mxu0 0.0
      %1981 = vmatmul.mubr.f32.gmra.mxu0 %v258
      %v1982 = vpop.f32.mrf.mxu0
      %v1983 = vadd.f32 0.0, %v1982
      %v1984 = vpop.f32.mrf.mxu0
      %1985 = vmatprep.mubr.f32.mxu0 0.0
      %1986 = vmatmul.mubr.f32.gmra.mxu0 %v261
      %v1987 = vpop.f32.mrf.mxu0
      %v1988 = vadd.f32 0.0, %v1987
      %v1989 = vpop.f32.mrf.mxu0
      %1990 = vmatprep.mubr.f32.mxu0 0.0
      %1991 = vmatmul.mubr.f32.gmra.mxu0 %v264
      %v1992 = vpop.f32.mrf.mxu0
      %v1993 = vadd.f32 0.0, %v1992
      %v1994 = vpop.f32.mrf.mxu0
      %1995 = vmatprep.mubr.f32.mxu0 0.0
      %1996 = vmatmul.mubr.f32.gmra.mxu0 %v267
      %v1997 = vpop.f32.mrf.mxu0
      %v1998 = vadd.f32 0.0, %v1997
      %v1999 = vpop.f32.mrf.mxu0
      %2000 = vmatprep.mubr.f32.mxu0 0.0
      %2001 = vmatmul.mubr.f32.gmra.mxu0 %v270
      %v2002 = vpop.f32.mrf.mxu0
      %v2003 = vadd.f32 0.0, %v2002
      %v2004 = vpop.f32.mrf.mxu0
      %2005 = vmatprep.mubr.f32.mxu0 0.0
      %2006 = vmatmul.mubr.f32.gmra.mxu0 %v273
      %v2007 = vpop.f32.mrf.mxu0
      %v2008 = vadd.f32 0.0, %v2007
      %v2009 = vpop.f32.mrf.mxu0
      %2010 = vmatprep.mubr.f32.mxu0 0.0
      %2011 = vmatmul.mubr.f32.gmra.mxu0 %v1906
      %v2012 = vpop.f32.mrf.mxu0
      %v2013 = vadd.f32 0.0, %v2012
      %v2014 = vpop.f32.mrf.mxu0
      %2015 = vdwg.mxu0
      %v2016 = vadd.f32 %v1895, %v1978
      %v2017 = vadd.f32 %v1896, %v1983
      %v2018 = vadd.f32 %v1897, %v1988
      %v2019 = vadd.f32 %v1898, %v1993
      %v2020 = vadd.f32 %v1899, %v1998
      %v2021 = vadd.f32 %v1900, %v2003
      %v2022 = vadd.f32 %v1901, %v2008
      %v2023 = vadd.f32 %v1902, %v2013
      %v2025 = vrot.slane %v187, 1
      %v2026 = vrot.slane %v188, 1
      %v2027 = vsel %vm524, %v2025, %v2026
      %s2028 = scalar_lea.vmem %s1, 48
      %v2029 = vld [vmem:[%s2028] sm:$0xf]
      %v2030 = vsel %vm250, %v2027, 0
      %v2033 = vsel %vm275, %v2029, 0
      %2035 = vmatprep.subr.mxu0 0.0
      %2036 = vmatpush1.msra.mxu0 0.0
      %2037 = vmatprep.subr.mxu0 0.0
      %2038 = vmatpush1.msra.mxu0 0.0
      %2039 = vmatprep.subr.mxu0 0.0
      %2040 = vmatpush1.msra.mxu0 0.0
      %2041 = vmatprep.subr.mxu0 0.0
      %2042 = vmatpush1.msra.mxu0 0.0
      %2043 = vmatprep.subr.mxu0 0.0
      %2044 = vmatpush1.msra.mxu0 0.0
      %2045 = vmatprep.subr.mxu0 0.0
      %2046 = vmatpush1.msra.mxu0 0.0
      %2047 = vmatprep.subr.mxu0 0.0
      %2048 = vmatpush1.msra.mxu0 0.0
      %2049 = vmatprep.subr.mxu0 0.0
      %2050 = vmatpush1.msra.mxu0 0.0
      %2051 = vmatprep.subr.mxu0 0.0
      %2052 = vmatpush1.msra.mxu0 0.0
      %2053 = vmatprep.subr.mxu0 0.0
      %2054 = vmatpush1.msra.mxu0 0.0
      %2055 = vmatprep.subr.mxu0 0.0
      %2056 = vmatpush1.msra.mxu0 0.0
      %2057 = vmatprep.subr.mxu0 0.0
      %2058 = vmatpush1.msra.mxu0 0.0
      %2059 = vmatprep.subr.mxu0 0.0
      %2060 = vmatpush1.msra.mxu0 0.0
      %2061 = vmatprep.subr.mxu0 0.0
      %2062 = vmatpush1.msra.mxu0 0.0
      %2063 = vmatprep.subr.mxu0 0.0
      %2064 = vmatpush1.msra.mxu0 0.0
      %2065 = vmatprep.subr.mxu0 0.0
      %2066 = vmatpush1.msra.mxu0 %v2033
      %2067 = vmatprep.subr.mxu0 0.0
      %2068 = vmatpush2.msra.mxu0 0.0
      %2069 = vmatprep.subr.mxu0 0.0
      %2070 = vmatpush2.msra.mxu0 0.0
      %2071 = vmatprep.subr.mxu0 0.0
      %2072 = vmatpush2.msra.mxu0 0.0
      %2073 = vmatprep.subr.mxu0 0.0
      %2074 = vmatpush2.msra.mxu0 0.0
      %2075 = vmatprep.subr.mxu0 0.0
      %2076 = vmatpush2.msra.mxu0 0.0
      %2077 = vmatprep.subr.mxu0 0.0
      %2078 = vmatpush2.msra.mxu0 0.0
      %2079 = vmatprep.subr.mxu0 0.0
      %2080 = vmatpush2.msra.mxu0 0.0
      %2081 = vmatprep.subr.mxu0 0.0
      %2082 = vmatpush2.msra.mxu0 0.0
      %2083 = vmatprep.subr.mxu0 0.0
      %2084 = vmatpush2.msra.mxu0 0.0
      %2085 = vmatprep.subr.mxu0 0.0
      %2086 = vmatpush2.msra.mxu0 0.0
      %2087 = vmatprep.subr.mxu0 0.0
      %2088 = vmatpush2.msra.mxu0 0.0
      %2089 = vmatprep.subr.mxu0 0.0
      %2090 = vmatpush2.msra.mxu0 0.0
      %2091 = vmatprep.subr.mxu0 0.0
      %2092 = vmatpush2.msra.mxu0 0.0
      %2093 = vmatprep.subr.mxu0 0.0
      %2094 = vmatpush2.msra.mxu0 0.0
      %2095 = vmatprep.subr.mxu0 0.0
      %2096 = vmatpush2.msra.mxu0 0.0
      %2097 = vmatprep.subr.mxu0 0.0
      %2098 = vmatpush2.msra.mxu0 0.0
      %2099 = vmatprep.mubr.f32.mxu0 0.0
      %2100 = vmatmul.mubr.f32.gmra.mxu0 %v553
      %v2101 = vpop.f32.mrf.mxu0
      %v2102 = vadd.f32 0.0, %v2101
      %v2103 = vpop.f32.mrf.mxu0
      %2104 = vmatprep.mubr.f32.mxu0 0.0
      %2105 = vmatmul.mubr.f32.gmra.mxu0 %v555
      %v2106 = vpop.f32.mrf.mxu0
      %v2107 = vadd.f32 0.0, %v2106
      %v2108 = vpop.f32.mrf.mxu0
      %2109 = vmatprep.mubr.f32.mxu0 0.0
      %2110 = vmatmul.mubr.f32.gmra.mxu0 %v557
      %v2111 = vpop.f32.mrf.mxu0
      %v2112 = vadd.f32 0.0, %v2111
      %v2113 = vpop.f32.mrf.mxu0
      %2114 = vmatprep.mubr.f32.mxu0 0.0
      %2115 = vmatmul.mubr.f32.gmra.mxu0 %v559
      %v2116 = vpop.f32.mrf.mxu0
      %v2117 = vadd.f32 0.0, %v2116
      %v2118 = vpop.f32.mrf.mxu0
      %2119 = vmatprep.mubr.f32.mxu0 0.0
      %2120 = vmatmul.mubr.f32.gmra.mxu0 %v561
      %v2121 = vpop.f32.mrf.mxu0
      %v2122 = vadd.f32 0.0, %v2121
      %v2123 = vpop.f32.mrf.mxu0
      %2124 = vmatprep.mubr.f32.mxu0 0.0
      %2125 = vmatmul.mubr.f32.gmra.mxu0 %v563
      %v2126 = vpop.f32.mrf.mxu0
      %v2127 = vadd.f32 0.0, %v2126
      %v2128 = vpop.f32.mrf.mxu0
      %2129 = vmatprep.mubr.f32.mxu0 0.0
      %2130 = vmatmul.mubr.f32.gmra.mxu0 %v565
      %v2131 = vpop.f32.mrf.mxu0
      %v2132 = vadd.f32 0.0, %v2131
      %v2133 = vpop.f32.mrf.mxu0
      %2134 = vmatprep.mubr.f32.mxu0 0.0
      %2135 = vmatmul.mubr.f32.gmra.mxu0 %v2030
      %v2136 = vpop.f32.mrf.mxu0
      %v2137 = vadd.f32 0.0, %v2136
      %v2138 = vpop.f32.mrf.mxu0
      %2139 = vdwg.mxu0
      %v2140 = vadd.f32 %v2016, %v2102
      %v2141 = vadd.f32 %v2017, %v2107
      %v2142 = vadd.f32 %v2018, %v2112
      %v2143 = vadd.f32 %v2019, %v2117
      %v2144 = vadd.f32 %v2020, %v2122
      %v2145 = vadd.f32 %v2021, %v2127
      %v2146 = vadd.f32 %v2022, %v2132
      %v2147 = vadd.f32 %v2023, %v2137
      %v2149 = vrot.slane %v207, 1
      %v2150 = vrot.slane %v208, 1
      %v2151 = vsel %vm524, %v2149, %v2150
      %s2152 = scalar_lea.vmem %s1, 52
      %v2153 = vld [vmem:[%s2152] sm:$0xf]
      %v2154 = vsel %vm250, %v2151, 0
      %v2157 = vsel %vm275, %v2153, 0
      %2159 = vmatprep.subr.mxu0 0.0
      %2160 = vmatpush1.msra.mxu0 0.0
      %2161 = vmatprep.subr.mxu0 0.0
      %2162 = vmatpush1.msra.mxu0 0.0
      %2163 = vmatprep.subr.mxu0 0.0
      %2164 = vmatpush1.msra.mxu0 0.0
      %2165 = vmatprep.subr.mxu0 0.0
      %2166 = vmatpush1.msra.mxu0 0.0
      %2167 = vmatprep.subr.mxu0 0.0
      %2168 = vmatpush1.msra.mxu0 0.0
      %2169 = vmatprep.subr.mxu0 0.0
      %2170 = vmatpush1.msra.mxu0 0.0
      %2171 = vmatprep.subr.mxu0 0.0
      %2172 = vmatpush1.msra.mxu0 0.0
      %2173 = vmatprep.subr.mxu0 0.0
      %2174 = vmatpush1.msra.mxu0 0.0
      %2175 = vmatprep.subr.mxu0 0.0
      %2176 = vmatpush1.msra.mxu0 0.0
      %2177 = vmatprep.subr.mxu0 0.0
      %2178 = vmatpush1.msra.mxu0 0.0
      %2179 = vmatprep.subr.mxu0 0.0
      %2180 = vmatpush1.msra.mxu0 0.0
      %2181 = vmatprep.subr.mxu0 0.0
      %2182 = vmatpush1.msra.mxu0 0.0
      %2183 = vmatprep.subr.mxu0 0.0
      %2184 = vmatpush1.msra.mxu0 0.0
      %2185 = vmatprep.subr.mxu0 0.0
      %2186 = vmatpush1.msra.mxu0 0.0
      %2187 = vmatprep.subr.mxu0 0.0
      %2188 = vmatpush1.msra.mxu0 0.0
      %2189 = vmatprep.subr.mxu0 0.0
      %2190 = vmatpush1.msra.mxu0 %v2157
      %2191 = vmatprep.subr.mxu0 0.0
      %2192 = vmatpush2.msra.mxu0 0.0
      %2193 = vmatprep.subr.mxu0 0.0
      %2194 = vmatpush2.msra.mxu0 0.0
      %2195 = vmatprep.subr.mxu0 0.0
      %2196 = vmatpush2.msra.mxu0 0.0
      %2197 = vmatprep.subr.mxu0 0.0
      %2198 = vmatpush2.msra.mxu0 0.0
      %2199 = vmatprep.subr.mxu0 0.0
      %2200 = vmatpush2.msra.mxu0 0.0
      %2201 = vmatprep.subr.mxu0 0.0
      %2202 = vmatpush2.msra.mxu0 0.0
      %2203 = vmatprep.subr.mxu0 0.0
      %2204 = vmatpush2.msra.mxu0 0.0
      %2205 = vmatprep.subr.mxu0 0.0
      %2206 = vmatpush2.msra.mxu0 0.0
      %2207 = vmatprep.subr.mxu0 0.0
      %2208 = vmatpush2.msra.mxu0 0.0
      %2209 = vmatprep.subr.mxu0 0.0
      %2210 = vmatpush2.msra.mxu0 0.0
      %2211 = vmatprep.subr.mxu0 0.0
      %2212 = vmatpush2.msra.mxu0 0.0
      %2213 = vmatprep.subr.mxu0 0.0
      %2214 = vmatpush2.msra.mxu0 0.0
      %2215 = vmatprep.subr.mxu0 0.0
      %2216 = vmatpush2.msra.mxu0 0.0
      %2217 = vmatprep.subr.mxu0 0.0
      %2218 = vmatpush2.msra.mxu0 0.0
      %2219 = vmatprep.subr.mxu0 0.0
      %2220 = vmatpush2.msra.mxu0 0.0
      %2221 = vmatprep.subr.mxu0 0.0
      %2222 = vmatpush2.msra.mxu0 0.0
      %2223 = vmatprep.mubr.f32.mxu0 0.0
      %2224 = vmatmul.mubr.f32.gmra.mxu0 %v719
      %v2225 = vpop.f32.mrf.mxu0
      %v2226 = vadd.f32 0.0, %v2225
      %v2227 = vpop.f32.mrf.mxu0
      %2228 = vmatprep.mubr.f32.mxu0 0.0
      %2229 = vmatmul.mubr.f32.gmra.mxu0 %v721
      %v2230 = vpop.f32.mrf.mxu0
      %v2231 = vadd.f32 0.0, %v2230
      %v2232 = vpop.f32.mrf.mxu0
      %2233 = vmatprep.mubr.f32.mxu0 0.0
      %2234 = vmatmul.mubr.f32.gmra.mxu0 %v723
      %v2235 = vpop.f32.mrf.mxu0
      %v2236 = vadd.f32 0.0, %v2235
      %v2237 = vpop.f32.mrf.mxu0
      %2238 = vmatprep.mubr.f32.mxu0 0.0
      %2239 = vmatmul.mubr.f32.gmra.mxu0 %v725
      %v2240 = vpop.f32.mrf.mxu0
      %v2241 = vadd.f32 0.0, %v2240
      %v2242 = vpop.f32.mrf.mxu0
      %2243 = vmatprep.mubr.f32.mxu0 0.0
      %2244 = vmatmul.mubr.f32.gmra.mxu0 %v727
      %v2245 = vpop.f32.mrf.mxu0
      %v2246 = vadd.f32 0.0, %v2245
      %v2247 = vpop.f32.mrf.mxu0
      %2248 = vmatprep.mubr.f32.mxu0 0.0
      %2249 = vmatmul.mubr.f32.gmra.mxu0 %v729
      %v2250 = vpop.f32.mrf.mxu0
      %v2251 = vadd.f32 0.0, %v2250
      %v2252 = vpop.f32.mrf.mxu0
      %2253 = vmatprep.mubr.f32.mxu0 0.0
      %2254 = vmatmul.mubr.f32.gmra.mxu0 %v731
      %v2255 = vpop.f32.mrf.mxu0
      %v2256 = vadd.f32 0.0, %v2255
      %v2257 = vpop.f32.mrf.mxu0
      %2258 = vmatprep.mubr.f32.mxu0 0.0
      %2259 = vmatmul.mubr.f32.gmra.mxu0 %v2154
      %v2260 = vpop.f32.mrf.mxu0
      %v2261 = vadd.f32 0.0, %v2260
      %v2262 = vpop.f32.mrf.mxu0
      %2263 = vdwg.mxu0
      %v2264 = vadd.f32 %v2140, %v2226
      %v2265 = vadd.f32 %v2141, %v2231
      %v2266 = vadd.f32 %v2142, %v2236
      %v2267 = vadd.f32 %v2143, %v2241
      %v2268 = vadd.f32 %v2144, %v2246
      %v2269 = vadd.f32 %v2145, %v2251
      %v2270 = vadd.f32 %v2146, %v2256
      %v2271 = vadd.f32 %v2147, %v2261
      %v2272 = vrot.slane %v187, 2
      %v2273 = vrot.slane %v188, 2
      %v2274 = vsel %vm849, %v2272, %v2273
      %s2275 = scalar_lea.vmem %s1, 56
      %v2276 = vld [vmem:[%s2275] sm:$0xf]
      %v2277 = vsel %vm250, %v2274, 0
      %v2280 = vsel %vm275, %v2276, 0
      %2282 = vmatprep.subr.mxu0 0.0
      %2283 = vmatpush1.msra.mxu0 0.0
      %2284 = vmatprep.subr.mxu0 0.0
      %2285 = vmatpush1.msra.mxu0 0.0
      %2286 = vmatprep.subr.mxu0 0.0
      %2287 = vmatpush1.msra.mxu0 0.0
      %2288 = vmatprep.subr.mxu0 0.0
      %2289 = vmatpush1.msra.mxu0 0.0
      %2290 = vmatprep.subr.mxu0 0.0
      %2291 = vmatpush1.msra.mxu0 0.0
      %2292 = vmatprep.subr.mxu0 0.0
      %2293 = vmatpush1.msra.mxu0 0.0
      %2294 = vmatprep.subr.mxu0 0.0
      %2295 = vmatpush1.msra.mxu0 0.0
      %2296 = vmatprep.subr.mxu0 0.0
      %2297 = vmatpush1.msra.mxu0 0.0
      %2298 = vmatprep.subr.mxu0 0.0
      %2299 = vmatpush1.msra.mxu0 0.0
      %2300 = vmatprep.subr.mxu0 0.0
      %2301 = vmatpush1.msra.mxu0 0.0
      %2302 = vmatprep.subr.mxu0 0.0
      %2303 = vmatpush1.msra.mxu0 0.0
      %2304 = vmatprep.subr.mxu0 0.0
      %2305 = vmatpush1.msra.mxu0 0.0
      %2306 = vmatprep.subr.mxu0 0.0
      %2307 = vmatpush1.msra.mxu0 0.0
      %2308 = vmatprep.subr.mxu0 0.0
      %2309 = vmatpush1.msra.mxu0 0.0
      %2310 = vmatprep.subr.mxu0 0.0
      %2311 = vmatpush1.msra.mxu0 0.0
      %2312 = vmatprep.subr.mxu0 0.0
      %2313 = vmatpush1.msra.mxu0 %v2280
      %2314 = vmatprep.subr.mxu0 0.0
      %2315 = vmatpush2.msra.mxu0 0.0
      %2316 = vmatprep.subr.mxu0 0.0
      %2317 = vmatpush2.msra.mxu0 0.0
      %2318 = vmatprep.subr.mxu0 0.0
      %2319 = vmatpush2.msra.mxu0 0.0
      %2320 = vmatprep.subr.mxu0 0.0
      %2321 = vmatpush2.msra.mxu0 0.0
      %2322 = vmatprep.subr.mxu0 0.0
      %2323 = vmatpush2.msra.mxu0 0.0
      %2324 = vmatprep.subr.mxu0 0.0
      %2325 = vmatpush2.msra.mxu0 0.0
      %2326 = vmatprep.subr.mxu0 0.0
      %2327 = vmatpush2.msra.mxu0 0.0
      %2328 = vmatprep.subr.mxu0 0.0
      %2329 = vmatpush2.msra.mxu0 0.0
      %2330 = vmatprep.subr.mxu0 0.0
      %2331 = vmatpush2.msra.mxu0 0.0
      %2332 = vmatprep.subr.mxu0 0.0
      %2333 = vmatpush2.msra.mxu0 0.0
      %2334 = vmatprep.subr.mxu0 0.0
      %2335 = vmatpush2.msra.mxu0 0.0
      %2336 = vmatprep.subr.mxu0 0.0
      %2337 = vmatpush2.msra.mxu0 0.0
      %2338 = vmatprep.subr.mxu0 0.0
      %2339 = vmatpush2.msra.mxu0 0.0
      %2340 = vmatprep.subr.mxu0 0.0
      %2341 = vmatpush2.msra.mxu0 0.0
      %2342 = vmatprep.subr.mxu0 0.0
      %2343 = vmatpush2.msra.mxu0 0.0
      %2344 = vmatprep.subr.mxu0 0.0
      %2345 = vmatpush2.msra.mxu0 0.0
      %2346 = vmatprep.mubr.f32.mxu0 0.0
      %2347 = vmatmul.mubr.f32.gmra.mxu0 %v878
      %v2348 = vpop.f32.mrf.mxu0
      %v2349 = vadd.f32 0.0, %v2348
      %v2350 = vpop.f32.mrf.mxu0
      %2351 = vmatprep.mubr.f32.mxu0 0.0
      %2352 = vmatmul.mubr.f32.gmra.mxu0 %v880
      %v2353 = vpop.f32.mrf.mxu0
      %v2354 = vadd.f32 0.0, %v2353
      %v2355 = vpop.f32.mrf.mxu0
      %2356 = vmatprep.mubr.f32.mxu0 0.0
      %2357 = vmatmul.mubr.f32.gmra.mxu0 %v882
      %v2358 = vpop.f32.mrf.mxu0
      %v2359 = vadd.f32 0.0, %v2358
      %v2360 = vpop.f32.mrf.mxu0
      %2361 = vmatprep.mubr.f32.mxu0 0.0
      %2362 = vmatmul.mubr.f32.gmra.mxu0 %v884
      %v2363 = vpop.f32.mrf.mxu0
      %v2364 = vadd.f32 0.0, %v2363
      %v2365 = vpop.f32.mrf.mxu0
      %2366 = vmatprep.mubr.f32.mxu0 0.0
      %2367 = vmatmul.mubr.f32.gmra.mxu0 %v886
      %v2368 = vpop.f32.mrf.mxu0
      %v2369 = vadd.f32 0.0, %v2368
      %v2370 = vpop.f32.mrf.mxu0
      %2371 = vmatprep.mubr.f32.mxu0 0.0
      %2372 = vmatmul.mubr.f32.gmra.mxu0 %v888
      %v2373 = vpop.f32.mrf.mxu0
      %v2374 = vadd.f32 0.0, %v2373
      %v2375 = vpop.f32.mrf.mxu0
      %2376 = vmatprep.mubr.f32.mxu0 0.0
      %2377 = vmatmul.mubr.f32.gmra.mxu0 %v890
      %v2378 = vpop.f32.mrf.mxu0
      %v2379 = vadd.f32 0.0, %v2378
      %v2380 = vpop.f32.mrf.mxu0
      %2381 = vmatprep.mubr.f32.mxu0 0.0
      %2382 = vmatmul.mubr.f32.gmra.mxu0 %v2277
      %v2383 = vpop.f32.mrf.mxu0
      %v2384 = vadd.f32 0.0, %v2383
      %v2385 = vpop.f32.mrf.mxu0
      %2386 = vdwg.mxu0
      %v2387 = vadd.f32 %v2264, %v2349
      %v2388 = vadd.f32 %v2265, %v2354
      %v2389 = vadd.f32 %v2266, %v2359
      %v2390 = vadd.f32 %v2267, %v2364
      %v2391 = vadd.f32 %v2268, %v2369
      %v2392 = vadd.f32 %v2269, %v2374
      %v2393 = vadd.f32 %v2270, %v2379
      %v2394 = vadd.f32 %v2271, %v2384
      %s2395 = scalar_lea.vmem %s1, 60
      %v2396 = vld [vmem:[%s2395] sm:$0xf]
      %v2398 = vsel %vm250, %v227, 0
      %v2401 = vsel %vm275, %v2396, 0
      %2403 = vmatprep.subr.mxu0 0.0
      %2404 = vmatpush1.msra.mxu0 0.0
      %2405 = vmatprep.subr.mxu0 0.0
      %2406 = vmatpush1.msra.mxu0 0.0
      %2407 = vmatprep.subr.mxu0 0.0
      %2408 = vmatpush1.msra.mxu0 0.0
      %2409 = vmatprep.subr.mxu0 0.0
      %2410 = vmatpush1.msra.mxu0 0.0
      %2411 = vmatprep.subr.mxu0 0.0
      %2412 = vmatpush1.msra.mxu0 0.0
      %2413 = vmatprep.subr.mxu0 0.0
      %2414 = vmatpush1.msra.mxu0 0.0
      %2415 = vmatprep.subr.mxu0 0.0
      %2416 = vmatpush1.msra.mxu0 0.0
      %2417 = vmatprep.subr.mxu0 0.0
      %2418 = vmatpush1.msra.mxu0 0.0
      %2419 = vmatprep.subr.mxu0 0.0
      %2420 = vmatpush1.msra.mxu0 0.0
      %2421 = vmatprep.subr.mxu0 0.0
      %2422 = vmatpush1.msra.mxu0 0.0
      %2423 = vmatprep.subr.mxu0 0.0
      %2424 = vmatpush1.msra.mxu0 0.0
      %2425 = vmatprep.subr.mxu0 0.0
      %2426 = vmatpush1.msra.mxu0 0.0
      %2427 = vmatprep.subr.mxu0 0.0
      %2428 = vmatpush1.msra.mxu0 0.0
      %2429 = vmatprep.subr.mxu0 0.0
      %2430 = vmatpush1.msra.mxu0 0.0
      %2431 = vmatprep.subr.mxu0 0.0
      %2432 = vmatpush1.msra.mxu0 0.0
      %2433 = vmatprep.subr.mxu0 0.0
      %2434 = vmatpush1.msra.mxu0 %v2401
      %2435 = vmatprep.subr.mxu0 0.0
      %2436 = vmatpush2.msra.mxu0 0.0
      %2437 = vmatprep.subr.mxu0 0.0
      %2438 = vmatpush2.msra.mxu0 0.0
      %2439 = vmatprep.subr.mxu0 0.0
      %2440 = vmatpush2.msra.mxu0 0.0
      %2441 = vmatprep.subr.mxu0 0.0
      %2442 = vmatpush2.msra.mxu0 0.0
      %2443 = vmatprep.subr.mxu0 0.0
      %2444 = vmatpush2.msra.mxu0 0.0
      %2445 = vmatprep.subr.mxu0 0.0
      %2446 = vmatpush2.msra.mxu0 0.0
      %2447 = vmatprep.subr.mxu0 0.0
      %2448 = vmatpush2.msra.mxu0 0.0
      %2449 = vmatprep.subr.mxu0 0.0
      %2450 = vmatpush2.msra.mxu0 0.0
      %2451 = vmatprep.subr.mxu0 0.0
      %2452 = vmatpush2.msra.mxu0 0.0
      %2453 = vmatprep.subr.mxu0 0.0
      %2454 = vmatpush2.msra.mxu0 0.0
      %2455 = vmatprep.subr.mxu0 0.0
      %2456 = vmatpush2.msra.mxu0 0.0
      %2457 = vmatprep.subr.mxu0 0.0
      %2458 = vmatpush2.msra.mxu0 0.0
      %2459 = vmatprep.subr.mxu0 0.0
      %2460 = vmatpush2.msra.mxu0 0.0
      %2461 = vmatprep.subr.mxu0 0.0
      %2462 = vmatpush2.msra.mxu0 0.0
      %2463 = vmatprep.subr.mxu0 0.0
      %2464 = vmatpush2.msra.mxu0 0.0
      %2465 = vmatprep.subr.mxu0 0.0
      %2466 = vmatpush2.msra.mxu0 0.0
      %2467 = vmatprep.mubr.f32.mxu0 0.0
      %2468 = vmatmul.mubr.f32.gmra.mxu0 %v1014
      %v2469 = vpop.f32.mrf.mxu0
      %v2470 = vadd.f32 0.0, %v2469
      %v2471 = vpop.f32.mrf.mxu0
      %2472 = vmatprep.mubr.f32.mxu0 0.0
      %2473 = vmatmul.mubr.f32.gmra.mxu0 %v1017
      %v2474 = vpop.f32.mrf.mxu0
      %v2475 = vadd.f32 0.0, %v2474
      %v2476 = vpop.f32.mrf.mxu0
      %2477 = vmatprep.mubr.f32.mxu0 0.0
      %2478 = vmatmul.mubr.f32.gmra.mxu0 %v1020
      %v2479 = vpop.f32.mrf.mxu0
      %v2480 = vadd.f32 0.0, %v2479
      %v2481 = vpop.f32.mrf.mxu0
      %2482 = vmatprep.mubr.f32.mxu0 0.0
      %2483 = vmatmul.mubr.f32.gmra.mxu0 %v1023
      %v2484 = vpop.f32.mrf.mxu0
      %v2485 = vadd.f32 0.0, %v2484
      %v2486 = vpop.f32.mrf.mxu0
      %2487 = vmatprep.mubr.f32.mxu0 0.0
      %2488 = vmatmul.mubr.f32.gmra.mxu0 %v1026
      %v2489 = vpop.f32.mrf.mxu0
      %v2490 = vadd.f32 0.0, %v2489
      %v2491 = vpop.f32.mrf.mxu0
      %2492 = vmatprep.mubr.f32.mxu0 0.0
      %2493 = vmatmul.mubr.f32.gmra.mxu0 %v1029
      %v2494 = vpop.f32.mrf.mxu0
      %v2495 = vadd.f32 0.0, %v2494
      %v2496 = vpop.f32.mrf.mxu0
      %2497 = vmatprep.mubr.f32.mxu0 0.0
      %2498 = vmatmul.mubr.f32.gmra.mxu0 %v1032
      %v2499 = vpop.f32.mrf.mxu0
      %v2500 = vadd.f32 0.0, %v2499
      %v2501 = vpop.f32.mrf.mxu0
      %2502 = vmatprep.mubr.f32.mxu0 0.0
      %2503 = vmatmul.mubr.f32.gmra.mxu0 %v2398
      %v2504 = vpop.f32.mrf.mxu0
      %v2505 = vadd.f32 0.0, %v2504
      %v2506 = vpop.f32.mrf.mxu0
      %2507 = vdwg.mxu0
      %v2508 = vadd.f32 %v2387, %v2470
      %v2509 = vadd.f32 %v2388, %v2475
      %v2510 = vadd.f32 %v2389, %v2480
      %v2511 = vadd.f32 %v2390, %v2485
      %v2512 = vadd.f32 %v2391, %v2490
      %v2513 = vadd.f32 %v2392, %v2495
      %v2514 = vadd.f32 %v2393, %v2500
      %v2515 = vadd.f32 %v2394, %v2505
      %s2516 = scalar_lea.vmem %s1, 64
      %v2517 = vld [vmem:[%s2516] sm:$0xf]
      %v2519 = vsel %vm250, %v245, 0
      %v2522 = vsel %vm275, %v2517, 0
      %2524 = vmatprep.subr.mxu0 0.0
      %2525 = vmatpush1.msra.mxu0 0.0
      %2526 = vmatprep.subr.mxu0 0.0
      %2527 = vmatpush1.msra.mxu0 0.0
      %2528 = vmatprep.subr.mxu0 0.0
      %2529 = vmatpush1.msra.mxu0 0.0
      %2530 = vmatprep.subr.mxu0 0.0
      %2531 = vmatpush1.msra.mxu0 0.0
      %2532 = vmatprep.subr.mxu0 0.0
      %2533 = vmatpush1.msra.mxu0 0.0
      %2534 = vmatprep.subr.mxu0 0.0
      %2535 = vmatpush1.msra.mxu0 0.0
      %2536 = vmatprep.subr.mxu0 0.0
      %2537 = vmatpush1.msra.mxu0 0.0
      %2538 = vmatprep.subr.mxu0 0.0
      %2539 = vmatpush1.msra.mxu0 0.0
      %2540 = vmatprep.subr.mxu0 0.0
      %2541 = vmatpush1.msra.mxu0 0.0
      %2542 = vmatprep.subr.mxu0 0.0
      %2543 = vmatpush1.msra.mxu0 0.0
      %2544 = vmatprep.subr.mxu0 0.0
      %2545 = vmatpush1.msra.mxu0 0.0
      %2546 = vmatprep.subr.mxu0 0.0
      %2547 = vmatpush1.msra.mxu0 0.0
      %2548 = vmatprep.subr.mxu0 0.0
      %2549 = vmatpush1.msra.mxu0 0.0
      %2550 = vmatprep.subr.mxu0 0.0
      %2551 = vmatpush1.msra.mxu0 0.0
      %2552 = vmatprep.subr.mxu0 0.0
      %2553 = vmatpush1.msra.mxu0 0.0
      %2554 = vmatprep.subr.mxu0 0.0
      %2555 = vmatpush1.msra.mxu0 %v2522
      %2556 = vmatprep.subr.mxu0 0.0
      %2557 = vmatpush2.msra.mxu0 0.0
      %2558 = vmatprep.subr.mxu0 0.0
      %2559 = vmatpush2.msra.mxu0 0.0
      %2560 = vmatprep.subr.mxu0 0.0
      %2561 = vmatpush2.msra.mxu0 0.0
      %2562 = vmatprep.subr.mxu0 0.0
      %2563 = vmatpush2.msra.mxu0 0.0
      %2564 = vmatprep.subr.mxu0 0.0
      %2565 = vmatpush2.msra.mxu0 0.0
      %2566 = vmatprep.subr.mxu0 0.0
      %2567 = vmatpush2.msra.mxu0 0.0
      %2568 = vmatprep.subr.mxu0 0.0
      %2569 = vmatpush2.msra.mxu0 0.0
      %2570 = vmatprep.subr.mxu0 0.0
      %2571 = vmatpush2.msra.mxu0 0.0
      %2572 = vmatprep.subr.mxu0 0.0
      %2573 = vmatpush2.msra.mxu0 0.0
      %2574 = vmatprep.subr.mxu0 0.0
      %2575 = vmatpush2.msra.mxu0 0.0
      %2576 = vmatprep.subr.mxu0 0.0
      %2577 = vmatpush2.msra.mxu0 0.0
      %2578 = vmatprep.subr.mxu0 0.0
      %2579 = vmatpush2.msra.mxu0 0.0
      %2580 = vmatprep.subr.mxu0 0.0
      %2581 = vmatpush2.msra.mxu0 0.0
      %2582 = vmatprep.subr.mxu0 0.0
      %2583 = vmatpush2.msra.mxu0 0.0
      %2584 = vmatprep.subr.mxu0 0.0
      %2585 = vmatpush2.msra.mxu0 0.0
      %2586 = vmatprep.subr.mxu0 0.0
      %2587 = vmatpush2.msra.mxu0 0.0
      %2588 = vmatprep.mubr.f32.mxu0 0.0
      %2589 = vmatmul.mubr.f32.gmra.mxu0 %v1156
      %v2590 = vpop.f32.mrf.mxu0
      %v2591 = vadd.f32 0.0, %v2590
      %v2592 = vpop.f32.mrf.mxu0
      %2593 = vmatprep.mubr.f32.mxu0 0.0
      %2594 = vmatmul.mubr.f32.gmra.mxu0 %v1159
      %v2595 = vpop.f32.mrf.mxu0
      %v2596 = vadd.f32 0.0, %v2595
      %v2597 = vpop.f32.mrf.mxu0
      %2598 = vmatprep.mubr.f32.mxu0 0.0
      %2599 = vmatmul.mubr.f32.gmra.mxu0 %v1162
      %v2600 = vpop.f32.mrf.mxu0
      %v2601 = vadd.f32 0.0, %v2600
      %v2602 = vpop.f32.mrf.mxu0
      %2603 = vmatprep.mubr.f32.mxu0 0.0
      %2604 = vmatmul.mubr.f32.gmra.mxu0 %v1165
      %v2605 = vpop.f32.mrf.mxu0
      %v2606 = vadd.f32 0.0, %v2605
      %v2607 = vpop.f32.mrf.mxu0
      %2608 = vmatprep.mubr.f32.mxu0 0.0
      %2609 = vmatmul.mubr.f32.gmra.mxu0 %v1168
      %v2610 = vpop.f32.mrf.mxu0
      %v2611 = vadd.f32 0.0, %v2610
      %v2612 = vpop.f32.mrf.mxu0
      %2613 = vmatprep.mubr.f32.mxu0 0.0
      %2614 = vmatmul.mubr.f32.gmra.mxu0 %v1171
      %v2615 = vpop.f32.mrf.mxu0
      %v2616 = vadd.f32 0.0, %v2615
      %v2617 = vpop.f32.mrf.mxu0
      %2618 = vmatprep.mubr.f32.mxu0 0.0
      %2619 = vmatmul.mubr.f32.gmra.mxu0 %v1174
      %v2620 = vpop.f32.mrf.mxu0
      %v2621 = vadd.f32 0.0, %v2620
      %v2622 = vpop.f32.mrf.mxu0
      %2623 = vmatprep.mubr.f32.mxu0 0.0
      %2624 = vmatmul.mubr.f32.gmra.mxu0 %v2519
      %v2625 = vpop.f32.mrf.mxu0
      %v2626 = vadd.f32 0.0, %v2625
      %v2627 = vpop.f32.mrf.mxu0
      %2628 = vdwg.mxu0
      %v2629 = vadd.f32 %v2508, %v2591
      %v2630 = vadd.f32 %v2509, %v2596
      %v2631 = vadd.f32 %v2510, %v2601
      %v2632 = vadd.f32 %v2511, %v2606
      %v2633 = vadd.f32 %v2512, %v2611
      %v2634 = vadd.f32 %v2513, %v2616
      %v2635 = vadd.f32 %v2514, %v2621
      %v2636 = vadd.f32 %v2515, %v2626
      %v2638 = vrot.slane %v227, 1
      %v2639 = vrot.slane %v228, 1
      %v2640 = vsel %vm524, %v2638, %v2639
      %s2641 = scalar_lea.vmem %s1, 68
      %v2642 = vld [vmem:[%s2641] sm:$0xf]
      %v2643 = vsel %vm250, %v2640, 0
      %v2646 = vsel %vm275, %v2642, 0
      %2648 = vmatprep.subr.mxu0 0.0
      %2649 = vmatpush1.msra.mxu0 0.0
      %2650 = vmatprep.subr.mxu0 0.0
      %2651 = vmatpush1.msra.mxu0 0.0
      %2652 = vmatprep.subr.mxu0 0.0
      %2653 = vmatpush1.msra.mxu0 0.0
      %2654 = vmatprep.subr.mxu0 0.0
      %2655 = vmatpush1.msra.mxu0 0.0
      %2656 = vmatprep.subr.mxu0 0.0
      %2657 = vmatpush1.msra.mxu0 0.0
      %2658 = vmatprep.subr.mxu0 0.0
      %2659 = vmatpush1.msra.mxu0 0.0
      %2660 = vmatprep.subr.mxu0 0.0
      %2661 = vmatpush1.msra.mxu0 0.0
      %2662 = vmatprep.subr.mxu0 0.0
      %2663 = vmatpush1.msra.mxu0 0.0
      %2664 = vmatprep.subr.mxu0 0.0
      %2665 = vmatpush1.msra.mxu0 0.0
      %2666 = vmatprep.subr.mxu0 0.0
      %2667 = vmatpush1.msra.mxu0 0.0
      %2668 = vmatprep.subr.mxu0 0.0
      %2669 = vmatpush1.msra.mxu0 0.0
      %2670 = vmatprep.subr.mxu0 0.0
      %2671 = vmatpush1.msra.mxu0 0.0
      %2672 = vmatprep.subr.mxu0 0.0
      %2673 = vmatpush1.msra.mxu0 0.0
      %2674 = vmatprep.subr.mxu0 0.0
      %2675 = vmatpush1.msra.mxu0 0.0
      %2676 = vmatprep.subr.mxu0 0.0
      %2677 = vmatpush1.msra.mxu0 0.0
      %2678 = vmatprep.subr.mxu0 0.0
      %2679 = vmatpush1.msra.mxu0 %v2646
      %2680 = vmatprep.subr.mxu0 0.0
      %2681 = vmatpush2.msra.mxu0 0.0
      %2682 = vmatprep.subr.mxu0 0.0
      %2683 = vmatpush2.msra.mxu0 0.0
      %2684 = vmatprep.subr.mxu0 0.0
      %2685 = vmatpush2.msra.mxu0 0.0
      %2686 = vmatprep.subr.mxu0 0.0
      %2687 = vmatpush2.msra.mxu0 0.0
      %2688 = vmatprep.subr.mxu0 0.0
      %2689 = vmatpush2.msra.mxu0 0.0
      %2690 = vmatprep.subr.mxu0 0.0
      %2691 = vmatpush2.msra.mxu0 0.0
      %2692 = vmatprep.subr.mxu0 0.0
      %2693 = vmatpush2.msra.mxu0 0.0
      %2694 = vmatprep.subr.mxu0 0.0
      %2695 = vmatpush2.msra.mxu0 0.0
      %2696 = vmatprep.subr.mxu0 0.0
      %2697 = vmatpush2.msra.mxu0 0.0
      %2698 = vmatprep.subr.mxu0 0.0
      %2699 = vmatpush2.msra.mxu0 0.0
      %2700 = vmatprep.subr.mxu0 0.0
      %2701 = vmatpush2.msra.mxu0 0.0
      %2702 = vmatprep.subr.mxu0 0.0
      %2703 = vmatpush2.msra.mxu0 0.0
      %2704 = vmatprep.subr.mxu0 0.0
      %2705 = vmatpush2.msra.mxu0 0.0
      %2706 = vmatprep.subr.mxu0 0.0
      %2707 = vmatpush2.msra.mxu0 0.0
      %2708 = vmatprep.subr.mxu0 0.0
      %2709 = vmatpush2.msra.mxu0 0.0
      %2710 = vmatprep.subr.mxu0 0.0
      %2711 = vmatpush2.msra.mxu0 0.0
      %2712 = vmatprep.mubr.f32.mxu0 0.0
      %2713 = vmatmul.mubr.f32.gmra.mxu0 %v1328
      %v2714 = vpop.f32.mrf.mxu0
      %v2715 = vadd.f32 0.0, %v2714
      %v2716 = vpop.f32.mrf.mxu0
      %2717 = vmatprep.mubr.f32.mxu0 0.0
      %2718 = vmatmul.mubr.f32.gmra.mxu0 %v1330
      %v2719 = vpop.f32.mrf.mxu0
      %v2720 = vadd.f32 0.0, %v2719
      %v2721 = vpop.f32.mrf.mxu0
      %2722 = vmatprep.mubr.f32.mxu0 0.0
      %2723 = vmatmul.mubr.f32.gmra.mxu0 %v1332
      %v2724 = vpop.f32.mrf.mxu0
      %v2725 = vadd.f32 0.0, %v2724
      %v2726 = vpop.f32.mrf.mxu0
      %2727 = vmatprep.mubr.f32.mxu0 0.0
      %2728 = vmatmul.mubr.f32.gmra.mxu0 %v1334
      %v2729 = vpop.f32.mrf.mxu0
      %v2730 = vadd.f32 0.0, %v2729
      %v2731 = vpop.f32.mrf.mxu0
      %2732 = vmatprep.mubr.f32.mxu0 0.0
      %2733 = vmatmul.mubr.f32.gmra.mxu0 %v1336
      %v2734 = vpop.f32.mrf.mxu0
      %v2735 = vadd.f32 0.0, %v2734
      %v2736 = vpop.f32.mrf.mxu0
      %2737 = vmatprep.mubr.f32.mxu0 0.0
      %2738 = vmatmul.mubr.f32.gmra.mxu0 %v1338
      %v2739 = vpop.f32.mrf.mxu0
      %v2740 = vadd.f32 0.0, %v2739
      %v2741 = vpop.f32.mrf.mxu0
      %2742 = vmatprep.mubr.f32.mxu0 0.0
      %2743 = vmatmul.mubr.f32.gmra.mxu0 %v1340
      %v2744 = vpop.f32.mrf.mxu0
      %v2745 = vadd.f32 0.0, %v2744
      %v2746 = vpop.f32.mrf.mxu0
      %2747 = vmatprep.mubr.f32.mxu0 0.0
      %2748 = vmatmul.mubr.f32.gmra.mxu0 %v2643
      %v2749 = vpop.f32.mrf.mxu0
      %v2750 = vadd.f32 0.0, %v2749
      %v2751 = vpop.f32.mrf.mxu0
      %2752 = vdwg.mxu0
      %v2753 = vadd.f32 %v2629, %v2715
      %v2754 = vadd.f32 %v2630, %v2720
      %v2755 = vadd.f32 %v2631, %v2725
      %v2756 = vadd.f32 %v2632, %v2730
      %v2757 = vadd.f32 %v2633, %v2735
      %v2758 = vadd.f32 %v2634, %v2740
      %v2759 = vadd.f32 %v2635, %v2745
      %v2760 = vadd.f32 %v2636, %v2750
      %v2762 = vrot.slane %v245, 1
      %v2763 = vrot.slane %v246, 1
      %v2764 = vsel %vm524, %v2762, %v2763
      %s2765 = scalar_lea.vmem %s1, 72
      %v2766 = vld [vmem:[%s2765] sm:$0xf]
      %v2767 = vsel %vm250, %v2764, 0
      %v2770 = vsel %vm275, %v2766, 0
      %2772 = vmatprep.subr.mxu0 0.0
      %2773 = vmatpush1.msra.mxu0 0.0
      %2774 = vmatprep.subr.mxu0 0.0
      %2775 = vmatpush1.msra.mxu0 0.0
      %2776 = vmatprep.subr.mxu0 0.0
      %2777 = vmatpush1.msra.mxu0 0.0
      %2778 = vmatprep.subr.mxu0 0.0
      %2779 = vmatpush1.msra.mxu0 0.0
      %2780 = vmatprep.subr.mxu0 0.0
      %2781 = vmatpush1.msra.mxu0 0.0
      %2782 = vmatprep.subr.mxu0 0.0
      %2783 = vmatpush1.msra.mxu0 0.0
      %2784 = vmatprep.subr.mxu0 0.0
      %2785 = vmatpush1.msra.mxu0 0.0
      %2786 = vmatprep.subr.mxu0 0.0
      %2787 = vmatpush1.msra.mxu0 0.0
      %2788 = vmatprep.subr.mxu0 0.0
      %2789 = vmatpush1.msra.mxu0 0.0
      %2790 = vmatprep.subr.mxu0 0.0
      %2791 = vmatpush1.msra.mxu0 0.0
      %2792 = vmatprep.subr.mxu0 0.0
      %2793 = vmatpush1.msra.mxu0 0.0
      %2794 = vmatprep.subr.mxu0 0.0
      %2795 = vmatpush1.msra.mxu0 0.0
      %2796 = vmatprep.subr.mxu0 0.0
      %2797 = vmatpush1.msra.mxu0 0.0
      %2798 = vmatprep.subr.mxu0 0.0
      %2799 = vmatpush1.msra.mxu0 0.0
      %2800 = vmatprep.subr.mxu0 0.0
      %2801 = vmatpush1.msra.mxu0 0.0
      %2802 = vmatprep.subr.mxu0 0.0
      %2803 = vmatpush1.msra.mxu0 %v2770
      %2804 = vmatprep.subr.mxu0 0.0
      %2805 = vmatpush2.msra.mxu0 0.0
      %2806 = vmatprep.subr.mxu0 0.0
      %2807 = vmatpush2.msra.mxu0 0.0
      %2808 = vmatprep.subr.mxu0 0.0
      %2809 = vmatpush2.msra.mxu0 0.0
      %2810 = vmatprep.subr.mxu0 0.0
      %2811 = vmatpush2.msra.mxu0 0.0
      %2812 = vmatprep.subr.mxu0 0.0
      %2813 = vmatpush2.msra.mxu0 0.0
      %2814 = vmatprep.subr.mxu0 0.0
      %2815 = vmatpush2.msra.mxu0 0.0
      %2816 = vmatprep.subr.mxu0 0.0
      %2817 = vmatpush2.msra.mxu0 0.0
      %2818 = vmatprep.subr.mxu0 0.0
      %2819 = vmatpush2.msra.mxu0 0.0
      %2820 = vmatprep.subr.mxu0 0.0
      %2821 = vmatpush2.msra.mxu0 0.0
      %2822 = vmatprep.subr.mxu0 0.0
      %2823 = vmatpush2.msra.mxu0 0.0
      %2824 = vmatprep.subr.mxu0 0.0
      %2825 = vmatpush2.msra.mxu0 0.0
      %2826 = vmatprep.subr.mxu0 0.0
      %2827 = vmatpush2.msra.mxu0 0.0
      %2828 = vmatprep.subr.mxu0 0.0
      %2829 = vmatpush2.msra.mxu0 0.0
      %2830 = vmatprep.subr.mxu0 0.0
      %2831 = vmatpush2.msra.mxu0 0.0
      %2832 = vmatprep.subr.mxu0 0.0
      %2833 = vmatpush2.msra.mxu0 0.0
      %2834 = vmatprep.subr.mxu0 0.0
      %2835 = vmatpush2.msra.mxu0 0.0
      %2836 = vmatprep.mubr.f32.mxu0 0.0
      %2837 = vmatmul.mubr.f32.gmra.mxu0 %v1494
      %v2838 = vpop.f32.mrf.mxu0
      %v2839 = vadd.f32 0.0, %v2838
      %v2840 = vpop.f32.mrf.mxu0
      %2841 = vmatprep.mubr.f32.mxu0 0.0
      %2842 = vmatmul.mubr.f32.gmra.mxu0 %v1496
      %v2843 = vpop.f32.mrf.mxu0
      %v2844 = vadd.f32 0.0, %v2843
      %v2845 = vpop.f32.mrf.mxu0
      %2846 = vmatprep.mubr.f32.mxu0 0.0
      %2847 = vmatmul.mubr.f32.gmra.mxu0 %v1498
      %v2848 = vpop.f32.mrf.mxu0
      %v2849 = vadd.f32 0.0, %v2848
      %v2850 = vpop.f32.mrf.mxu0
      %2851 = vmatprep.mubr.f32.mxu0 0.0
      %2852 = vmatmul.mubr.f32.gmra.mxu0 %v1500
      %v2853 = vpop.f32.mrf.mxu0
      %v2854 = vadd.f32 0.0, %v2853
      %v2855 = vpop.f32.mrf.mxu0
      %2856 = vmatprep.mubr.f32.mxu0 0.0
      %2857 = vmatmul.mubr.f32.gmra.mxu0 %v1502
      %v2858 = vpop.f32.mrf.mxu0
      %v2859 = vadd.f32 0.0, %v2858
      %v2860 = vpop.f32.mrf.mxu0
      %2861 = vmatprep.mubr.f32.mxu0 0.0
      %2862 = vmatmul.mubr.f32.gmra.mxu0 %v1504
      %v2863 = vpop.f32.mrf.mxu0
      %v2864 = vadd.f32 0.0, %v2863
      %v2865 = vpop.f32.mrf.mxu0
      %2866 = vmatprep.mubr.f32.mxu0 0.0
      %2867 = vmatmul.mubr.f32.gmra.mxu0 %v1506
      %v2868 = vpop.f32.mrf.mxu0
      %v2869 = vadd.f32 0.0, %v2868
      %v2870 = vpop.f32.mrf.mxu0
      %2871 = vmatprep.mubr.f32.mxu0 0.0
      %2872 = vmatmul.mubr.f32.gmra.mxu0 %v2767
      %v2873 = vpop.f32.mrf.mxu0
      %v2874 = vadd.f32 0.0, %v2873
      %v2875 = vpop.f32.mrf.mxu0
      %2876 = vdwg.mxu0
      %v2877 = vadd.f32 %v2753, %v2839
      %v2878 = vadd.f32 %v2754, %v2844
      %v2879 = vadd.f32 %v2755, %v2849
      %v2880 = vadd.f32 %v2756, %v2854
      %v2881 = vadd.f32 %v2757, %v2859
      %v2882 = vadd.f32 %v2758, %v2864
      %v2883 = vadd.f32 %v2759, %v2869
      %v2884 = vadd.f32 %v2760, %v2874
      %v2885 = vrot.slane %v227, 2
      %v2886 = vrot.slane %v228, 2
      %v2887 = vsel %vm849, %v2885, %v2886
      %s2888 = scalar_lea.vmem %s1, 76
      %v2889 = vld [vmem:[%s2888] sm:$0xf]
      %v2890 = vsel %vm250, %v2887, 0
      %v2893 = vsel %vm275, %v2889, 0
      %2895 = vmatprep.subr.mxu0 0.0
      %2896 = vmatpush1.msra.mxu0 0.0
      %2897 = vmatprep.subr.mxu0 0.0
      %2898 = vmatpush1.msra.mxu0 0.0
      %2899 = vmatprep.subr.mxu0 0.0
      %2900 = vmatpush1.msra.mxu0 0.0
      %2901 = vmatprep.subr.mxu0 0.0
      %2902 = vmatpush1.msra.mxu0 0.0
      %2903 = vmatprep.subr.mxu0 0.0
      %2904 = vmatpush1.msra.mxu0 0.0
      %2905 = vmatprep.subr.mxu0 0.0
      %2906 = vmatpush1.msra.mxu0 0.0
      %2907 = vmatprep.subr.mxu0 0.0
      %2908 = vmatpush1.msra.mxu0 0.0
      %2909 = vmatprep.subr.mxu0 0.0
      %2910 = vmatpush1.msra.mxu0 0.0
      %2911 = vmatprep.subr.mxu0 0.0
      %2912 = vmatpush1.msra.mxu0 0.0
      %2913 = vmatprep.subr.mxu0 0.0
      %2914 = vmatpush1.msra.mxu0 0.0
      %2915 = vmatprep.subr.mxu0 0.0
      %2916 = vmatpush1.msra.mxu0 0.0
      %2917 = vmatprep.subr.mxu0 0.0
      %2918 = vmatpush1.msra.mxu0 0.0
      %2919 = vmatprep.subr.mxu0 0.0
      %2920 = vmatpush1.msra.mxu0 0.0
      %2921 = vmatprep.subr.mxu0 0.0
      %2922 = vmatpush1.msra.mxu0 0.0
      %2923 = vmatprep.subr.mxu0 0.0
      %2924 = vmatpush1.msra.mxu0 0.0
      %2925 = vmatprep.subr.mxu0 0.0
      %2926 = vmatpush1.msra.mxu0 %v2893
      %2927 = vmatprep.subr.mxu0 0.0
      %2928 = vmatpush2.msra.mxu0 0.0
      %2929 = vmatprep.subr.mxu0 0.0
      %2930 = vmatpush2.msra.mxu0 0.0
      %2931 = vmatprep.subr.mxu0 0.0
      %2932 = vmatpush2.msra.mxu0 0.0
      %2933 = vmatprep.subr.mxu0 0.0
      %2934 = vmatpush2.msra.mxu0 0.0
      %2935 = vmatprep.subr.mxu0 0.0
      %2936 = vmatpush2.msra.mxu0 0.0
      %2937 = vmatprep.subr.mxu0 0.0
      %2938 = vmatpush2.msra.mxu0 0.0
      %2939 = vmatprep.subr.mxu0 0.0
      %2940 = vmatpush2.msra.mxu0 0.0
      %2941 = vmatprep.subr.mxu0 0.0
      %2942 = vmatpush2.msra.mxu0 0.0
      %2943 = vmatprep.subr.mxu0 0.0
      %2944 = vmatpush2.msra.mxu0 0.0
      %2945 = vmatprep.subr.mxu0 0.0
      %2946 = vmatpush2.msra.mxu0 0.0
      %2947 = vmatprep.subr.mxu0 0.0
      %2948 = vmatpush2.msra.mxu0 0.0
      %2949 = vmatprep.subr.mxu0 0.0
      %2950 = vmatpush2.msra.mxu0 0.0
      %2951 = vmatprep.subr.mxu0 0.0
      %2952 = vmatpush2.msra.mxu0 0.0
      %2953 = vmatprep.subr.mxu0 0.0
      %2954 = vmatpush2.msra.mxu0 0.0
      %2955 = vmatprep.subr.mxu0 0.0
      %2956 = vmatpush2.msra.mxu0 0.0
      %2957 = vmatprep.subr.mxu0 0.0
      %2958 = vmatpush2.msra.mxu0 0.0
      %2959 = vmatprep.mubr.f32.mxu0 0.0
      %2960 = vmatmul.mubr.f32.gmra.mxu0 %v1652
      %v2961 = vpop.f32.mrf.mxu0
      %v2962 = vadd.f32 0.0, %v2961
      %v2963 = vpop.f32.mrf.mxu0
      %2964 = vmatprep.mubr.f32.mxu0 0.0
      %2965 = vmatmul.mubr.f32.gmra.mxu0 %v1654
      %v2966 = vpop.f32.mrf.mxu0
      %v2967 = vadd.f32 0.0, %v2966
      %v2968 = vpop.f32.mrf.mxu0
      %2969 = vmatprep.mubr.f32.mxu0 0.0
      %2970 = vmatmul.mubr.f32.gmra.mxu0 %v1656
      %v2971 = vpop.f32.mrf.mxu0
      %v2972 = vadd.f32 0.0, %v2971
      %v2973 = vpop.f32.mrf.mxu0
      %2974 = vmatprep.mubr.f32.mxu0 0.0
      %2975 = vmatmul.mubr.f32.gmra.mxu0 %v1658
      %v2976 = vpop.f32.mrf.mxu0
      %v2977 = vadd.f32 0.0, %v2976
      %v2978 = vpop.f32.mrf.mxu0
      %2979 = vmatprep.mubr.f32.mxu0 0.0
      %2980 = vmatmul.mubr.f32.gmra.mxu0 %v1660
      %v2981 = vpop.f32.mrf.mxu0
      %v2982 = vadd.f32 0.0, %v2981
      %v2983 = vpop.f32.mrf.mxu0
      %2984 = vmatprep.mubr.f32.mxu0 0.0
      %2985 = vmatmul.mubr.f32.gmra.mxu0 %v1662
      %v2986 = vpop.f32.mrf.mxu0
      %v2987 = vadd.f32 0.0, %v2986
      %v2988 = vpop.f32.mrf.mxu0
      %2989 = vmatprep.mubr.f32.mxu0 0.0
      %2990 = vmatmul.mubr.f32.gmra.mxu0 %v1664
      %v2991 = vpop.f32.mrf.mxu0
      %v2992 = vadd.f32 0.0, %v2991
      %v2993 = vpop.f32.mrf.mxu0
      %2994 = vmatprep.mubr.f32.mxu0 0.0
      %2995 = vmatmul.mubr.f32.gmra.mxu0 %v2890
      %v2996 = vpop.f32.mrf.mxu0
      %v2997 = vadd.f32 0.0, %v2996
      %v2998 = vpop.f32.mrf.mxu0
      %2999 = vdwg.mxu0
      %v3000 = vadd.f32 %v2877, %v2962
      %v3001 = vadd.f32 %v2878, %v2967
      %v3002 = vadd.f32 %v2879, %v2972
      %v3003 = vadd.f32 %v2880, %v2977
      %v3004 = vadd.f32 %v2881, %v2982
      %v3005 = vadd.f32 %v2882, %v2987
      %v3006 = vadd.f32 %v2883, %v2992
      %v3007 = vadd.f32 %v2884, %v2997
      %s3008 = scalar_lea.vmem %s1, 80
      %v3009 = vld [vmem:[%s3008] sm:$0xf]
      %v3011 = vsel %vm250, %v189, 0
      %v3014 = vsel %vm275, %v3009, 0
      %3016 = vmatprep.subr.mxu0 0.0
      %3017 = vmatpush1.msra.mxu0 0.0
      %3018 = vmatprep.subr.mxu0 0.0
      %3019 = vmatpush1.msra.mxu0 0.0
      %3020 = vmatprep.subr.mxu0 0.0
      %3021 = vmatpush1.msra.mxu0 0.0
      %3022 = vmatprep.subr.mxu0 0.0
      %3023 = vmatpush1.msra.mxu0 0.0
      %3024 = vmatprep.subr.mxu0 0.0
      %3025 = vmatpush1.msra.mxu0 0.0
      %3026 = vmatprep.subr.mxu0 0.0
      %3027 = vmatpush1.msra.mxu0 0.0
      %3028 = vmatprep.subr.mxu0 0.0
      %3029 = vmatpush1.msra.mxu0 0.0
      %3030 = vmatprep.subr.mxu0 0.0
      %3031 = vmatpush1.msra.mxu0 0.0
      %3032 = vmatprep.subr.mxu0 0.0
      %3033 = vmatpush1.msra.mxu0 0.0
      %3034 = vmatprep.subr.mxu0 0.0
      %3035 = vmatpush1.msra.mxu0 0.0
      %3036 = vmatprep.subr.mxu0 0.0
      %3037 = vmatpush1.msra.mxu0 0.0
      %3038 = vmatprep.subr.mxu0 0.0
      %3039 = vmatpush1.msra.mxu0 0.0
      %3040 = vmatprep.subr.mxu0 0.0
      %3041 = vmatpush1.msra.mxu0 0.0
      %3042 = vmatprep.subr.mxu0 0.0
      %3043 = vmatpush1.msra.mxu0 0.0
      %3044 = vmatprep.subr.mxu0 0.0
      %3045 = vmatpush1.msra.mxu0 0.0
      %3046 = vmatprep.subr.mxu0 0.0
      %3047 = vmatpush1.msra.mxu0 %v3014
      %3048 = vmatprep.subr.mxu0 0.0
      %3049 = vmatpush2.msra.mxu0 0.0
      %3050 = vmatprep.subr.mxu0 0.0
      %3051 = vmatpush2.msra.mxu0 0.0
      %3052 = vmatprep.subr.mxu0 0.0
      %3053 = vmatpush2.msra.mxu0 0.0
      %3054 = vmatprep.subr.mxu0 0.0
      %3055 = vmatpush2.msra.mxu0 0.0
      %3056 = vmatprep.subr.mxu0 0.0
      %3057 = vmatpush2.msra.mxu0 0.0
      %3058 = vmatprep.subr.mxu0 0.0
      %3059 = vmatpush2.msra.mxu0 0.0
      %3060 = vmatprep.subr.mxu0 0.0
      %3061 = vmatpush2.msra.mxu0 0.0
      %3062 = vmatprep.subr.mxu0 0.0
      %3063 = vmatpush2.msra.mxu0 0.0
      %3064 = vmatprep.subr.mxu0 0.0
      %3065 = vmatpush2.msra.mxu0 0.0
      %3066 = vmatprep.subr.mxu0 0.0
      %3067 = vmatpush2.msra.mxu0 0.0
      %3068 = vmatprep.subr.mxu0 0.0
      %3069 = vmatpush2.msra.mxu0 0.0
      %3070 = vmatprep.subr.mxu0 0.0
      %3071 = vmatpush2.msra.mxu0 0.0
      %3072 = vmatprep.subr.mxu0 0.0
      %3073 = vmatpush2.msra.mxu0 0.0
      %3074 = vmatprep.subr.mxu0 0.0
      %3075 = vmatpush2.msra.mxu0 0.0
      %3076 = vmatprep.subr.mxu0 0.0
      %3077 = vmatpush2.msra.mxu0 0.0
      %3078 = vmatprep.subr.mxu0 0.0
      %3079 = vmatpush2.msra.mxu0 0.0
      %3080 = vmatprep.mubr.f32.mxu0 0.0
      %3081 = vmatmul.mubr.f32.gmra.mxu0 %v391
      %v3082 = vpop.f32.mrf.mxu0
      %v3083 = vadd.f32 0.0, %v3082
      %v3084 = vpop.f32.mrf.mxu0
      %3085 = vmatprep.mubr.f32.mxu0 0.0
      %3086 = vmatmul.mubr.f32.gmra.mxu0 %v394
      %v3087 = vpop.f32.mrf.mxu0
      %v3088 = vadd.f32 0.0, %v3087
      %v3089 = vpop.f32.mrf.mxu0
      %3090 = vmatprep.mubr.f32.mxu0 0.0
      %3091 = vmatmul.mubr.f32.gmra.mxu0 %v397
      %v3092 = vpop.f32.mrf.mxu0
      %v3093 = vadd.f32 0.0, %v3092
      %v3094 = vpop.f32.mrf.mxu0
      %3095 = vmatprep.mubr.f32.mxu0 0.0
      %3096 = vmatmul.mubr.f32.gmra.mxu0 %v400
      %v3097 = vpop.f32.mrf.mxu0
      %v3098 = vadd.f32 0.0, %v3097
      %v3099 = vpop.f32.mrf.mxu0
      %3100 = vmatprep.mubr.f32.mxu0 0.0
      %3101 = vmatmul.mubr.f32.gmra.mxu0 %v403
      %v3102 = vpop.f32.mrf.mxu0
      %v3103 = vadd.f32 0.0, %v3102
      %v3104 = vpop.f32.mrf.mxu0
      %3105 = vmatprep.mubr.f32.mxu0 0.0
      %3106 = vmatmul.mubr.f32.gmra.mxu0 %v406
      %v3107 = vpop.f32.mrf.mxu0
      %v3108 = vadd.f32 0.0, %v3107
      %v3109 = vpop.f32.mrf.mxu0
      %3110 = vmatprep.mubr.f32.mxu0 0.0
      %3111 = vmatmul.mubr.f32.gmra.mxu0 %v1785
      %v3112 = vpop.f32.mrf.mxu0
      %v3113 = vadd.f32 0.0, %v3112
      %v3114 = vpop.f32.mrf.mxu0
      %3115 = vmatprep.mubr.f32.mxu0 0.0
      %3116 = vmatmul.mubr.f32.gmra.mxu0 %v3011
      %v3117 = vpop.f32.mrf.mxu0
      %v3118 = vadd.f32 0.0, %v3117
      %v3119 = vpop.f32.mrf.mxu0
      %3120 = vdwg.mxu0
      %v3121 = vadd.f32 %v3000, %v3083
      %v3122 = vadd.f32 %v3001, %v3088
      %v3123 = vadd.f32 %v3002, %v3093
      %v3124 = vadd.f32 %v3003, %v3098
      %v3125 = vadd.f32 %v3004, %v3103
      %v3126 = vadd.f32 %v3005, %v3108
      %v3127 = vadd.f32 %v3006, %v3113
      %v3128 = vadd.f32 %v3007, %v3118
      %s3129 = scalar_lea.vmem %s1, 84
      %v3130 = vld [vmem:[%s3129] sm:$0xf]
      %v3132 = vsel %vm250, %v209, 0
      %v3135 = vsel %vm275, %v3130, 0
      %3137 = vmatprep.subr.mxu0 0.0
      %3138 = vmatpush1.msra.mxu0 0.0
      %3139 = vmatprep.subr.mxu0 0.0
      %3140 = vmatpush1.msra.mxu0 0.0
      %3141 = vmatprep.subr.mxu0 0.0
      %3142 = vmatpush1.msra.mxu0 0.0
      %3143 = vmatprep.subr.mxu0 0.0
      %3144 = vmatpush1.msra.mxu0 0.0
      %3145 = vmatprep.subr.mxu0 0.0
      %3146 = vmatpush1.msra.mxu0 0.0
      %3147 = vmatprep.subr.mxu0 0.0
      %3148 = vmatpush1.msra.mxu0 0.0
      %3149 = vmatprep.subr.mxu0 0.0
      %3150 = vmatpush1.msra.mxu0 0.0
      %3151 = vmatprep.subr.mxu0 0.0
      %3152 = vmatpush1.msra.mxu0 0.0
      %3153 = vmatprep.subr.mxu0 0.0
      %3154 = vmatpush1.msra.mxu0 0.0
      %3155 = vmatprep.subr.mxu0 0.0
      %3156 = vmatpush1.msra.mxu0 0.0
      %3157 = vmatprep.subr.mxu0 0.0
      %3158 = vmatpush1.msra.mxu0 0.0
      %3159 = vmatprep.subr.mxu0 0.0
      %3160 = vmatpush1.msra.mxu0 0.0
      %3161 = vmatprep.subr.mxu0 0.0
      %3162 = vmatpush1.msra.mxu0 0.0
      %3163 = vmatprep.subr.mxu0 0.0
      %3164 = vmatpush1.msra.mxu0 0.0
      %3165 = vmatprep.subr.mxu0 0.0
      %3166 = vmatpush1.msra.mxu0 0.0
      %3167 = vmatprep.subr.mxu0 0.0
      %3168 = vmatpush1.msra.mxu0 %v3135
      %3169 = vmatprep.subr.mxu0 0.0
      %3170 = vmatpush2.msra.mxu0 0.0
      %3171 = vmatprep.subr.mxu0 0.0
      %3172 = vmatpush2.msra.mxu0 0.0
      %3173 = vmatprep.subr.mxu0 0.0
      %3174 = vmatpush2.msra.mxu0 0.0
      %3175 = vmatprep.subr.mxu0 0.0
      %3176 = vmatpush2.msra.mxu0 0.0
      %3177 = vmatprep.subr.mxu0 0.0
      %3178 = vmatpush2.msra.mxu0 0.0
      %3179 = vmatprep.subr.mxu0 0.0
      %3180 = vmatpush2.msra.mxu0 0.0
      %3181 = vmatprep.subr.mxu0 0.0
      %3182 = vmatpush2.msra.mxu0 0.0
      %3183 = vmatprep.subr.mxu0 0.0
      %3184 = vmatpush2.msra.mxu0 0.0
      %3185 = vmatprep.subr.mxu0 0.0
      %3186 = vmatpush2.msra.mxu0 0.0
      %3187 = vmatprep.subr.mxu0 0.0
      %3188 = vmatpush2.msra.mxu0 0.0
      %3189 = vmatprep.subr.mxu0 0.0
      %3190 = vmatpush2.msra.mxu0 0.0
      %3191 = vmatprep.subr.mxu0 0.0
      %3192 = vmatpush2.msra.mxu0 0.0
      %3193 = vmatprep.subr.mxu0 0.0
      %3194 = vmatpush2.msra.mxu0 0.0
      %3195 = vmatprep.subr.mxu0 0.0
      %3196 = vmatpush2.msra.mxu0 0.0
      %3197 = vmatprep.subr.mxu0 0.0
      %3198 = vmatpush2.msra.mxu0 0.0
      %3199 = vmatprep.subr.mxu0 0.0
      %3200 = vmatpush2.msra.mxu0 0.0
      %3201 = vmatprep.mubr.f32.mxu0 0.0
      %3202 = vmatmul.mubr.f32.gmra.mxu0 %v258
      %v3203 = vpop.f32.mrf.mxu0
      %v3204 = vadd.f32 0.0, %v3203
      %v3205 = vpop.f32.mrf.mxu0
      %3206 = vmatprep.mubr.f32.mxu0 0.0
      %3207 = vmatmul.mubr.f32.gmra.mxu0 %v261
      %v3208 = vpop.f32.mrf.mxu0
      %v3209 = vadd.f32 0.0, %v3208
      %v3210 = vpop.f32.mrf.mxu0
      %3211 = vmatprep.mubr.f32.mxu0 0.0
      %3212 = vmatmul.mubr.f32.gmra.mxu0 %v264
      %v3213 = vpop.f32.mrf.mxu0
      %v3214 = vadd.f32 0.0, %v3213
      %v3215 = vpop.f32.mrf.mxu0
      %3216 = vmatprep.mubr.f32.mxu0 0.0
      %3217 = vmatmul.mubr.f32.gmra.mxu0 %v267
      %v3218 = vpop.f32.mrf.mxu0
      %v3219 = vadd.f32 0.0, %v3218
      %v3220 = vpop.f32.mrf.mxu0
      %3221 = vmatprep.mubr.f32.mxu0 0.0
      %3222 = vmatmul.mubr.f32.gmra.mxu0 %v270
      %v3223 = vpop.f32.mrf.mxu0
      %v3224 = vadd.f32 0.0, %v3223
      %v3225 = vpop.f32.mrf.mxu0
      %3226 = vmatprep.mubr.f32.mxu0 0.0
      %3227 = vmatmul.mubr.f32.gmra.mxu0 %v273
      %v3228 = vpop.f32.mrf.mxu0
      %v3229 = vadd.f32 0.0, %v3228
      %v3230 = vpop.f32.mrf.mxu0
      %3231 = vmatprep.mubr.f32.mxu0 0.0
      %3232 = vmatmul.mubr.f32.gmra.mxu0 %v1906
      %v3233 = vpop.f32.mrf.mxu0
      %v3234 = vadd.f32 0.0, %v3233
      %v3235 = vpop.f32.mrf.mxu0
      %3236 = vmatprep.mubr.f32.mxu0 0.0
      %3237 = vmatmul.mubr.f32.gmra.mxu0 %v3132
      %v3238 = vpop.f32.mrf.mxu0
      %v3239 = vadd.f32 0.0, %v3238
      %v3240 = vpop.f32.mrf.mxu0
      %3241 = vdwg.mxu0
      %v3242 = vadd.f32 %v3121, %v3204
      %v3243 = vadd.f32 %v3122, %v3209
      %v3244 = vadd.f32 %v3123, %v3214
      %v3245 = vadd.f32 %v3124, %v3219
      %v3246 = vadd.f32 %v3125, %v3224
      %v3247 = vadd.f32 %v3126, %v3229
      %v3248 = vadd.f32 %v3127, %v3234
      %v3249 = vadd.f32 %v3128, %v3239
      %v3251 = vrot.slane %v189, 1
      %v3252 = vrot.slane %v190, 1
      %v3253 = vsel %vm524, %v3251, %v3252
      %s3254 = scalar_lea.vmem %s1, 88
      %v3255 = vld [vmem:[%s3254] sm:$0xf]
      %v3256 = vsel %vm250, %v3253, 0
      %v3259 = vsel %vm275, %v3255, 0
      %3261 = vmatprep.subr.mxu0 0.0
      %3262 = vmatpush1.msra.mxu0 0.0
      %3263 = vmatprep.subr.mxu0 0.0
      %3264 = vmatpush1.msra.mxu0 0.0
      %3265 = vmatprep.subr.mxu0 0.0
      %3266 = vmatpush1.msra.mxu0 0.0
      %3267 = vmatprep.subr.mxu0 0.0
      %3268 = vmatpush1.msra.mxu0 0.0
      %3269 = vmatprep.subr.mxu0 0.0
      %3270 = vmatpush1.msra.mxu0 0.0
      %3271 = vmatprep.subr.mxu0 0.0
      %3272 = vmatpush1.msra.mxu0 0.0
      %3273 = vmatprep.subr.mxu0 0.0
      %3274 = vmatpush1.msra.mxu0 0.0
      %3275 = vmatprep.subr.mxu0 0.0
      %3276 = vmatpush1.msra.mxu0 0.0
      %3277 = vmatprep.subr.mxu0 0.0
      %3278 = vmatpush1.msra.mxu0 0.0
      %3279 = vmatprep.subr.mxu0 0.0
      %3280 = vmatpush1.msra.mxu0 0.0
      %3281 = vmatprep.subr.mxu0 0.0
      %3282 = vmatpush1.msra.mxu0 0.0
      %3283 = vmatprep.subr.mxu0 0.0
      %3284 = vmatpush1.msra.mxu0 0.0
      %3285 = vmatprep.subr.mxu0 0.0
      %3286 = vmatpush1.msra.mxu0 0.0
      %3287 = vmatprep.subr.mxu0 0.0
      %3288 = vmatpush1.msra.mxu0 0.0
      %3289 = vmatprep.subr.mxu0 0.0
      %3290 = vmatpush1.msra.mxu0 0.0
      %3291 = vmatprep.subr.mxu0 0.0
      %3292 = vmatpush1.msra.mxu0 %v3259
      %3293 = vmatprep.subr.mxu0 0.0
      %3294 = vmatpush2.msra.mxu0 0.0
      %3295 = vmatprep.subr.mxu0 0.0
      %3296 = vmatpush2.msra.mxu0 0.0
      %3297 = vmatprep.subr.mxu0 0.0
      %3298 = vmatpush2.msra.mxu0 0.0
      %3299 = vmatprep.subr.mxu0 0.0
      %3300 = vmatpush2.msra.mxu0 0.0
      %3301 = vmatprep.subr.mxu0 0.0
      %3302 = vmatpush2.msra.mxu0 0.0
      %3303 = vmatprep.subr.mxu0 0.0
      %3304 = vmatpush2.msra.mxu0 0.0
      %3305 = vmatprep.subr.mxu0 0.0
      %3306 = vmatpush2.msra.mxu0 0.0
      %3307 = vmatprep.subr.mxu0 0.0
      %3308 = vmatpush2.msra.mxu0 0.0
      %3309 = vmatprep.subr.mxu0 0.0
      %3310 = vmatpush2.msra.mxu0 0.0
      %3311 = vmatprep.subr.mxu0 0.0
      %3312 = vmatpush2.msra.mxu0 0.0
      %3313 = vmatprep.subr.mxu0 0.0
      %3314 = vmatpush2.msra.mxu0 0.0
      %3315 = vmatprep.subr.mxu0 0.0
      %3316 = vmatpush2.msra.mxu0 0.0
      %3317 = vmatprep.subr.mxu0 0.0
      %3318 = vmatpush2.msra.mxu0 0.0
      %3319 = vmatprep.subr.mxu0 0.0
      %3320 = vmatpush2.msra.mxu0 0.0
      %3321 = vmatprep.subr.mxu0 0.0
      %3322 = vmatpush2.msra.mxu0 0.0
      %3323 = vmatprep.subr.mxu0 0.0
      %3324 = vmatpush2.msra.mxu0 0.0
      %3325 = vmatprep.mubr.f32.mxu0 0.0
      %3326 = vmatmul.mubr.f32.gmra.mxu0 %v555
      %v3327 = vpop.f32.mrf.mxu0
      %v3328 = vadd.f32 0.0, %v3327
      %v3329 = vpop.f32.mrf.mxu0
      %3330 = vmatprep.mubr.f32.mxu0 0.0
      %3331 = vmatmul.mubr.f32.gmra.mxu0 %v557
      %v3332 = vpop.f32.mrf.mxu0
      %v3333 = vadd.f32 0.0, %v3332
      %v3334 = vpop.f32.mrf.mxu0
      %3335 = vmatprep.mubr.f32.mxu0 0.0
      %3336 = vmatmul.mubr.f32.gmra.mxu0 %v559
      %v3337 = vpop.f32.mrf.mxu0
      %v3338 = vadd.f32 0.0, %v3337
      %v3339 = vpop.f32.mrf.mxu0
      %3340 = vmatprep.mubr.f32.mxu0 0.0
      %3341 = vmatmul.mubr.f32.gmra.mxu0 %v561
      %v3342 = vpop.f32.mrf.mxu0
      %v3343 = vadd.f32 0.0, %v3342
      %v3344 = vpop.f32.mrf.mxu0
      %3345 = vmatprep.mubr.f32.mxu0 0.0
      %3346 = vmatmul.mubr.f32.gmra.mxu0 %v563
      %v3347 = vpop.f32.mrf.mxu0
      %v3348 = vadd.f32 0.0, %v3347
      %v3349 = vpop.f32.mrf.mxu0
      %3350 = vmatprep.mubr.f32.mxu0 0.0
      %3351 = vmatmul.mubr.f32.gmra.mxu0 %v565
      %v3352 = vpop.f32.mrf.mxu0
      %v3353 = vadd.f32 0.0, %v3352
      %v3354 = vpop.f32.mrf.mxu0
      %3355 = vmatprep.mubr.f32.mxu0 0.0
      %3356 = vmatmul.mubr.f32.gmra.mxu0 %v2030
      %v3357 = vpop.f32.mrf.mxu0
      %v3358 = vadd.f32 0.0, %v3357
      %v3359 = vpop.f32.mrf.mxu0
      %3360 = vmatprep.mubr.f32.mxu0 0.0
      %3361 = vmatmul.mubr.f32.gmra.mxu0 %v3256
      %v3362 = vpop.f32.mrf.mxu0
      %v3363 = vadd.f32 0.0, %v3362
      %v3364 = vpop.f32.mrf.mxu0
      %3365 = vdwg.mxu0
      %v3366 = vadd.f32 %v3242, %v3328
      %v3367 = vadd.f32 %v3243, %v3333
      %v3368 = vadd.f32 %v3244, %v3338
      %v3369 = vadd.f32 %v3245, %v3343
      %v3370 = vadd.f32 %v3246, %v3348
      %v3371 = vadd.f32 %v3247, %v3353
      %v3372 = vadd.f32 %v3248, %v3358
      %v3373 = vadd.f32 %v3249, %v3363
      %v3375 = vrot.slane %v209, 1
      %v3376 = vrot.slane %v210, 1
      %v3377 = vsel %vm524, %v3375, %v3376
      %s3378 = scalar_lea.vmem %s1, 92
      %v3379 = vld [vmem:[%s3378] sm:$0xf]
      %v3380 = vsel %vm250, %v3377, 0
      %v3383 = vsel %vm275, %v3379, 0
      %3385 = vmatprep.subr.mxu0 0.0
      %3386 = vmatpush1.msra.mxu0 0.0
      %3387 = vmatprep.subr.mxu0 0.0
      %3388 = vmatpush1.msra.mxu0 0.0
      %3389 = vmatprep.subr.mxu0 0.0
      %3390 = vmatpush1.msra.mxu0 0.0
      %3391 = vmatprep.subr.mxu0 0.0
      %3392 = vmatpush1.msra.mxu0 0.0
      %3393 = vmatprep.subr.mxu0 0.0
      %3394 = vmatpush1.msra.mxu0 0.0
      %3395 = vmatprep.subr.mxu0 0.0
      %3396 = vmatpush1.msra.mxu0 0.0
      %3397 = vmatprep.subr.mxu0 0.0
      %3398 = vmatpush1.msra.mxu0 0.0
      %3399 = vmatprep.subr.mxu0 0.0
      %3400 = vmatpush1.msra.mxu0 0.0
      %3401 = vmatprep.subr.mxu0 0.0
      %3402 = vmatpush1.msra.mxu0 0.0
      %3403 = vmatprep.subr.mxu0 0.0
      %3404 = vmatpush1.msra.mxu0 0.0
      %3405 = vmatprep.subr.mxu0 0.0
      %3406 = vmatpush1.msra.mxu0 0.0
      %3407 = vmatprep.subr.mxu0 0.0
      %3408 = vmatpush1.msra.mxu0 0.0
      %3409 = vmatprep.subr.mxu0 0.0
      %3410 = vmatpush1.msra.mxu0 0.0
      %3411 = vmatprep.subr.mxu0 0.0
      %3412 = vmatpush1.msra.mxu0 0.0
      %3413 = vmatprep.subr.mxu0 0.0
      %3414 = vmatpush1.msra.mxu0 0.0
      %3415 = vmatprep.subr.mxu0 0.0
      %3416 = vmatpush1.msra.mxu0 %v3383
      %3417 = vmatprep.subr.mxu0 0.0
      %3418 = vmatpush2.msra.mxu0 0.0
      %3419 = vmatprep.subr.mxu0 0.0
      %3420 = vmatpush2.msra.mxu0 0.0
      %3421 = vmatprep.subr.mxu0 0.0
      %3422 = vmatpush2.msra.mxu0 0.0
      %3423 = vmatprep.subr.mxu0 0.0
      %3424 = vmatpush2.msra.mxu0 0.0
      %3425 = vmatprep.subr.mxu0 0.0
      %3426 = vmatpush2.msra.mxu0 0.0
      %3427 = vmatprep.subr.mxu0 0.0
      %3428 = vmatpush2.msra.mxu0 0.0
      %3429 = vmatprep.subr.mxu0 0.0
      %3430 = vmatpush2.msra.mxu0 0.0
      %3431 = vmatprep.subr.mxu0 0.0
      %3432 = vmatpush2.msra.mxu0 0.0
      %3433 = vmatprep.subr.mxu0 0.0
      %3434 = vmatpush2.msra.mxu0 0.0
      %3435 = vmatprep.subr.mxu0 0.0
      %3436 = vmatpush2.msra.mxu0 0.0
      %3437 = vmatprep.subr.mxu0 0.0
      %3438 = vmatpush2.msra.mxu0 0.0
      %3439 = vmatprep.subr.mxu0 0.0
      %3440 = vmatpush2.msra.mxu0 0.0
      %3441 = vmatprep.subr.mxu0 0.0
      %3442 = vmatpush2.msra.mxu0 0.0
      %3443 = vmatprep.subr.mxu0 0.0
      %3444 = vmatpush2.msra.mxu0 0.0
      %3445 = vmatprep.subr.mxu0 0.0
      %3446 = vmatpush2.msra.mxu0 0.0
      %3447 = vmatprep.subr.mxu0 0.0
      %3448 = vmatpush2.msra.mxu0 0.0
      %3449 = vmatprep.mubr.f32.mxu0 0.0
      %3450 = vmatmul.mubr.f32.gmra.mxu0 %v721
      %v3451 = vpop.f32.mrf.mxu0
      %v3452 = vadd.f32 0.0, %v3451
      %v3453 = vpop.f32.mrf.mxu0
      %3454 = vmatprep.mubr.f32.mxu0 0.0
      %3455 = vmatmul.mubr.f32.gmra.mxu0 %v723
      %v3456 = vpop.f32.mrf.mxu0
      %v3457 = vadd.f32 0.0, %v3456
      %v3458 = vpop.f32.mrf.mxu0
      %3459 = vmatprep.mubr.f32.mxu0 0.0
      %3460 = vmatmul.mubr.f32.gmra.mxu0 %v725
      %v3461 = vpop.f32.mrf.mxu0
      %v3462 = vadd.f32 0.0, %v3461
      %v3463 = vpop.f32.mrf.mxu0
      %3464 = vmatprep.mubr.f32.mxu0 0.0
      %3465 = vmatmul.mubr.f32.gmra.mxu0 %v727
      %v3466 = vpop.f32.mrf.mxu0
      %v3467 = vadd.f32 0.0, %v3466
      %v3468 = vpop.f32.mrf.mxu0
      %3469 = vmatprep.mubr.f32.mxu0 0.0
      %3470 = vmatmul.mubr.f32.gmra.mxu0 %v729
      %v3471 = vpop.f32.mrf.mxu0
      %v3472 = vadd.f32 0.0, %v3471
      %v3473 = vpop.f32.mrf.mxu0
      %3474 = vmatprep.mubr.f32.mxu0 0.0
      %3475 = vmatmul.mubr.f32.gmra.mxu0 %v731
      %v3476 = vpop.f32.mrf.mxu0
      %v3477 = vadd.f32 0.0, %v3476
      %v3478 = vpop.f32.mrf.mxu0
      %3479 = vmatprep.mubr.f32.mxu0 0.0
      %3480 = vmatmul.mubr.f32.gmra.mxu0 %v2154
      %v3481 = vpop.f32.mrf.mxu0
      %v3482 = vadd.f32 0.0, %v3481
      %v3483 = vpop.f32.mrf.mxu0
      %3484 = vmatprep.mubr.f32.mxu0 0.0
      %3485 = vmatmul.mubr.f32.gmra.mxu0 %v3380
      %v3486 = vpop.f32.mrf.mxu0
      %v3487 = vadd.f32 0.0, %v3486
      %v3488 = vpop.f32.mrf.mxu0
      %3489 = vdwg.mxu0
      %v3490 = vadd.f32 %v3366, %v3452
      %v3491 = vadd.f32 %v3367, %v3457
      %v3492 = vadd.f32 %v3368, %v3462
      %v3493 = vadd.f32 %v3369, %v3467
      %v3494 = vadd.f32 %v3370, %v3472
      %v3495 = vadd.f32 %v3371, %v3477
      %v3496 = vadd.f32 %v3372, %v3482
      %v3497 = vadd.f32 %v3373, %v3487
      %v3498 = vrot.slane %v189, 2
      %v3499 = vrot.slane %v190, 2
      %v3500 = vsel %vm849, %v3498, %v3499
      %s3501 = scalar_lea.vmem %s1, 96
      %v3502 = vld [vmem:[%s3501] sm:$0xf]
      %v3503 = vsel %vm250, %v3500, 0
      %v3506 = vsel %vm275, %v3502, 0
      %3508 = vmatprep.subr.mxu0 0.0
      %3509 = vmatpush1.msra.mxu0 0.0
      %3510 = vmatprep.subr.mxu0 0.0
      %3511 = vmatpush1.msra.mxu0 0.0
      %3512 = vmatprep.subr.mxu0 0.0
      %3513 = vmatpush1.msra.mxu0 0.0
      %3514 = vmatprep.subr.mxu0 0.0
      %3515 = vmatpush1.msra.mxu0 0.0
      %3516 = vmatprep.subr.mxu0 0.0
      %3517 = vmatpush1.msra.mxu0 0.0
      %3518 = vmatprep.subr.mxu0 0.0
      %3519 = vmatpush1.msra.mxu0 0.0
      %3520 = vmatprep.subr.mxu0 0.0
      %3521 = vmatpush1.msra.mxu0 0.0
      %3522 = vmatprep.subr.mxu0 0.0
      %3523 = vmatpush1.msra.mxu0 0.0
      %3524 = vmatprep.subr.mxu0 0.0
      %3525 = vmatpush1.msra.mxu0 0.0
      %3526 = vmatprep.subr.mxu0 0.0
      %3527 = vmatpush1.msra.mxu0 0.0
      %3528 = vmatprep.subr.mxu0 0.0
      %3529 = vmatpush1.msra.mxu0 0.0
      %3530 = vmatprep.subr.mxu0 0.0
      %3531 = vmatpush1.msra.mxu0 0.0
      %3532 = vmatprep.subr.mxu0 0.0
      %3533 = vmatpush1.msra.mxu0 0.0
      %3534 = vmatprep.subr.mxu0 0.0
      %3535 = vmatpush1.msra.mxu0 0.0
      %3536 = vmatprep.subr.mxu0 0.0
      %3537 = vmatpush1.msra.mxu0 0.0
      %3538 = vmatprep.subr.mxu0 0.0
      %3539 = vmatpush1.msra.mxu0 %v3506
      %3540 = vmatprep.subr.mxu0 0.0
      %3541 = vmatpush2.msra.mxu0 0.0
      %3542 = vmatprep.subr.mxu0 0.0
      %3543 = vmatpush2.msra.mxu0 0.0
      %3544 = vmatprep.subr.mxu0 0.0
      %3545 = vmatpush2.msra.mxu0 0.0
      %3546 = vmatprep.subr.mxu0 0.0
      %3547 = vmatpush2.msra.mxu0 0.0
      %3548 = vmatprep.subr.mxu0 0.0
      %3549 = vmatpush2.msra.mxu0 0.0
      %3550 = vmatprep.subr.mxu0 0.0
      %3551 = vmatpush2.msra.mxu0 0.0
      %3552 = vmatprep.subr.mxu0 0.0
      %3553 = vmatpush2.msra.mxu0 0.0
      %3554 = vmatprep.subr.mxu0 0.0
      %3555 = vmatpush2.msra.mxu0 0.0
      %3556 = vmatprep.subr.mxu0 0.0
      %3557 = vmatpush2.msra.mxu0 0.0
      %3558 = vmatprep.subr.mxu0 0.0
      %3559 = vmatpush2.msra.mxu0 0.0
      %3560 = vmatprep.subr.mxu0 0.0
      %3561 = vmatpush2.msra.mxu0 0.0
      %3562 = vmatprep.subr.mxu0 0.0
      %3563 = vmatpush2.msra.mxu0 0.0
      %3564 = vmatprep.subr.mxu0 0.0
      %3565 = vmatpush2.msra.mxu0 0.0
      %3566 = vmatprep.subr.mxu0 0.0
      %3567 = vmatpush2.msra.mxu0 0.0
      %3568 = vmatprep.subr.mxu0 0.0
      %3569 = vmatpush2.msra.mxu0 0.0
      %3570 = vmatprep.subr.mxu0 0.0
      %3571 = vmatpush2.msra.mxu0 0.0
      %3572 = vmatprep.mubr.f32.mxu0 0.0
      %3573 = vmatmul.mubr.f32.gmra.mxu0 %v880
      %v3574 = vpop.f32.mrf.mxu0
      %v3575 = vadd.f32 0.0, %v3574
      %v3576 = vpop.f32.mrf.mxu0
      %3577 = vmatprep.mubr.f32.mxu0 0.0
      %3578 = vmatmul.mubr.f32.gmra.mxu0 %v882
      %v3579 = vpop.f32.mrf.mxu0
      %v3580 = vadd.f32 0.0, %v3579
      %v3581 = vpop.f32.mrf.mxu0
      %3582 = vmatprep.mubr.f32.mxu0 0.0
      %3583 = vmatmul.mubr.f32.gmra.mxu0 %v884
      %v3584 = vpop.f32.mrf.mxu0
      %v3585 = vadd.f32 0.0, %v3584
      %v3586 = vpop.f32.mrf.mxu0
      %3587 = vmatprep.mubr.f32.mxu0 0.0
      %3588 = vmatmul.mubr.f32.gmra.mxu0 %v886
      %v3589 = vpop.f32.mrf.mxu0
      %v3590 = vadd.f32 0.0, %v3589
      %v3591 = vpop.f32.mrf.mxu0
      %3592 = vmatprep.mubr.f32.mxu0 0.0
      %3593 = vmatmul.mubr.f32.gmra.mxu0 %v888
      %v3594 = vpop.f32.mrf.mxu0
      %v3595 = vadd.f32 0.0, %v3594
      %v3596 = vpop.f32.mrf.mxu0
      %3597 = vmatprep.mubr.f32.mxu0 0.0
      %3598 = vmatmul.mubr.f32.gmra.mxu0 %v890
      %v3599 = vpop.f32.mrf.mxu0
      %v3600 = vadd.f32 0.0, %v3599
      %v3601 = vpop.f32.mrf.mxu0
      %3602 = vmatprep.mubr.f32.mxu0 0.0
      %3603 = vmatmul.mubr.f32.gmra.mxu0 %v2277
      %v3604 = vpop.f32.mrf.mxu0
      %v3605 = vadd.f32 0.0, %v3604
      %v3606 = vpop.f32.mrf.mxu0
      %3607 = vmatprep.mubr.f32.mxu0 0.0
      %3608 = vmatmul.mubr.f32.gmra.mxu0 %v3503
      %v3609 = vpop.f32.mrf.mxu0
      %v3610 = vadd.f32 0.0, %v3609
      %v3611 = vpop.f32.mrf.mxu0
      %3612 = vdwg.mxu0
      %v3613 = vadd.f32 %v3490, %v3575
      %v3614 = vadd.f32 %v3491, %v3580
      %v3615 = vadd.f32 %v3492, %v3585
      %v3616 = vadd.f32 %v3493, %v3590
      %v3617 = vadd.f32 %v3494, %v3595
      %v3618 = vadd.f32 %v3495, %v3600
      %v3619 = vadd.f32 %v3496, %v3605
      %v3620 = vadd.f32 %v3497, %v3610
      %v3621 = vld [vmem:[%s2] sm:$0x1]
      %v3623 = vlaneseq
      %v3624 = vshrl.u32 %v3623, 7
      %v3625 = vsub.s32 0, %v3624
      %v3626 = vrot.slane %v3621, %v3625
      %v3628 = vadd.f32 %v3613, %v3626
      %v3629 = vadd.f32 %v3614, %v3626
      %v3630 = vadd.f32 %v3615, %v3626
      %v3631 = vadd.f32 %v3616, %v3626
      %v3632 = vadd.f32 %v3617, %v3626
      %v3633 = vadd.f32 %v3618, %v3626
      %v3634 = vadd.f32 %v3619, %v3626
      %v3635 = vadd.f32 %v3620, %v3626
      %vm3636 = vcmask 64512
      %3637 = vst.msk [vmem:[%s170] sm:$0xff] %vm3636, %v3628
      %3638 = vst.msk [vmem:[%s170 + $0x8] sm:$0xff] %vm3636, %v3629
      %3639 = vst.msk [vmem:[%s170 + $0x10] sm:$0xff] %vm3636, %v3630
      %3640 = vst.msk [vmem:[%s170 + $0x18] sm:$0xff] %vm3636, %v3631
      %3641 = vst.msk [vmem:[%s170 + $0x20] sm:$0xff] %vm3636, %v3632
      %3642 = vst.msk [vmem:[%s170 + $0x28] sm:$0xff] %vm3636, %v3633
      %3643 = vst.msk [vmem:[%s170 + $0x30] sm:$0xff] %vm3636, %v3634
      %3644 = vst.msk [vmem:[%s170 + $0x38] sm:$0xff] %vm3636, %v3635
      %p3645 = scmp.lt.s32.totalorder %s14, 1
      %s3646 = scalar_select %p3645, %s14, 1
      %s3647 = smul.addr %s3646, 8
      %s3648 = smul.addr %s3647, 8
      %s3649 = scalar_lea.vmem %s3, %s3648
      // Predicated region
      $region33: #{conv2d_same.1} parent=31 // pred_check
        %p3650 = pneg %p100
      $region34: #{conv2d_same.1} parent=31 // pred_check_branch
        %3652 = sbr.rel (%p3650) target = $region36
      $region35: #{conv2d_same.1} parent=31 // pred_region
        _
      $region36: #{conv2d_same.1} parent=31 // pred_fallthru
        _
    $region32: #{conv2d_same.1} parent=5 // pred_fallthru
      _
    %p3653 = scmp.le.s32.totalorder 2, %s9
    // Predicated region
    $region37: #{conv2d_same.1} parent=5 // pred_check
      %p3654 = pneg %p3653
    $region38: #{conv2d_same.1} parent=5 // pred_check_branch
      %3656 = sbr.rel (%p3654) target = $region40
    $region39: #{conv2d_same.1} parent=5 // pred_region
      %s3657 = ssub.s32 %s9, 2
      // Predicated region
      $region41: #{conv2d_same.1} parent=39 // pred_check
        %p3658 = pneg %p106
      $region42: #{conv2d_same.1} parent=39 // pred_check_branch
        %3660 = sbr.rel (%p3658) target = $region44
      $region43: #{conv2d_same.1} parent=39 // pred_region
        %p3661 = scmp.lt.s32.totalorder %s15, 1
        %s3662 = scalar_select %p3661, %s15, 1
        %s3663 = smul.addr %s3662, 8
        %s3664 = smul.addr %s3663, 8
        %s3665 = scalar_lea.vmem %s3, %s3664
      $region44: #{conv2d_same.1} parent=39 // pred_fallthru
        _
    $region40: #{conv2d_same.1} parent=5 // pred_fallthru
      _
  $region6: #{conv2d_same.1} parent=0 // loop_footer
    %s13 = sadd.s32 1, %s9
  $region7: #{conv2d_same.1} parent=0 // loop_footer_branch
    %8 = sbr.rel target = $region3
  $region8: #{conv2d_same.1} parent=0 // loop_exit
    _

</llo_original>
